<compile_context>
chip_gen: v7x
topology: tpu7x:2x2x1
jax: 0.10.0
libtpu: 0.0.40
codegen_flags: <defaults>
</compile_context>

<pallas_src>
import jax
import jax.numpy as jnp
from jax import lax
from jax.experimental import pallas as pl
from jax.experimental.pallas import tpu as pltpu

NEG_SLOPE = 0.2
BN_EPS = 1e-5


def _ph(v):
    """Split v = 2*delta + phase with phase in {0, 1} (works for negative v)."""
    p = v % 2
    return p, (v - p) // 2


# ----------------------------- fused kernel -------------------------------- #

def _make_disc_block_kernel(B, Cin, Cmid, Cout, Hh, Wh):
    """Builds the fused conv0+BN0+act+conv1+BN1+act kernel for fixed shapes.

    Hh = H//2, Wh = W//2.  Per image, every activation is kept in a stride-2
    phase-split layout: 4 buffers of flattened (Hh*Wh) spatial, each flat-padded
    by P = Wh+1 zeros on both ends so that +/-1 phase-row / phase-col shifts are
    plain static lane slices (row out-of-bounds lands in the zero pad, column
    wrap-around is killed by a per-lane edge mask).
    """
    M = Hh * Wh                    # per-image, per-phase flattened spatial
    P = Wh + 1                     # flat zero-pad on each end
    L = M + 2 * P

    def kernel(x_ref, w0_ref, s0_ref, w1_ref, s1_ref, o_ref,
               col0_s, yph_s, col1_s):
        # x_ref : (B, 2, 2, Cin, L)  phase-split, flat-padded input (compute dt)
        # w0_ref: (Cmid, 9*Cin)      conv0 weights, BN0 scale folded, (Cout, K)
        # s0_ref: (Cmid, 1)          conv0 bias + BN0 shift (f32)
        # w1_ref: (Cout, 16*Cmid)    conv1 weights, BN1 scale folded
        # s1_ref: (Cout, 1)          conv1 bias + BN1 shift (f32)
        # o_ref : (1, Cout, B*M)     NCHW-flat output block (lane-dense)
        # col0_s: (9*Cin, 4*B*M)     conv0 im2col slab, M grouped by out-phase
        # yph_s : (2, 2, B, Cmid, L) conv0 activation, phase-split + flat-padded
        # col1_s: (16*Cmid, B*M)     conv1 im2col slab

        # Re-zero only the tiny pad borders of the phase scratch (interiors are
        # fully overwritten below).  Cheap (few vst), and megacore-safe.
        yph_s[:, :, :, :, 0:P] = jnp.zeros((2, 2, B, Cmid, P), yph_s.dtype)
        yph_s[:, :, :, :, P + M:L] = jnp.zeros((2, 2, B, Cmid, P), yph_s.dtype)

        # Column-edge masks, shared by both convs (conv1 output width == Wh).
        u = jax.lax.broadcasted_iota(jnp.int32, (1, M), 1) % Wh
        not_left = u != 0                 # invalid lanes when shifting left
        not_right = u != (Wh - 1)         # invalid lanes when shifting right

        def masked(tap, dc):
            if dc == -1:
                return jnp.where(not_left, tap, 0)
            if dc == 1:
                return jnp.where(not_right, tap, 0)
            return tap

        # ---- conv0: 3x3 / s1 / p1 -- one im2col slab, one matmul ------------
        for po in range(2):
            for qo in range(2):
                for b in range(B):
                    off = ((po * 2 + qo) * B + b) * M
                    for kh in range(3):
                        pi, dr = _ph(po + kh - 1)
                        for kw in range(3):
                            qi, dc = _ph(qo + kw - 1)
                            t = kh * 3 + kw
                            s = P + dr * Wh + dc
                            tap = x_ref[b, pi, qi, :, s:s + M]
                            col0_s[t * Cin:(t + 1) * Cin, off:off + M] = \
                                masked(tap, dc)

        y = jnp.dot(w0_ref[...], col0_s[...],
                    preferred_element_type=jnp.float32)      # (Cmid, 4*B*M)
        y = y + s0_ref[...]
        y = jnp.where(y > 0, y, NEG_SLOPE * y)                # LeakyReLU(0.2)
        y = y.astype(yph_s.dtype)

        # Fused hand-off: store conv0's activation straight into the padded
        # phase buffers (never touches HBM).
        for po in range(2):
            for qo in range(2):
                for b in range(B):
                    off = ((po * 2 + qo) * B + b) * M
                    yph_s[po, qo, b, :, P:P + M] = y[:, off:off + M]

        # ---- conv1: 4x4 / s2 / p1 -- one im2col slab, one matmul ------------
        for b in range(B):
            for kh in range(4):
                p, dr = _ph(kh - 1)
                for kw in range(4):
                    q, dc = _ph(kw - 1)
                    t = kh * 4 + kw
                    s = P + dr * Wh + dc
                    tap = yph_s[p, q, b, :, s:s + M]
                    col1_s[t * Cmid:(t + 1) * Cmid, b * M:(b + 1) * M] = \
                        masked(tap, dc)

        z = jnp.dot(w1_ref[...], col1_s[...],
                    preferred_element_type=jnp.float32)       # (Cout, B*M)
        z = z + s1_ref[...]
        z = jnp.where(z > 0, z, NEG_SLOPE * z)                 # LeakyReLU(0.2)
        o_ref[0] = z.astype(o_ref.dtype)                       # lane-dense store

    return kernel


# ------------------------------- wrapper ----------------------------------- #

def disc_block_forward(x_nchw, folded, *, batch_block=2,
                       compute_dtype=jnp.bfloat16):
    """Pallas DiscBlock forward.  Input/output are NCHW (PyTorch convention)."""
    x = x_nchw.astype(jnp.float32)
    N, Cin, H, W = x.shape
    assert H % 2 == 0 and W % 2 == 0, "4x4/s2/p1 conv assumes even H, W"
    Hh, Wh = H // 2, W // 2
    M = Hh * Wh
    P = Wh + 1
    L = M + 2 * P
    Cmid = folded["w0m"].shape[0]
    Cout = folded["w1m"].shape[0]
    B = batch_block if N % batch_block == 0 else 1
    G = N // B

    # Layout plumbing in the wrapper (XLA side): stride-2 phase split plus flat
    # zero padding.  xph[n, p, q, c, a*Wh + u] = x[n, c, 2a+p, 2u+q].
    xph = x.reshape(N, Cin, Hh, 2, Wh, 2).transpose(0, 3, 5, 1, 2, 4)
    xph = xph.reshape(N, 2, 2, Cin, M)
    xph = jnp.pad(xph, ((0, 0), (0, 0), (0, 0), (0, 0), (P, P)))
    xph = xph.astype(compute_dtype)

    w0m = folded["w0m"].astype(compute_dtype)     # (Cmid, 9*Cin)
    w1m = folded["w1m"].astype(compute_dtype)     # (Cout, 16*Cmid)
    s0 = folded["shift0"].astype(jnp.float32)     # (Cmid, 1)
    s1 = folded["shift1"].astype(jnp.float32)     # (Cout, 1)

    kernel = _make_disc_block_kernel(B, Cin, Cmid, Cout, Hh, Wh)

    out = pl.pallas_call(
        kernel,
        out_shape=jax.ShapeDtypeStruct((G, Cout, B * M), jnp.float32),
        grid=(G,),
        in_specs=[
            pl.BlockSpec((B, 2, 2, Cin, L), lambda g: (g, 0, 0, 0, 0)),
            pl.BlockSpec((Cmid, 9 * Cin), lambda g: (0, 0)),
            pl.BlockSpec((Cmid, 1), lambda g: (0, 0)),
            pl.BlockSpec((Cout, 16 * Cmid), lambda g: (0, 0)),
            pl.BlockSpec((Cout, 1), lambda g: (0, 0)),
        ],
        out_specs=pl.BlockSpec((1, Cout, B * M), lambda g: (g, 0, 0)),
        scratch_shapes=[
            pltpu.VMEM((9 * Cin, 4 * B * M), compute_dtype),     # conv0 slab
            pltpu.VMEM((2, 2, B, Cmid, L), compute_dtype),       # fused y phases
            pltpu.VMEM((16 * Cmid, B * M), compute_dtype),       # conv1 slab
        ],
        compiler_params=pltpu.CompilerParams(dimension_semantics=("parallel",)),
    )(xph, w0m, s0, w1m, s1)

    # (G, Cout, B*Ho*Wo) -> (N, Cout, Ho, Wo): pure layout plumbing.
    out = out.reshape(G, Cout, B, Hh, Wh).transpose(0, 2, 1, 3, 4)
    return out.reshape(N, Cout, Hh, Wh)


# -------------------- deterministic parameter init ------------------------- #

def make_params(key, in_channels, out_channels):
    ks = jax.random.split(key, 12)
    raw = dict(
        w0=0.1 * jax.random.normal(ks[0], (3, 3, in_channels, out_channels), jnp.float32),
        b0=0.05 * jax.random.normal(ks[1], (out_channels,), jnp.float32),
        g0=1.0 + 0.1 * jax.random.normal(ks[2], (out_channels,), jnp.float32),
        beta0=0.05 * jax.random.normal(ks[3], (out_channels,), jnp.float32),
        m0=0.1 * jax.random.normal(ks[4], (out_channels,), jnp.float32),
        v0=0.5 + jnp.abs(jax.random.normal(ks[5], (out_channels,), jnp.float32)),
        w1=0.1 * jax.random.normal(ks[6], (4, 4, out_channels, out_channels), jnp.float32),
        b1=0.05 * jax.random.normal(ks[7], (out_channels,), jnp.float32),
        g1=1.0 + 0.1 * jax.random.normal(ks[8], (out_channels,), jnp.float32),
        beta1=0.05 * jax.random.normal(ks[9], (out_channels,), jnp.float32),
        m1=0.1 * jax.random.normal(ks[10], (out_channels,), jnp.float32),
        v1=0.5 + jnp.abs(jax.random.normal(ks[11], (out_channels,), jnp.float32)),
    )
    # Fold conv bias + BatchNorm (eval mode) into per-channel scale/shift, fold
    # the scale into the conv weights, and pre-transpose to (Cout, K).
    scale0 = raw["g0"] / jnp.sqrt(raw["v0"] + BN_EPS)
    shift0 = scale0 * (raw["b0"] - raw["m0"]) + raw["beta0"]
    scale1 = raw["g1"] / jnp.sqrt(raw["v1"] + BN_EPS)
    shift1 = scale1 * (raw["b1"] - raw["m1"]) + raw["beta1"]
    folded = dict(
        w0m=(raw["w0"] * scale0[None, None, None, :]).reshape(
            9 * in_channels, out_channels).T,          # (Cmid, 9*Cin)
        shift0=shift0[:, None],                        # (Cmid, 1)
        w1m=(raw["w1"] * scale1[None, None, None, :]).reshape(
            16 * out_channels, out_channels).T,        # (Cout, 16*Cmid)
        shift1=shift1[:, None],                        # (Cout, 1)
    )
    return raw, folded


# ------------------------- pure-JAX reference ------------------------------ #

def ref_forward(x_nchw, raw):
    def leaky(v):
        return jnp.where(v > 0, v, NEG_SLOPE * v)

    def bn(v, g, b, m, var):
        inv = g / jnp.sqrt(var + BN_EPS)
        return v * inv[None, :, None, None] + (b - m * inv)[None, :, None, None]

    dn = ("NCHW", "OIHW", "NCHW")
    w0 = jnp.transpose(raw["w0"], (3, 2, 0, 1))   # HWIO -> OIHW
    w1 = jnp.transpose(raw["w1"], (3, 2, 0, 1))

    y = lax.conv_general_dilated(x_nchw, w0, (1, 1), ((1, 1), (1, 1)),
                                 dimension_numbers=dn,
                                 precision=lax.Precision.HIGHEST)
    y = y + raw["b0"][None, :, None, None]
    y = leaky(bn(y, raw["g0"], raw["beta0"], raw["m0"], raw["v0"]))

    z = lax.conv_general_dilated(y, w1, (2, 2), ((1, 1), (1, 1)),
                                 dimension_numbers=dn,
                                 precision=lax.Precision.HIGHEST)
    z = z + raw["b1"][None, :, None, None]
    z = leaky(bn(z, raw["g1"], raw["beta1"], raw["m1"], raw["v1"]))
    return z


# --------------------------------- main ------------------------------------ #

if __name__ == "__main__":
    key = jax.random.PRNGKey(0)
    k_x, k_p = jax.random.split(key)

    N, Cin, Cout, H, W = 4, 4, 8, 16, 16
    x = jax.random.normal(k_x, (N, Cin, H, W), jnp.float32)   # NCHW like PyTorch

    raw, folded = make_params(k_p, Cin, Cout)
    ref = jax.block_until_ready(ref_forward(x, raw))

    # f32 compute path: tight correctness gate.
    out32 = jax.block_until_ready(
        disc_block_forward(x, folded, compute_dtype=jnp.float32))
    assert out32.shape == (N, Cout, H // 2, W // 2), out32.shape
    err32 = float(jnp.max(jnp.abs(out32 - ref)))
    assert err32 < 2e-2, f"f32 max err {err32}"

    # bf16 MXU-operand path (the v6e/v7x-reviewed configuration): loose check.
    out16 = jax.block_until_ready(
        disc_block_forward(x, folded, compute_dtype=jnp.bfloat16))
    err16 = float(jnp.max(jnp.abs(out16 - ref)))
    assert err16 < 1.5e-1, f"bf16 max err {err16}"

    print("KERNEL_OK")
</pallas_src>

<mosaic_0001>
module attributes {stable_mosaic.version = 11 : i64} {
  func.func @kernel(%arg0: i32, %arg1: memref<2x2x2x4x82xf32, #tpu.memory_space<vmem>>, %arg2: memref<8x36xf32, #tpu.memory_space<vmem>>, %arg3: memref<8x1xf32, #tpu.memory_space<vmem>>, %arg4: memref<8x128xf32, #tpu.memory_space<vmem>>, %arg5: memref<8x1xf32, #tpu.memory_space<vmem>>, %arg6: memref<1x8x128xf32, #tpu.memory_space<vmem>>, %arg7: memref<36x512xf32, #tpu.memory_space<vmem>>, %arg8: memref<2x2x2x8x82xf32, #tpu.memory_space<vmem>>, %arg9: memref<128x128xf32, #tpu.memory_space<vmem>>) attributes {dimension_semantics = [#tpu.dimension_semantics<parallel>], iteration_bounds = array<i64: 2>, scalar_prefetch = 0 : i64, scratch_operands = 3 : i64, tpu.core_type = #tpu.core_type<tc>, window_params = [{transform_indices = @transform_0, window_bounds = array<i64: 2, 2, 2, 4, 82>}, {pipeline_mode = #tpu.pipeline_mode<synchronous>, transform_indices = @transform_1, window_bounds = array<i64: 8, 36>}, {pipeline_mode = #tpu.pipeline_mode<synchronous>, transform_indices = @transform_2, window_bounds = array<i64: 8, 1>}, {pipeline_mode = #tpu.pipeline_mode<synchronous>, transform_indices = @transform_3, window_bounds = array<i64: 8, 128>}, {pipeline_mode = #tpu.pipeline_mode<synchronous>, transform_indices = @transform_4, window_bounds = array<i64: 8, 1>}, {transform_indices = @transform_5, window_bounds = array<i64: 1, 8, 128>}]} {
    %cst = arith.constant 0.000000e+00 : f32
    %0 = vector.broadcast %cst : f32 to vector<2x2x2x8x9xf32>
    %c0 = arith.constant 0 : index
    %c0_0 = arith.constant 0 : index
    %c0_1 = arith.constant 0 : index
    %c0_2 = arith.constant 0 : index
    %c0_3 = arith.constant 0 : index
    %1 = vector.load %arg8[%c0, %c0_0, %c0_1, %c0_2, %c0_3] : memref<2x2x2x8x82xf32, #tpu.memory_space<vmem>>, vector<2x2x2x8x9xf32>
    tpu.vector_store %arg8[%c0, %c0_0, %c0_1, %c0_2, %c0_3], %0 {strides = array<i32>} : memref<2x2x2x8x82xf32, #tpu.memory_space<vmem>>, vector<2x2x2x8x9xf32>,
    %cst_4 = arith.constant 0.000000e+00 : f32
    %2 = vector.broadcast %cst_4 : f32 to vector<2x2x2x8x9xf32>
    %c0_5 = arith.constant 0 : index
    %c0_6 = arith.constant 0 : index
    %c0_7 = arith.constant 0 : index
    %c0_8 = arith.constant 0 : index
    %c73 = arith.constant 73 : index
    %3 = vector.load %arg8[%c0_5, %c0_6, %c0_7, %c0_8, %c73] : memref<2x2x2x8x82xf32, #tpu.memory_space<vmem>>, vector<2x2x2x8x9xf32>
    tpu.vector_store %arg8[%c0_5, %c0_6, %c0_7, %c0_8, %c73], %2 {strides = array<i32>} : memref<2x2x2x8x82xf32, #tpu.memory_space<vmem>>, vector<2x2x2x8x9xf32>,
    %4 = tpu.iota {dimensions = array<i32: 1>} : vector<1x64xi32>
    %c8_i32 = arith.constant 8 : i32
    %c0_i32 = arith.constant 0 : i32
    %5 = arith.cmpi eq, %c8_i32, %c0_i32 : i32
    %c1_i32 = arith.constant 1 : i32
    %6 = arith.select %5, %c1_i32, %c8_i32 : i32
    %7 = vector.broadcast %6 : i32 to vector<1x64xi32>
    %8 = arith.remsi %4, %7 : vector<1x64xi32>
    %c0_i32_9 = arith.constant 0 : i32
    %9 = vector.broadcast %c0_i32_9 : i32 to vector<1x64xi32>
    %10 = arith.cmpi ne, %8, %9 : vector<1x64xi32>
    %c0_i32_10 = arith.constant 0 : i32
    %11 = vector.broadcast %c0_i32_10 : i32 to vector<1x64xi32>
    %12 = arith.cmpi slt, %8, %11 : vector<1x64xi32>
    %c0_i32_11 = arith.constant 0 : i32
    %13 = arith.cmpi slt, %6, %c0_i32_11 : i32
    %14 = vector.broadcast %13 : i1 to vector<1x64xi1>
    %15 = vector.broadcast %14 : vector<1x64xi1> to vector<1x64xi1>
    %16 = arith.xori %12, %15 : vector<1x64xi1>
    %17 = arith.andi %16, %10 : vector<1x64xi1>
    %18 = vector.broadcast %6 : i32 to vector<1x64xi32>
    %19 = arith.addi %8, %18 : vector<1x64xi32>
    %20 = arith.select %17, %19, %8 : vector<1x64xi1>, vector<1x64xi32>
    %c0_i32_12 = arith.constant 0 : i32
    %21 = vector.broadcast %c0_i32_12 : i32 to vector<1x64xi32>
    %22 = arith.cmpi ne, %20, %21 : vector<1x64xi32>
    %c7_i32 = arith.constant 7 : i32
    %23 = vector.broadcast %c7_i32 : i32 to vector<1x64xi32>
    %24 = arith.cmpi ne, %20, %23 : vector<1x64xi32>
    %c0_13 = arith.constant 0 : index
    %c1 = arith.constant 1 : index
    %c1_14 = arith.constant 1 : index
    %c0_15 = arith.constant 0 : index
    %c0_16 = arith.constant 0 : index
    %25 = vector.load %arg1[%c0_13, %c1, %c1_14, %c0_15, %c0_16] : memref<2x2x2x4x82xf32, #tpu.memory_space<vmem>>, vector<1x1x1x4x64xf32>
    %26 = vector.shape_cast %25 : vector<1x1x1x4x64xf32> to vector<4x64xf32>
    %c0_i32_17 = arith.constant 0 : i32
    %27 = arith.sitofp %c0_i32_17 : i32 to f32
    %28 = vector.shape_cast %22 : vector<1x64xi1> to vector<1x64xi1>
    %29 = vector.broadcast %28 : vector<1x64xi1> to vector<4x64xi1>
    %30 = vector.broadcast %27 : f32 to vector<4x64xf32>
    %31 = arith.select %29, %26, %30 : vector<4x64xi1>, vector<4x64xf32>
    %c0_18 = arith.constant 0 : index
    %c0_19 = arith.constant 0 : index
    %32 = vector.load %arg7[%c0_18, %c0_19] : memref<36x512xf32, #tpu.memory_space<vmem>>, vector<4x64xf32>
    tpu.vector_store %arg7[%c0_18, %c0_19], %31 {strides = array<i32>} : memref<36x512xf32, #tpu.memory_space<vmem>>, vector<4x64xf32>,
    %c0_20 = arith.constant 0 : index
    %c1_21 = arith.constant 1 : index
    %c0_22 = arith.constant 0 : index
    %c0_23 = arith.constant 0 : index
    %c1_24 = arith.constant 1 : index
    %33 = vector.load %arg1[%c0_20, %c1_21, %c0_22, %c0_23, %c1_24] : memref<2x2x2x4x82xf32, #tpu.memory_space<vmem>>, vector<1x1x1x4x64xf32>
    %34 = vector.shape_cast %33 : vector<1x1x1x4x64xf32> to vector<4x64xf32>
    %c4 = arith.constant 4 : index
    %c0_25 = arith.constant 0 : index
    %35 = vector.load %arg7[%c4, %c0_25] : memref<36x512xf32, #tpu.memory_space<vmem>>, vector<4x64xf32>
    tpu.vector_store %arg7[%c4, %c0_25], %34 {strides = array<i32>} : memref<36x512xf32, #tpu.memory_space<vmem>>, vector<4x64xf32>,
    %c0_26 = arith.constant 0 : index
    %c1_27 = arith.constant 1 : index
    %c1_28 = arith.constant 1 : index
    %c0_29 = arith.constant 0 : index
    %c1_30 = arith.constant 1 : index
    %36 = vector.load %arg1[%c0_26, %c1_27, %c1_28, %c0_29, %c1_30] : memref<2x2x2x4x82xf32, #tpu.memory_space<vmem>>, vector<1x1x1x4x64xf32>
    %37 = vector.shape_cast %36 : vector<1x1x1x4x64xf32> to vector<4x64xf32>
    %c8 = arith.constant 8 : index
    %c0_31 = arith.constant 0 : index
    %38 = vector.load %arg7[%c8, %c0_31] : memref<36x512xf32, #tpu.memory_space<vmem>>, vector<4x64xf32>
    tpu.vector_store %arg7[%c8, %c0_31], %37 {strides = array<i32>} : memref<36x512xf32, #tpu.memory_space<vmem>>, vector<4x64xf32>,
    %c0_32 = arith.constant 0 : index
    %c0_33 = arith.constant 0 : index
    %c1_34 = arith.constant 1 : index
    %c0_35 = arith.constant 0 : index
    %c8_36 = arith.constant 8 : index
    %39 = vector.load %arg1[%c0_32, %c0_33, %c1_34, %c0_35, %c8_36] : memref<2x2x2x4x82xf32, #tpu.memory_space<vmem>>, vector<1x1x1x4x64xf32>
    %40 = vector.shape_cast %39 : vector<1x1x1x4x64xf32> to vector<4x64xf32>
    %c0_i32_37 = arith.constant 0 : i32
    %41 = arith.sitofp %c0_i32_37 : i32 to f32
    %42 = vector.shape_cast %22 : vector<1x64xi1> to vector<1x64xi1>
    %43 = vector.broadcast %42 : vector<1x64xi1> to vector<4x64xi1>
    %44 = vector.broadcast %41 : f32 to vector<4x64xf32>
    %45 = arith.select %43, %40, %44 : vector<4x64xi1>, vector<4x64xf32>
    %c12 = arith.constant 12 : index
    %c0_38 = arith.constant 0 : index
    %46 = vector.load %arg7[%c12, %c0_38] : memref<36x512xf32, #tpu.memory_space<vmem>>, vector<4x64xf32>
    tpu.vector_store %arg7[%c12, %c0_38], %45 {strides = array<i32>} : memref<36x512xf32, #tpu.memory_space<vmem>>, vector<4x64xf32>,
    %c0_39 = arith.constant 0 : index
    %c0_40 = arith.constant 0 : index
    %c0_41 = arith.constant 0 : index
    %c0_42 = arith.constant 0 : index
    %c9 = arith.constant 9 : index
    %47 = vector.load %arg1[%c0_39, %c0_40, %c0_41, %c0_42, %c9] : memref<2x2x2x4x82xf32, #tpu.memory_space<vmem>>, vector<1x1x1x4x64xf32>
    %48 = vector.shape_cast %47 : vector<1x1x1x4x64xf32> to vector<4x64xf32>
    %c16 = arith.constant 16 : index
    %c0_43 = arith.constant 0 : index
    %49 = vector.load %arg7[%c16, %c0_43] : memref<36x512xf32, #tpu.memory_space<vmem>>, vector<4x64xf32>
    tpu.vector_store %arg7[%c16, %c0_43], %48 {strides = array<i32>} : memref<36x512xf32, #tpu.memory_space<vmem>>, vector<4x64xf32>,
    %c0_44 = arith.constant 0 : index
    %c0_45 = arith.constant 0 : index
    %c1_46 = arith.constant 1 : index
    %c0_47 = arith.constant 0 : index
    %c9_48 = arith.constant 9 : index
    %50 = vector.load %arg1[%c0_44, %c0_45, %c1_46, %c0_47, %c9_48] : memref<2x2x2x4x82xf32, #tpu.memory_space<vmem>>, vector<1x1x1x4x64xf32>
    %51 = vector.shape_cast %50 : vector<1x1x1x4x64xf32> to vector<4x64xf32>
    %c20 = arith.constant 20 : index
    %c0_49 = arith.constant 0 : index
    %52 = vector.load %arg7[%c20, %c0_49] : memref<36x512xf32, #tpu.memory_space<vmem>>, vector<4x64xf32>
    tpu.vector_store %arg7[%c20, %c0_49], %51 {strides = array<i32>} : memref<36x512xf32, #tpu.memory_space<vmem>>, vector<4x64xf32>,
    %c0_50 = arith.constant 0 : index
    %c1_51 = arith.constant 1 : index
    %c1_52 = arith.constant 1 : index
    %c0_53 = arith.constant 0 : index
    %c8_54 = arith.constant 8 : index
    %53 = vector.load %arg1[%c0_50, %c1_51, %c1_52, %c0_53, %c8_54] : memref<2x2x2x4x82xf32, #tpu.memory_space<vmem>>, vector<1x1x1x4x64xf32>
    %54 = vector.shape_cast %53 : vector<1x1x1x4x64xf32> to vector<4x64xf32>
    %c0_i32_55 = arith.constant 0 : i32
    %55 = arith.sitofp %c0_i32_55 : i32 to f32
    %56 = vector.shape_cast %22 : vector<1x64xi1> to vector<1x64xi1>
    %57 = vector.broadcast %56 : vector<1x64xi1> to vector<4x64xi1>
    %58 = vector.broadcast %55 : f32 to vector<4x64xf32>
    %59 = arith.select %57, %54, %58 : vector<4x64xi1>, vector<4x64xf32>
    %c24 = arith.constant 24 : index
    %c0_56 = arith.constant 0 : index
    %60 = vector.load %arg7[%c24, %c0_56] : memref<36x512xf32, #tpu.memory_space<vmem>>, vector<4x64xf32>
    tpu.vector_store %arg7[%c24, %c0_56], %59 {strides = array<i32>} : memref<36x512xf32, #tpu.memory_space<vmem>>, vector<4x64xf32>,
    %c0_57 = arith.constant 0 : index
    %c1_58 = arith.constant 1 : index
    %c0_59 = arith.constant 0 : index
    %c0_60 = arith.constant 0 : index
    %c9_61 = arith.constant 9 : index
    %61 = vector.load %arg1[%c0_57, %c1_58, %c0_59, %c0_60, %c9_61] : memref<2x2x2x4x82xf32, #tpu.memory_space<vmem>>, vector<1x1x1x4x64xf32>
    %62 = vector.shape_cast %61 : vector<1x1x1x4x64xf32> to vector<4x64xf32>
    %c28 = arith.constant 28 : index
    %c0_62 = arith.constant 0 : index
    %63 = vector.load %arg7[%c28, %c0_62] : memref<36x512xf32, #tpu.memory_space<vmem>>, vector<4x64xf32>
    tpu.vector_store %arg7[%c28, %c0_62], %62 {strides = array<i32>} : memref<36x512xf32, #tpu.memory_space<vmem>>, vector<4x64xf32>,
    %c0_63 = arith.constant 0 : index
    %c1_64 = arith.constant 1 : index
    %c1_65 = arith.constant 1 : index
    %c0_66 = arith.constant 0 : index
    %c9_67 = arith.constant 9 : index
    %64 = vector.load %arg1[%c0_63, %c1_64, %c1_65, %c0_66, %c9_67] : memref<2x2x2x4x82xf32, #tpu.memory_space<vmem>>, vector<1x1x1x4x64xf32>
    %65 = vector.shape_cast %64 : vector<1x1x1x4x64xf32> to vector<4x64xf32>
    %c32 = arith.constant 32 : index
    %c0_68 = arith.constant 0 : index
    %66 = vector.load %arg7[%c32, %c0_68] : memref<36x512xf32, #tpu.memory_space<vmem>>, vector<4x64xf32>
    tpu.vector_store %arg7[%c32, %c0_68], %65 {strides = array<i32>} : memref<36x512xf32, #tpu.memory_space<vmem>>, vector<4x64xf32>,
    %c1_69 = arith.constant 1 : index
    %c1_70 = arith.constant 1 : index
    %c1_71 = arith.constant 1 : index
    %c0_72 = arith.constant 0 : index
    %c0_73 = arith.constant 0 : index
    %67 = vector.load %arg1[%c1_69, %c1_70, %c1_71, %c0_72, %c0_73] : memref<2x2x2x4x82xf32, #tpu.memory_space<vmem>>, vector<1x1x1x4x64xf32>
    %68 = vector.shape_cast %67 : vector<1x1x1x4x64xf32> to vector<4x64xf32>
    %c0_i32_74 = arith.constant 0 : i32
    %69 = arith.sitofp %c0_i32_74 : i32 to f32
    %70 = vector.shape_cast %22 : vector<1x64xi1> to vector<1x64xi1>
    %71 = vector.broadcast %70 : vector<1x64xi1> to vector<4x64xi1>
    %72 = vector.broadcast %69 : f32 to vector<4x64xf32>
    %73 = arith.select %71, %68, %72 : vector<4x64xi1>, vector<4x64xf32>
    %c0_75 = arith.constant 0 : index
    %c64 = arith.constant 64 : index
    %74 = vector.load %arg7[%c0_75, %c64] : memref<36x512xf32, #tpu.memory_space<vmem>>, vector<4x64xf32>
    tpu.vector_store %arg7[%c0_75, %c64], %73 {strides = array<i32>} : memref<36x512xf32, #tpu.memory_space<vmem>>, vector<4x64xf32>,
    %c1_76 = arith.constant 1 : index
    %c1_77 = arith.constant 1 : index
    %c0_78 = arith.constant 0 : index
    %c0_79 = arith.constant 0 : index
    %c1_80 = arith.constant 1 : index
    %75 = vector.load %arg1[%c1_76, %c1_77, %c0_78, %c0_79, %c1_80] : memref<2x2x2x4x82xf32, #tpu.memory_space<vmem>>, vector<1x1x1x4x64xf32>
    %76 = vector.shape_cast %75 : vector<1x1x1x4x64xf32> to vector<4x64xf32>
    %c4_81 = arith.constant 4 : index
    %c64_82 = arith.constant 64 : index
    %77 = vector.load %arg7[%c4_81, %c64_82] : memref<36x512xf32, #tpu.memory_space<vmem>>, vector<4x64xf32>
    tpu.vector_store %arg7[%c4_81, %c64_82], %76 {strides = array<i32>} : memref<36x512xf32, #tpu.memory_space<vmem>>, vector<4x64xf32>,
    %c1_83 = arith.constant 1 : index
    %c1_84 = arith.constant 1 : index
    %c1_85 = arith.constant 1 : index
    %c0_86 = arith.constant 0 : index
    %c1_87 = arith.constant 1 : index
    %78 = vector.load %arg1[%c1_83, %c1_84, %c1_85, %c0_86, %c1_87] : memref<2x2x2x4x82xf32, #tpu.memory_space<vmem>>, vector<1x1x1x4x64xf32>
    %79 = vector.shape_cast %78 : vector<1x1x1x4x64xf32> to vector<4x64xf32>
    %c8_88 = arith.constant 8 : index
    %c64_89 = arith.constant 64 : index
    %80 = vector.load %arg7[%c8_88, %c64_89] : memref<36x512xf32, #tpu.memory_space<vmem>>, vector<4x64xf32>
    tpu.vector_store %arg7[%c8_88, %c64_89], %79 {strides = array<i32>} : memref<36x512xf32, #tpu.memory_space<vmem>>, vector<4x64xf32>,
    %c1_90 = arith.constant 1 : index
    %c0_91 = arith.constant 0 : index
    %c1_92 = arith.constant 1 : index
    %c0_93 = arith.constant 0 : index
    %c8_94 = arith.constant 8 : index
    %81 = vector.load %arg1[%c1_90, %c0_91, %c1_92, %c0_93, %c8_94] : memref<2x2x2x4x82xf32, #tpu.memory_space<vmem>>, vector<1x1x1x4x64xf32>
    %82 = vector.shape_cast %81 : vector<1x1x1x4x64xf32> to vector<4x64xf32>
    %c0_i32_95 = arith.constant 0 : i32
    %83 = arith.sitofp %c0_i32_95 : i32 to f32
    %84 = vector.shape_cast %22 : vector<1x64xi1> to vector<1x64xi1>
    %85 = vector.broadcast %84 : vector<1x64xi1> to vector<4x64xi1>
    %86 = vector.broadcast %83 : f32 to vector<4x64xf32>
    %87 = arith.select %85, %82, %86 : vector<4x64xi1>, vector<4x64xf32>
    %c12_96 = arith.constant 12 : index
    %c64_97 = arith.constant 64 : index
    %88 = vector.load %arg7[%c12_96, %c64_97] : memref<36x512xf32, #tpu.memory_space<vmem>>, vector<4x64xf32>
    tpu.vector_store %arg7[%c12_96, %c64_97], %87 {strides = array<i32>} : memref<36x512xf32, #tpu.memory_space<vmem>>, vector<4x64xf32>,
    %c1_98 = arith.constant 1 : index
    %c0_99 = arith.constant 0 : index
    %c0_100 = arith.constant 0 : index
    %c0_101 = arith.constant 0 : index
    %c9_102 = arith.constant 9 : index
    %89 = vector.load %arg1[%c1_98, %c0_99, %c0_100, %c0_101, %c9_102] : memref<2x2x2x4x82xf32, #tpu.memory_space<vmem>>, vector<1x1x1x4x64xf32>
    %90 = vector.shape_cast %89 : vector<1x1x1x4x64xf32> to vector<4x64xf32>
    %c16_103 = arith.constant 16 : index
    %c64_104 = arith.constant 64 : index
    %91 = vector.load %arg7[%c16_103, %c64_104] : memref<36x512xf32, #tpu.memory_space<vmem>>, vector<4x64xf32>
    tpu.vector_store %arg7[%c16_103, %c64_104], %90 {strides = array<i32>} : memref<36x512xf32, #tpu.memory_space<vmem>>, vector<4x64xf32>,
    %c1_105 = arith.constant 1 : index
    %c0_106 = arith.constant 0 : index
    %c1_107 = arith.constant 1 : index
    %c0_108 = arith.constant 0 : index
    %c9_109 = arith.constant 9 : index
    %92 = vector.load %arg1[%c1_105, %c0_106, %c1_107, %c0_108, %c9_109] : memref<2x2x2x4x82xf32, #tpu.memory_space<vmem>>, vector<1x1x1x4x64xf32>
    %93 = vector.shape_cast %92 : vector<1x1x1x4x64xf32> to vector<4x64xf32>
    %c20_110 = arith.constant 20 : index
    %c64_111 = arith.constant 64 : index
    %94 = vector.load %arg7[%c20_110, %c64_111] : memref<36x512xf32, #tpu.memory_space<vmem>>, vector<4x64xf32>
    tpu.vector_store %arg7[%c20_110, %c64_111], %93 {strides = array<i32>} : memref<36x512xf32, #tpu.memory_space<vmem>>, vector<4x64xf32>,
    %c1_112 = arith.constant 1 : index
    %c1_113 = arith.constant 1 : index
    %c1_114 = arith.constant 1 : index
    %c0_115 = arith.constant 0 : index
    %c8_116 = arith.constant 8 : index
    %95 = vector.load %arg1[%c1_112, %c1_113, %c1_114, %c0_115, %c8_116] : memref<2x2x2x4x82xf32, #tpu.memory_space<vmem>>, vector<1x1x1x4x64xf32>
    %96 = vector.shape_cast %95 : vector<1x1x1x4x64xf32> to vector<4x64xf32>
    %c0_i32_117 = arith.constant 0 : i32
    %97 = arith.sitofp %c0_i32_117 : i32 to f32
    %98 = vector.shape_cast %22 : vector<1x64xi1> to vector<1x64xi1>
    %99 = vector.broadcast %98 : vector<1x64xi1> to vector<4x64xi1>
    %100 = vector.broadcast %97 : f32 to vector<4x64xf32>
    %101 = arith.select %99, %96, %100 : vector<4x64xi1>, vector<4x64xf32>
    %c24_118 = arith.constant 24 : index
    %c64_119 = arith.constant 64 : index
    %102 = vector.load %arg7[%c24_118, %c64_119] : memref<36x512xf32, #tpu.memory_space<vmem>>, vector<4x64xf32>
    tpu.vector_store %arg7[%c24_118, %c64_119], %101 {strides = array<i32>} : memref<36x512xf32, #tpu.memory_space<vmem>>, vector<4x64xf32>,
    %c1_120 = arith.constant 1 : index
    %c1_121 = arith.constant 1 : index
    %c0_122 = arith.constant 0 : index
    %c0_123 = arith.constant 0 : index
    %c9_124 = arith.constant 9 : index
    %103 = vector.load %arg1[%c1_120, %c1_121, %c0_122, %c0_123, %c9_124] : memref<2x2x2x4x82xf32, #tpu.memory_space<vmem>>, vector<1x1x1x4x64xf32>
    %104 = vector.shape_cast %103 : vector<1x1x1x4x64xf32> to vector<4x64xf32>
    %c28_125 = arith.constant 28 : index
    %c64_126 = arith.constant 64 : index
    %105 = vector.load %arg7[%c28_125, %c64_126] : memref<36x512xf32, #tpu.memory_space<vmem>>, vector<4x64xf32>
    tpu.vector_store %arg7[%c28_125, %c64_126], %104 {strides = array<i32>} : memref<36x512xf32, #tpu.memory_space<vmem>>, vector<4x64xf32>,
    %c1_127 = arith.constant 1 : index
    %c1_128 = arith.constant 1 : index
    %c1_129 = arith.constant 1 : index
    %c0_130 = arith.constant 0 : index
    %c9_131 = arith.constant 9 : index
    %106 = vector.load %arg1[%c1_127, %c1_128, %c1_129, %c0_130, %c9_131] : memref<2x2x2x4x82xf32, #tpu.memory_space<vmem>>, vector<1x1x1x4x64xf32>
    %107 = vector.shape_cast %106 : vector<1x1x1x4x64xf32> to vector<4x64xf32>
    %c32_132 = arith.constant 32 : index
    %c64_133 = arith.constant 64 : index
    %108 = vector.load %arg7[%c32_132, %c64_133] : memref<36x512xf32, #tpu.memory_space<vmem>>, vector<4x64xf32>
    tpu.vector_store %arg7[%c32_132, %c64_133], %107 {strides = array<i32>} : memref<36x512xf32, #tpu.memory_space<vmem>>, vector<4x64xf32>,
    %c0_134 = arith.constant 0 : index
    %c1_135 = arith.constant 1 : index
    %c0_136 = arith.constant 0 : index
    %c0_137 = arith.constant 0 : index
    %c1_138 = arith.constant 1 : index
    %109 = vector.load %arg1[%c0_134, %c1_135, %c0_136, %c0_137, %c1_138] : memref<2x2x2x4x82xf32, #tpu.memory_space<vmem>>, vector<1x1x1x4x64xf32>
    %110 = vector.shape_cast %109 : vector<1x1x1x4x64xf32> to vector<4x64xf32>
    %c0_139 = arith.constant 0 : index
    %c128 = arith.constant 128 : index
    %111 = vector.load %arg7[%c0_139, %c128] : memref<36x512xf32, #tpu.memory_space<vmem>>, vector<4x64xf32>
    tpu.vector_store %arg7[%c0_139, %c128], %110 {strides = array<i32>} : memref<36x512xf32, #tpu.memory_space<vmem>>, vector<4x64xf32>,
    %c0_140 = arith.constant 0 : index
    %c1_141 = arith.constant 1 : index
    %c1_142 = arith.constant 1 : index
    %c0_143 = arith.constant 0 : index
    %c1_144 = arith.constant 1 : index
    %112 = vector.load %arg1[%c0_140, %c1_141, %c1_142, %c0_143, %c1_144] : memref<2x2x2x4x82xf32, #tpu.memory_space<vmem>>, vector<1x1x1x4x64xf32>
    %113 = vector.shape_cast %112 : vector<1x1x1x4x64xf32> to vector<4x64xf32>
    %c4_145 = arith.constant 4 : index
    %c128_146 = arith.constant 128 : index
    %114 = vector.load %arg7[%c4_145, %c128_146] : memref<36x512xf32, #tpu.memory_space<vmem>>, vector<4x64xf32>
    tpu.vector_store %arg7[%c4_145, %c128_146], %113 {strides = array<i32>} : memref<36x512xf32, #tpu.memory_space<vmem>>, vector<4x64xf32>,
    %c0_147 = arith.constant 0 : index
    %c1_148 = arith.constant 1 : index
    %c0_149 = arith.constant 0 : index
    %c0_150 = arith.constant 0 : index
    %c2 = arith.constant 2 : index
    %115 = vector.load %arg1[%c0_147, %c1_148, %c0_149, %c0_150, %c2] : memref<2x2x2x4x82xf32, #tpu.memory_space<vmem>>, vector<1x1x1x4x64xf32>
    %116 = vector.shape_cast %115 : vector<1x1x1x4x64xf32> to vector<4x64xf32>
    %c0_i32_151 = arith.constant 0 : i32
    %117 = arith.sitofp %c0_i32_151 : i32 to f32
    %118 = vector.shape_cast %24 : vector<1x64xi1> to vector<1x64xi1>
    %119 = vector.broadcast %118 : vector<1x64xi1> to vector<4x64xi1>
    %120 = vector.broadcast %117 : f32 to vector<4x64xf32>
    %121 = arith.select %119, %116, %120 : vector<4x64xi1>, vector<4x64xf32>
    %c8_152 = arith.constant 8 : index
    %c128_153 = arith.constant 128 : index
    %122 = vector.load %arg7[%c8_152, %c128_153] : memref<36x512xf32, #tpu.memory_space<vmem>>, vector<4x64xf32>
    tpu.vector_store %arg7[%c8_152, %c128_153], %121 {strides = array<i32>} : memref<36x512xf32, #tpu.memory_space<vmem>>, vector<4x64xf32>,
    %c0_154 = arith.constant 0 : index
    %c0_155 = arith.constant 0 : index
    %c0_156 = arith.constant 0 : index
    %c0_157 = arith.constant 0 : index
    %c9_158 = arith.constant 9 : index
    %123 = vector.load %arg1[%c0_154, %c0_155, %c0_156, %c0_157, %c9_158] : memref<2x2x2x4x82xf32, #tpu.memory_space<vmem>>, vector<1x1x1x4x64xf32>
    %124 = vector.shape_cast %123 : vector<1x1x1x4x64xf32> to vector<4x64xf32>
    %c12_159 = arith.constant 12 : index
    %c128_160 = arith.constant 128 : index
    %125 = vector.load %arg7[%c12_159, %c128_160] : memref<36x512xf32, #tpu.memory_space<vmem>>, vector<4x64xf32>
    tpu.vector_store %arg7[%c12_159, %c128_160], %124 {strides = array<i32>} : memref<36x512xf32, #tpu.memory_space<vmem>>, vector<4x64xf32>,
    %c0_161 = arith.constant 0 : index
    %c0_162 = arith.constant 0 : index
    %c1_163 = arith.constant 1 : index
    %c0_164 = arith.constant 0 : index
    %c9_165 = arith.constant 9 : index
    %126 = vector.load %arg1[%c0_161, %c0_162, %c1_163, %c0_164, %c9_165] : memref<2x2x2x4x82xf32, #tpu.memory_space<vmem>>, vector<1x1x1x4x64xf32>
    %127 = vector.shape_cast %126 : vector<1x1x1x4x64xf32> to vector<4x64xf32>
    %c16_166 = arith.constant 16 : index
    %c128_167 = arith.constant 128 : index
    %128 = vector.load %arg7[%c16_166, %c128_167] : memref<36x512xf32, #tpu.memory_space<vmem>>, vector<4x64xf32>
    tpu.vector_store %arg7[%c16_166, %c128_167], %127 {strides = array<i32>} : memref<36x512xf32, #tpu.memory_space<vmem>>, vector<4x64xf32>,
    %c0_168 = arith.constant 0 : index
    %c0_169 = arith.constant 0 : index
    %c0_170 = arith.constant 0 : index
    %c0_171 = arith.constant 0 : index
    %c10 = arith.constant 10 : index
    %129 = vector.load %arg1[%c0_168, %c0_169, %c0_170, %c0_171, %c10] : memref<2x2x2x4x82xf32, #tpu.memory_space<vmem>>, vector<1x1x1x4x64xf32>
    %130 = vector.shape_cast %129 : vector<1x1x1x4x64xf32> to vector<4x64xf32>
    %c0_i32_172 = arith.constant 0 : i32
    %131 = arith.sitofp %c0_i32_172 : i32 to f32
    %132 = vector.shape_cast %24 : vector<1x64xi1> to vector<1x64xi1>
    %133 = vector.broadcast %132 : vector<1x64xi1> to vector<4x64xi1>
    %134 = vector.broadcast %131 : f32 to vector<4x64xf32>
    %135 = arith.select %133, %130, %134 : vector<4x64xi1>, vector<4x64xf32>
    %c20_173 = arith.constant 20 : index
    %c128_174 = arith.constant 128 : index
    %136 = vector.load %arg7[%c20_173, %c128_174] : memref<36x512xf32, #tpu.memory_space<vmem>>, vector<4x64xf32>
    tpu.vector_store %arg7[%c20_173, %c128_174], %135 {strides = array<i32>} : memref<36x512xf32, #tpu.memory_space<vmem>>, vector<4x64xf32>,
    %c0_175 = arith.constant 0 : index
    %c1_176 = arith.constant 1 : index
    %c0_177 = arith.constant 0 : index
    %c0_178 = arith.constant 0 : index
    %c9_179 = arith.constant 9 : index
    %137 = vector.load %arg1[%c0_175, %c1_176, %c0_177, %c0_178, %c9_179] : memref<2x2x2x4x82xf32, #tpu.memory_space<vmem>>, vector<1x1x1x4x64xf32>
    %138 = vector.shape_cast %137 : vector<1x1x1x4x64xf32> to vector<4x64xf32>
    %c24_180 = arith.constant 24 : index
    %c128_181 = arith.constant 128 : index
    %139 = vector.load %arg7[%c24_180, %c128_181] : memref<36x512xf32, #tpu.memory_space<vmem>>, vector<4x64xf32>
    tpu.vector_store %arg7[%c24_180, %c128_181], %138 {strides = array<i32>} : memref<36x512xf32, #tpu.memory_space<vmem>>, vector<4x64xf32>,
    %c0_182 = arith.constant 0 : index
    %c1_183 = arith.constant 1 : index
    %c1_184 = arith.constant 1 : index
    %c0_185 = arith.constant 0 : index
    %c9_186 = arith.constant 9 : index
    %140 = vector.load %arg1[%c0_182, %c1_183, %c1_184, %c0_185, %c9_186] : memref<2x2x2x4x82xf32, #tpu.memory_space<vmem>>, vector<1x1x1x4x64xf32>
    %141 = vector.shape_cast %140 : vector<1x1x1x4x64xf32> to vector<4x64xf32>
    %c28_187 = arith.constant 28 : index
    %c128_188 = arith.constant 128 : index
    %142 = vector.load %arg7[%c28_187, %c128_188] : memref<36x512xf32, #tpu.memory_space<vmem>>, vector<4x64xf32>
    tpu.vector_store %arg7[%c28_187, %c128_188], %141 {strides = array<i32>} : memref<36x512xf32, #tpu.memory_space<vmem>>, vector<4x64xf32>,
    %c0_189 = arith.constant 0 : index
    %c1_190 = arith.constant 1 : index
    %c0_191 = arith.constant 0 : index
    %c0_192 = arith.constant 0 : index
    %c10_193 = arith.constant 10 : index
    %143 = vector.load %arg1[%c0_189, %c1_190, %c0_191, %c0_192, %c10_193] : memref<2x2x2x4x82xf32, #tpu.memory_space<vmem>>, vector<1x1x1x4x64xf32>
    %144 = vector.shape_cast %143 : vector<1x1x1x4x64xf32> to vector<4x64xf32>
    %c0_i32_194 = arith.constant 0 : i32
    %145 = arith.sitofp %c0_i32_194 : i32 to f32
    %146 = vector.shape_cast %24 : vector<1x64xi1> to vector<1x64xi1>
    %147 = vector.broadcast %146 : vector<1x64xi1> to vector<4x64xi1>
    %148 = vector.broadcast %145 : f32 to vector<4x64xf32>
    %149 = arith.select %147, %144, %148 : vector<4x64xi1>, vector<4x64xf32>
    %c32_195 = arith.constant 32 : index
    %c128_196 = arith.constant 128 : index
    %150 = vector.load %arg7[%c32_195, %c128_196] : memref<36x512xf32, #tpu.memory_space<vmem>>, vector<4x64xf32>
    tpu.vector_store %arg7[%c32_195, %c128_196], %149 {strides = array<i32>} : memref<36x512xf32, #tpu.memory_space<vmem>>, vector<4x64xf32>,
    %c1_197 = arith.constant 1 : index
    %c1_198 = arith.constant 1 : index
    %c0_199 = arith.constant 0 : index
    %c0_200 = arith.constant 0 : index
    %c1_201 = arith.constant 1 : index
    %151 = vector.load %arg1[%c1_197, %c1_198, %c0_199, %c0_200, %c1_201] : memref<2x2x2x4x82xf32, #tpu.memory_space<vmem>>, vector<1x1x1x4x64xf32>
    %152 = vector.shape_cast %151 : vector<1x1x1x4x64xf32> to vector<4x64xf32>
    %c0_202 = arith.constant 0 : index
    %c192 = arith.constant 192 : index
    %153 = vector.load %arg7[%c0_202, %c192] : memref<36x512xf32, #tpu.memory_space<vmem>>, vector<4x64xf32>
    tpu.vector_store %arg7[%c0_202, %c192], %152 {strides = array<i32>} : memref<36x512xf32, #tpu.memory_space<vmem>>, vector<4x64xf32>,
    %c1_203 = arith.constant 1 : index
    %c1_204 = arith.constant 1 : index
    %c1_205 = arith.constant 1 : index
    %c0_206 = arith.constant 0 : index
    %c1_207 = arith.constant 1 : index
    %154 = vector.load %arg1[%c1_203, %c1_204, %c1_205, %c0_206, %c1_207] : memref<2x2x2x4x82xf32, #tpu.memory_space<vmem>>, vector<1x1x1x4x64xf32>
    %155 = vector.shape_cast %154 : vector<1x1x1x4x64xf32> to vector<4x64xf32>
    %c4_208 = arith.constant 4 : index
    %c192_209 = arith.constant 192 : index
    %156 = vector.load %arg7[%c4_208, %c192_209] : memref<36x512xf32, #tpu.memory_space<vmem>>, vector<4x64xf32>
    tpu.vector_store %arg7[%c4_208, %c192_209], %155 {strides = array<i32>} : memref<36x512xf32, #tpu.memory_space<vmem>>, vector<4x64xf32>,
    %c1_210 = arith.constant 1 : index
    %c1_211 = arith.constant 1 : index
    %c0_212 = arith.constant 0 : index
    %c0_213 = arith.constant 0 : index
    %c2_214 = arith.constant 2 : index
    %157 = vector.load %arg1[%c1_210, %c1_211, %c0_212, %c0_213, %c2_214] : memref<2x2x2x4x82xf32, #tpu.memory_space<vmem>>, vector<1x1x1x4x64xf32>
    %158 = vector.shape_cast %157 : vector<1x1x1x4x64xf32> to vector<4x64xf32>
    %c0_i32_215 = arith.constant 0 : i32
    %159 = arith.sitofp %c0_i32_215 : i32 to f32
    %160 = vector.shape_cast %24 : vector<1x64xi1> to vector<1x64xi1>
    %161 = vector.broadcast %160 : vector<1x64xi1> to vector<4x64xi1>
    %162 = vector.broadcast %159 : f32 to vector<4x64xf32>
    %163 = arith.select %161, %158, %162 : vector<4x64xi1>, vector<4x64xf32>
    %c8_216 = arith.constant 8 : index
    %c192_217 = arith.constant 192 : index
    %164 = vector.load %arg7[%c8_216, %c192_217] : memref<36x512xf32, #tpu.memory_space<vmem>>, vector<4x64xf32>
    tpu.vector_store %arg7[%c8_216, %c192_217], %163 {strides = array<i32>} : memref<36x512xf32, #tpu.memory_space<vmem>>, vector<4x64xf32>,
    %c1_218 = arith.constant 1 : index
    %c0_219 = arith.constant 0 : index
    %c0_220 = arith.constant 0 : index
    %c0_221 = arith.constant 0 : index
    %c9_222 = arith.constant 9 : index
    %165 = vector.load %arg1[%c1_218, %c0_219, %c0_220, %c0_221, %c9_222] : memref<2x2x2x4x82xf32, #tpu.memory_space<vmem>>, vector<1x1x1x4x64xf32>
    %166 = vector.shape_cast %165 : vector<1x1x1x4x64xf32> to vector<4x64xf32>
    %c12_223 = arith.constant 12 : index
    %c192_224 = arith.constant 192 : index
    %167 = vector.load %arg7[%c12_223, %c192_224] : memref<36x512xf32, #tpu.memory_space<vmem>>, vector<4x64xf32>
    tpu.vector_store %arg7[%c12_223, %c192_224], %166 {strides = array<i32>} : memref<36x512xf32, #tpu.memory_space<vmem>>, vector<4x64xf32>,
    %c1_225 = arith.constant 1 : index
    %c0_226 = arith.constant 0 : index
    %c1_227 = arith.constant 1 : index
    %c0_228 = arith.constant 0 : index
    %c9_229 = arith.constant 9 : index
    %168 = vector.load %arg1[%c1_225, %c0_226, %c1_227, %c0_228, %c9_229] : memref<2x2x2x4x82xf32, #tpu.memory_space<vmem>>, vector<1x1x1x4x64xf32>
    %169 = vector.shape_cast %168 : vector<1x1x1x4x64xf32> to vector<4x64xf32>
    %c16_230 = arith.constant 16 : index
    %c192_231 = arith.constant 192 : index
    %170 = vector.load %arg7[%c16_230, %c192_231] : memref<36x512xf32, #tpu.memory_space<vmem>>, vector<4x64xf32>
    tpu.vector_store %arg7[%c16_230, %c192_231], %169 {strides = array<i32>} : memref<36x512xf32, #tpu.memory_space<vmem>>, vector<4x64xf32>,
    %c1_232 = arith.constant 1 : index
    %c0_233 = arith.constant 0 : index
    %c0_234 = arith.constant 0 : index
    %c0_235 = arith.constant 0 : index
    %c10_236 = arith.constant 10 : index
    %171 = vector.load %arg1[%c1_232, %c0_233, %c0_234, %c0_235, %c10_236] : memref<2x2x2x4x82xf32, #tpu.memory_space<vmem>>, vector<1x1x1x4x64xf32>
    %172 = vector.shape_cast %171 : vector<1x1x1x4x64xf32> to vector<4x64xf32>
    %c0_i32_237 = arith.constant 0 : i32
    %173 = arith.sitofp %c0_i32_237 : i32 to f32
    %174 = vector.shape_cast %24 : vector<1x64xi1> to vector<1x64xi1>
    %175 = vector.broadcast %174 : vector<1x64xi1> to vector<4x64xi1>
    %176 = vector.broadcast %173 : f32 to vector<4x64xf32>
    %177 = arith.select %175, %172, %176 : vector<4x64xi1>, vector<4x64xf32>
    %c20_238 = arith.constant 20 : index
    %c192_239 = arith.constant 192 : index
    %178 = vector.load %arg7[%c20_238, %c192_239] : memref<36x512xf32, #tpu.memory_space<vmem>>, vector<4x64xf32>
    tpu.vector_store %arg7[%c20_238, %c192_239], %177 {strides = array<i32>} : memref<36x512xf32, #tpu.memory_space<vmem>>, vector<4x64xf32>,
    %c1_240 = arith.constant 1 : index
    %c1_241 = arith.constant 1 : index
    %c0_242 = arith.constant 0 : index
    %c0_243 = arith.constant 0 : index
    %c9_244 = arith.constant 9 : index
    %179 = vector.load %arg1[%c1_240, %c1_241, %c0_242, %c0_243, %c9_244] : memref<2x2x2x4x82xf32, #tpu.memory_space<vmem>>, vector<1x1x1x4x64xf32>
    %180 = vector.shape_cast %179 : vector<1x1x1x4x64xf32> to vector<4x64xf32>
    %c24_245 = arith.constant 24 : index
    %c192_246 = arith.constant 192 : index
    %181 = vector.load %arg7[%c24_245, %c192_246] : memref<36x512xf32, #tpu.memory_space<vmem>>, vector<4x64xf32>
    tpu.vector_store %arg7[%c24_245, %c192_246], %180 {strides = array<i32>} : memref<36x512xf32, #tpu.memory_space<vmem>>, vector<4x64xf32>,
    %c1_247 = arith.constant 1 : index
    %c1_248 = arith.constant 1 : index
    %c1_249 = arith.constant 1 : index
    %c0_250 = arith.constant 0 : index
    %c9_251 = arith.constant 9 : index
    %182 = vector.load %arg1[%c1_247, %c1_248, %c1_249, %c0_250, %c9_251] : memref<2x2x2x4x82xf32, #tpu.memory_space<vmem>>, vector<1x1x1x4x64xf32>
    %183 = vector.shape_cast %182 : vector<1x1x1x4x64xf32> to vector<4x64xf32>
    %c28_252 = arith.constant 28 : index
    %c192_253 = arith.constant 192 : index
    %184 = vector.load %arg7[%c28_252, %c192_253] : memref<36x512xf32, #tpu.memory_space<vmem>>, vector<4x64xf32>
    tpu.vector_store %arg7[%c28_252, %c192_253], %183 {strides = array<i32>} : memref<36x512xf32, #tpu.memory_space<vmem>>, vector<4x64xf32>,
    %c1_254 = arith.constant 1 : index
    %c1_255 = arith.constant 1 : index
    %c0_256 = arith.constant 0 : index
    %c0_257 = arith.constant 0 : index
    %c10_258 = arith.constant 10 : index
    %185 = vector.load %arg1[%c1_254, %c1_255, %c0_256, %c0_257, %c10_258] : memref<2x2x2x4x82xf32, #tpu.memory_space<vmem>>, vector<1x1x1x4x64xf32>
    %186 = vector.shape_cast %185 : vector<1x1x1x4x64xf32> to vector<4x64xf32>
    %c0_i32_259 = arith.constant 0 : i32
    %187 = arith.sitofp %c0_i32_259 : i32 to f32
    %188 = vector.shape_cast %24 : vector<1x64xi1> to vector<1x64xi1>
    %189 = vector.broadcast %188 : vector<1x64xi1> to vector<4x64xi1>
    %190 = vector.broadcast %187 : f32 to vector<4x64xf32>
    %191 = arith.select %189, %186, %190 : vector<4x64xi1>, vector<4x64xf32>
    %c32_260 = arith.constant 32 : index
    %c192_261 = arith.constant 192 : index
    %192 = vector.load %arg7[%c32_260, %c192_261] : memref<36x512xf32, #tpu.memory_space<vmem>>, vector<4x64xf32>
    tpu.vector_store %arg7[%c32_260, %c192_261], %191 {strides = array<i32>} : memref<36x512xf32, #tpu.memory_space<vmem>>, vector<4x64xf32>,
    %c0_262 = arith.constant 0 : index
    %c0_263 = arith.constant 0 : index
    %c1_264 = arith.constant 1 : index
    %c0_265 = arith.constant 0 : index
    %c8_266 = arith.constant 8 : index
    %193 = vector.load %arg1[%c0_262, %c0_263, %c1_264, %c0_265, %c8_266] : memref<2x2x2x4x82xf32, #tpu.memory_space<vmem>>, vector<1x1x1x4x64xf32>
    %194 = vector.shape_cast %193 : vector<1x1x1x4x64xf32> to vector<4x64xf32>
    %c0_i32_267 = arith.constant 0 : i32
    %195 = arith.sitofp %c0_i32_267 : i32 to f32
    %196 = vector.shape_cast %22 : vector<1x64xi1> to vector<1x64xi1>
    %197 = vector.broadcast %196 : vector<1x64xi1> to vector<4x64xi1>
    %198 = vector.broadcast %195 : f32 to vector<4x64xf32>
    %199 = arith.select %197, %194, %198 : vector<4x64xi1>, vector<4x64xf32>
    %c0_268 = arith.constant 0 : index
    %c256 = arith.constant 256 : index
    %200 = vector.load %arg7[%c0_268, %c256] : memref<36x512xf32, #tpu.memory_space<vmem>>, vector<4x64xf32>
    tpu.vector_store %arg7[%c0_268, %c256], %199 {strides = array<i32>} : memref<36x512xf32, #tpu.memory_space<vmem>>, vector<4x64xf32>,
    %c0_269 = arith.constant 0 : index
    %c0_270 = arith.constant 0 : index
    %c0_271 = arith.constant 0 : index
    %c0_272 = arith.constant 0 : index
    %c9_273 = arith.constant 9 : index
    %201 = vector.load %arg1[%c0_269, %c0_270, %c0_271, %c0_272, %c9_273] : memref<2x2x2x4x82xf32, #tpu.memory_space<vmem>>, vector<1x1x1x4x64xf32>
    %202 = vector.shape_cast %201 : vector<1x1x1x4x64xf32> to vector<4x64xf32>
    %c4_274 = arith.constant 4 : index
    %c256_275 = arith.constant 256 : index
    %203 = vector.load %arg7[%c4_274, %c256_275] : memref<36x512xf32, #tpu.memory_space<vmem>>, vector<4x64xf32>
    tpu.vector_store %arg7[%c4_274, %c256_275], %202 {strides = array<i32>} : memref<36x512xf32, #tpu.memory_space<vmem>>, vector<4x64xf32>,
    %c0_276 = arith.constant 0 : index
    %c0_277 = arith.constant 0 : index
    %c1_278 = arith.constant 1 : index
    %c0_279 = arith.constant 0 : index
    %c9_280 = arith.constant 9 : index
    %204 = vector.load %arg1[%c0_276, %c0_277, %c1_278, %c0_279, %c9_280] : memref<2x2x2x4x82xf32, #tpu.memory_space<vmem>>, vector<1x1x1x4x64xf32>
    %205 = vector.shape_cast %204 : vector<1x1x1x4x64xf32> to vector<4x64xf32>
    %c8_281 = arith.constant 8 : index
    %c256_282 = arith.constant 256 : index
    %206 = vector.load %arg7[%c8_281, %c256_282] : memref<36x512xf32, #tpu.memory_space<vmem>>, vector<4x64xf32>
    tpu.vector_store %arg7[%c8_281, %c256_282], %205 {strides = array<i32>} : memref<36x512xf32, #tpu.memory_space<vmem>>, vector<4x64xf32>,
    %c0_283 = arith.constant 0 : index
    %c1_284 = arith.constant 1 : index
    %c1_285 = arith.constant 1 : index
    %c0_286 = arith.constant 0 : index
    %c8_287 = arith.constant 8 : index
    %207 = vector.load %arg1[%c0_283, %c1_284, %c1_285, %c0_286, %c8_287] : memref<2x2x2x4x82xf32, #tpu.memory_space<vmem>>, vector<1x1x1x4x64xf32>
    %208 = vector.shape_cast %207 : vector<1x1x1x4x64xf32> to vector<4x64xf32>
    %c0_i32_288 = arith.constant 0 : i32
    %209 = arith.sitofp %c0_i32_288 : i32 to f32
    %210 = vector.shape_cast %22 : vector<1x64xi1> to vector<1x64xi1>
    %211 = vector.broadcast %210 : vector<1x64xi1> to vector<4x64xi1>
    %212 = vector.broadcast %209 : f32 to vector<4x64xf32>
    %213 = arith.select %211, %208, %212 : vector<4x64xi1>, vector<4x64xf32>
    %c12_289 = arith.constant 12 : index
    %c256_290 = arith.constant 256 : index
    %214 = vector.load %arg7[%c12_289, %c256_290] : memref<36x512xf32, #tpu.memory_space<vmem>>, vector<4x64xf32>
    tpu.vector_store %arg7[%c12_289, %c256_290], %213 {strides = array<i32>} : memref<36x512xf32, #tpu.memory_space<vmem>>, vector<4x64xf32>,
    %c0_291 = arith.constant 0 : index
    %c1_292 = arith.constant 1 : index
    %c0_293 = arith.constant 0 : index
    %c0_294 = arith.constant 0 : index
    %c9_295 = arith.constant 9 : index
    %215 = vector.load %arg1[%c0_291, %c1_292, %c0_293, %c0_294, %c9_295] : memref<2x2x2x4x82xf32, #tpu.memory_space<vmem>>, vector<1x1x1x4x64xf32>
    %216 = vector.shape_cast %215 : vector<1x1x1x4x64xf32> to vector<4x64xf32>
    %c16_296 = arith.constant 16 : index
    %c256_297 = arith.constant 256 : index
    %217 = vector.load %arg7[%c16_296, %c256_297] : memref<36x512xf32, #tpu.memory_space<vmem>>, vector<4x64xf32>
    tpu.vector_store %arg7[%c16_296, %c256_297], %216 {strides = array<i32>} : memref<36x512xf32, #tpu.memory_space<vmem>>, vector<4x64xf32>,
    %c0_298 = arith.constant 0 : index
    %c1_299 = arith.constant 1 : index
    %c1_300 = arith.constant 1 : index
    %c0_301 = arith.constant 0 : index
    %c9_302 = arith.constant 9 : index
    %218 = vector.load %arg1[%c0_298, %c1_299, %c1_300, %c0_301, %c9_302] : memref<2x2x2x4x82xf32, #tpu.memory_space<vmem>>, vector<1x1x1x4x64xf32>
    %219 = vector.shape_cast %218 : vector<1x1x1x4x64xf32> to vector<4x64xf32>
    %c20_303 = arith.constant 20 : index
    %c256_304 = arith.constant 256 : index
    %220 = vector.load %arg7[%c20_303, %c256_304] : memref<36x512xf32, #tpu.memory_space<vmem>>, vector<4x64xf32>
    tpu.vector_store %arg7[%c20_303, %c256_304], %219 {strides = array<i32>} : memref<36x512xf32, #tpu.memory_space<vmem>>, vector<4x64xf32>,
    %c0_305 = arith.constant 0 : index
    %c0_306 = arith.constant 0 : index
    %c1_307 = arith.constant 1 : index
    %c0_308 = arith.constant 0 : index
    %c16_309 = arith.constant 16 : index
    %221 = vector.load %arg1[%c0_305, %c0_306, %c1_307, %c0_308, %c16_309] : memref<2x2x2x4x82xf32, #tpu.memory_space<vmem>>, vector<1x1x1x4x64xf32>
    %222 = vector.shape_cast %221 : vector<1x1x1x4x64xf32> to vector<4x64xf32>
    %c0_i32_310 = arith.constant 0 : i32
    %223 = arith.sitofp %c0_i32_310 : i32 to f32
    %224 = vector.shape_cast %22 : vector<1x64xi1> to vector<1x64xi1>
    %225 = vector.broadcast %224 : vector<1x64xi1> to vector<4x64xi1>
    %226 = vector.broadcast %223 : f32 to vector<4x64xf32>
    %227 = arith.select %225, %222, %226 : vector<4x64xi1>, vector<4x64xf32>
    %c24_311 = arith.constant 24 : index
    %c256_312 = arith.constant 256 : index
    %228 = vector.load %arg7[%c24_311, %c256_312] : memref<36x512xf32, #tpu.memory_space<vmem>>, vector<4x64xf32>
    tpu.vector_store %arg7[%c24_311, %c256_312], %227 {strides = array<i32>} : memref<36x512xf32, #tpu.memory_space<vmem>>, vector<4x64xf32>,
    %c0_313 = arith.constant 0 : index
    %c0_314 = arith.constant 0 : index
    %c0_315 = arith.constant 0 : index
    %c0_316 = arith.constant 0 : index
    %c17 = arith.constant 17 : index
    %229 = vector.load %arg1[%c0_313, %c0_314, %c0_315, %c0_316, %c17] : memref<2x2x2x4x82xf32, #tpu.memory_space<vmem>>, vector<1x1x1x4x64xf32>
    %230 = vector.shape_cast %229 : vector<1x1x1x4x64xf32> to vector<4x64xf32>
    %c28_317 = arith.constant 28 : index
    %c256_318 = arith.constant 256 : index
    %231 = vector.load %arg7[%c28_317, %c256_318] : memref<36x512xf32, #tpu.memory_space<vmem>>, vector<4x64xf32>
    tpu.vector_store %arg7[%c28_317, %c256_318], %230 {strides = array<i32>} : memref<36x512xf32, #tpu.memory_space<vmem>>, vector<4x64xf32>,
    %c0_319 = arith.constant 0 : index
    %c0_320 = arith.constant 0 : index
    %c1_321 = arith.constant 1 : index
    %c0_322 = arith.constant 0 : index
    %c17_323 = arith.constant 17 : index
    %232 = vector.load %arg1[%c0_319, %c0_320, %c1_321, %c0_322, %c17_323] : memref<2x2x2x4x82xf32, #tpu.memory_space<vmem>>, vector<1x1x1x4x64xf32>
    %233 = vector.shape_cast %232 : vector<1x1x1x4x64xf32> to vector<4x64xf32>
    %c32_324 = arith.constant 32 : index
    %c256_325 = arith.constant 256 : index
    %234 = vector.load %arg7[%c32_324, %c256_325] : memref<36x512xf32, #tpu.memory_space<vmem>>, vector<4x64xf32>
    tpu.vector_store %arg7[%c32_324, %c256_325], %233 {strides = array<i32>} : memref<36x512xf32, #tpu.memory_space<vmem>>, vector<4x64xf32>,
    %c1_326 = arith.constant 1 : index
    %c0_327 = arith.constant 0 : index
    %c1_328 = arith.constant 1 : index
    %c0_329 = arith.constant 0 : index
    %c8_330 = arith.constant 8 : index
    %235 = vector.load %arg1[%c1_326, %c0_327, %c1_328, %c0_329, %c8_330] : memref<2x2x2x4x82xf32, #tpu.memory_space<vmem>>, vector<1x1x1x4x64xf32>
    %236 = vector.shape_cast %235 : vector<1x1x1x4x64xf32> to vector<4x64xf32>
    %c0_i32_331 = arith.constant 0 : i32
    %237 = arith.sitofp %c0_i32_331 : i32 to f32
    %238 = vector.shape_cast %22 : vector<1x64xi1> to vector<1x64xi1>
    %239 = vector.broadcast %238 : vector<1x64xi1> to vector<4x64xi1>
    %240 = vector.broadcast %237 : f32 to vector<4x64xf32>
    %241 = arith.select %239, %236, %240 : vector<4x64xi1>, vector<4x64xf32>
    %c0_332 = arith.constant 0 : index
    %c320 = arith.constant 320 : index
    %242 = vector.load %arg7[%c0_332, %c320] : memref<36x512xf32, #tpu.memory_space<vmem>>, vector<4x64xf32>
    tpu.vector_store %arg7[%c0_332, %c320], %241 {strides = array<i32>} : memref<36x512xf32, #tpu.memory_space<vmem>>, vector<4x64xf32>,
    %c1_333 = arith.constant 1 : index
    %c0_334 = arith.constant 0 : index
    %c0_335 = arith.constant 0 : index
    %c0_336 = arith.constant 0 : index
    %c9_337 = arith.constant 9 : index
    %243 = vector.load %arg1[%c1_333, %c0_334, %c0_335, %c0_336, %c9_337] : memref<2x2x2x4x82xf32, #tpu.memory_space<vmem>>, vector<1x1x1x4x64xf32>
    %244 = vector.shape_cast %243 : vector<1x1x1x4x64xf32> to vector<4x64xf32>
    %c4_338 = arith.constant 4 : index
    %c320_339 = arith.constant 320 : index
    %245 = vector.load %arg7[%c4_338, %c320_339] : memref<36x512xf32, #tpu.memory_space<vmem>>, vector<4x64xf32>
    tpu.vector_store %arg7[%c4_338, %c320_339], %244 {strides = array<i32>} : memref<36x512xf32, #tpu.memory_space<vmem>>, vector<4x64xf32>,
    %c1_340 = arith.constant 1 : index
    %c0_341 = arith.constant 0 : index
    %c1_342 = arith.constant 1 : index
    %c0_343 = arith.constant 0 : index
    %c9_344 = arith.constant 9 : index
    %246 = vector.load %arg1[%c1_340, %c0_341, %c1_342, %c0_343, %c9_344] : memref<2x2x2x4x82xf32, #tpu.memory_space<vmem>>, vector<1x1x1x4x64xf32>
    %247 = vector.shape_cast %246 : vector<1x1x1x4x64xf32> to vector<4x64xf32>
    %c8_345 = arith.constant 8 : index
    %c320_346 = arith.constant 320 : index
    %248 = vector.load %arg7[%c8_345, %c320_346] : memref<36x512xf32, #tpu.memory_space<vmem>>, vector<4x64xf32>
    tpu.vector_store %arg7[%c8_345, %c320_346], %247 {strides = array<i32>} : memref<36x512xf32, #tpu.memory_space<vmem>>, vector<4x64xf32>,
    %c1_347 = arith.constant 1 : index
    %c1_348 = arith.constant 1 : index
    %c1_349 = arith.constant 1 : index
    %c0_350 = arith.constant 0 : index
    %c8_351 = arith.constant 8 : index
    %249 = vector.load %arg1[%c1_347, %c1_348, %c1_349, %c0_350, %c8_351] : memref<2x2x2x4x82xf32, #tpu.memory_space<vmem>>, vector<1x1x1x4x64xf32>
    %250 = vector.shape_cast %249 : vector<1x1x1x4x64xf32> to vector<4x64xf32>
    %c0_i32_352 = arith.constant 0 : i32
    %251 = arith.sitofp %c0_i32_352 : i32 to f32
    %252 = vector.shape_cast %22 : vector<1x64xi1> to vector<1x64xi1>
    %253 = vector.broadcast %252 : vector<1x64xi1> to vector<4x64xi1>
    %254 = vector.broadcast %251 : f32 to vector<4x64xf32>
    %255 = arith.select %253, %250, %254 : vector<4x64xi1>, vector<4x64xf32>
    %c12_353 = arith.constant 12 : index
    %c320_354 = arith.constant 320 : index
    %256 = vector.load %arg7[%c12_353, %c320_354] : memref<36x512xf32, #tpu.memory_space<vmem>>, vector<4x64xf32>
    tpu.vector_store %arg7[%c12_353, %c320_354], %255 {strides = array<i32>} : memref<36x512xf32, #tpu.memory_space<vmem>>, vector<4x64xf32>,
    %c1_355 = arith.constant 1 : index
    %c1_356 = arith.constant 1 : index
    %c0_357 = arith.constant 0 : index
    %c0_358 = arith.constant 0 : index
    %c9_359 = arith.constant 9 : index
    %257 = vector.load %arg1[%c1_355, %c1_356, %c0_357, %c0_358, %c9_359] : memref<2x2x2x4x82xf32, #tpu.memory_space<vmem>>, vector<1x1x1x4x64xf32>
    %258 = vector.shape_cast %257 : vector<1x1x1x4x64xf32> to vector<4x64xf32>
    %c16_360 = arith.constant 16 : index
    %c320_361 = arith.constant 320 : index
    %259 = vector.load %arg7[%c16_360, %c320_361] : memref<36x512xf32, #tpu.memory_space<vmem>>, vector<4x64xf32>
    tpu.vector_store %arg7[%c16_360, %c320_361], %258 {strides = array<i32>} : memref<36x512xf32, #tpu.memory_space<vmem>>, vector<4x64xf32>,
    %c1_362 = arith.constant 1 : index
    %c1_363 = arith.constant 1 : index
    %c1_364 = arith.constant 1 : index
    %c0_365 = arith.constant 0 : index
    %c9_366 = arith.constant 9 : index
    %260 = vector.load %arg1[%c1_362, %c1_363, %c1_364, %c0_365, %c9_366] : memref<2x2x2x4x82xf32, #tpu.memory_space<vmem>>, vector<1x1x1x4x64xf32>
    %261 = vector.shape_cast %260 : vector<1x1x1x4x64xf32> to vector<4x64xf32>
    %c20_367 = arith.constant 20 : index
    %c320_368 = arith.constant 320 : index
    %262 = vector.load %arg7[%c20_367, %c320_368] : memref<36x512xf32, #tpu.memory_space<vmem>>, vector<4x64xf32>
    tpu.vector_store %arg7[%c20_367, %c320_368], %261 {strides = array<i32>} : memref<36x512xf32, #tpu.memory_space<vmem>>, vector<4x64xf32>,
    %c1_369 = arith.constant 1 : index
    %c0_370 = arith.constant 0 : index
    %c1_371 = arith.constant 1 : index
    %c0_372 = arith.constant 0 : index
    %c16_373 = arith.constant 16 : index
    %263 = vector.load %arg1[%c1_369, %c0_370, %c1_371, %c0_372, %c16_373] : memref<2x2x2x4x82xf32, #tpu.memory_space<vmem>>, vector<1x1x1x4x64xf32>
    %264 = vector.shape_cast %263 : vector<1x1x1x4x64xf32> to vector<4x64xf32>
    %c0_i32_374 = arith.constant 0 : i32
    %265 = arith.sitofp %c0_i32_374 : i32 to f32
    %266 = vector.shape_cast %22 : vector<1x64xi1> to vector<1x64xi1>
    %267 = vector.broadcast %266 : vector<1x64xi1> to vector<4x64xi1>
    %268 = vector.broadcast %265 : f32 to vector<4x64xf32>
    %269 = arith.select %267, %264, %268 : vector<4x64xi1>, vector<4x64xf32>
    %c24_375 = arith.constant 24 : index
    %c320_376 = arith.constant 320 : index
    %270 = vector.load %arg7[%c24_375, %c320_376] : memref<36x512xf32, #tpu.memory_space<vmem>>, vector<4x64xf32>
    tpu.vector_store %arg7[%c24_375, %c320_376], %269 {strides = array<i32>} : memref<36x512xf32, #tpu.memory_space<vmem>>, vector<4x64xf32>,
    %c1_377 = arith.constant 1 : index
    %c0_378 = arith.constant 0 : index
    %c0_379 = arith.constant 0 : index
    %c0_380 = arith.constant 0 : index
    %c17_381 = arith.constant 17 : index
    %271 = vector.load %arg1[%c1_377, %c0_378, %c0_379, %c0_380, %c17_381] : memref<2x2x2x4x82xf32, #tpu.memory_space<vmem>>, vector<1x1x1x4x64xf32>
    %272 = vector.shape_cast %271 : vector<1x1x1x4x64xf32> to vector<4x64xf32>
    %c28_382 = arith.constant 28 : index
    %c320_383 = arith.constant 320 : index
    %273 = vector.load %arg7[%c28_382, %c320_383] : memref<36x512xf32, #tpu.memory_space<vmem>>, vector<4x64xf32>
    tpu.vector_store %arg7[%c28_382, %c320_383], %272 {strides = array<i32>} : memref<36x512xf32, #tpu.memory_space<vmem>>, vector<4x64xf32>,
    %c1_384 = arith.constant 1 : index
    %c0_385 = arith.constant 0 : index
    %c1_386 = arith.constant 1 : index
    %c0_387 = arith.constant 0 : index
    %c17_388 = arith.constant 17 : index
    %274 = vector.load %arg1[%c1_384, %c0_385, %c1_386, %c0_387, %c17_388] : memref<2x2x2x4x82xf32, #tpu.memory_space<vmem>>, vector<1x1x1x4x64xf32>
    %275 = vector.shape_cast %274 : vector<1x1x1x4x64xf32> to vector<4x64xf32>
    %c32_389 = arith.constant 32 : index
    %c320_390 = arith.constant 320 : index
    %276 = vector.load %arg7[%c32_389, %c320_390] : memref<36x512xf32, #tpu.memory_space<vmem>>, vector<4x64xf32>
    tpu.vector_store %arg7[%c32_389, %c320_390], %275 {strides = array<i32>} : memref<36x512xf32, #tpu.memory_space<vmem>>, vector<4x64xf32>,
    %c0_391 = arith.constant 0 : index
    %c0_392 = arith.constant 0 : index
    %c0_393 = arith.constant 0 : index
    %c0_394 = arith.constant 0 : index
    %c9_395 = arith.constant 9 : index
    %277 = vector.load %arg1[%c0_391, %c0_392, %c0_393, %c0_394, %c9_395] : memref<2x2x2x4x82xf32, #tpu.memory_space<vmem>>, vector<1x1x1x4x64xf32>
    %278 = vector.shape_cast %277 : vector<1x1x1x4x64xf32> to vector<4x64xf32>
    %c0_396 = arith.constant 0 : index
    %c384 = arith.constant 384 : index
    %279 = vector.load %arg7[%c0_396, %c384] : memref<36x512xf32, #tpu.memory_space<vmem>>, vector<4x64xf32>
    tpu.vector_store %arg7[%c0_396, %c384], %278 {strides = array<i32>} : memref<36x512xf32, #tpu.memory_space<vmem>>, vector<4x64xf32>,
    %c0_397 = arith.constant 0 : index
    %c0_398 = arith.constant 0 : index
    %c1_399 = arith.constant 1 : index
    %c0_400 = arith.constant 0 : index
    %c9_401 = arith.constant 9 : index
    %280 = vector.load %arg1[%c0_397, %c0_398, %c1_399, %c0_400, %c9_401] : memref<2x2x2x4x82xf32, #tpu.memory_space<vmem>>, vector<1x1x1x4x64xf32>
    %281 = vector.shape_cast %280 : vector<1x1x1x4x64xf32> to vector<4x64xf32>
    %c4_402 = arith.constant 4 : index
    %c384_403 = arith.constant 384 : index
    %282 = vector.load %arg7[%c4_402, %c384_403] : memref<36x512xf32, #tpu.memory_space<vmem>>, vector<4x64xf32>
    tpu.vector_store %arg7[%c4_402, %c384_403], %281 {strides = array<i32>} : memref<36x512xf32, #tpu.memory_space<vmem>>, vector<4x64xf32>,
    %c0_404 = arith.constant 0 : index
    %c0_405 = arith.constant 0 : index
    %c0_406 = arith.constant 0 : index
    %c0_407 = arith.constant 0 : index
    %c10_408 = arith.constant 10 : index
    %283 = vector.load %arg1[%c0_404, %c0_405, %c0_406, %c0_407, %c10_408] : memref<2x2x2x4x82xf32, #tpu.memory_space<vmem>>, vector<1x1x1x4x64xf32>
    %284 = vector.shape_cast %283 : vector<1x1x1x4x64xf32> to vector<4x64xf32>
    %c0_i32_409 = arith.constant 0 : i32
    %285 = arith.sitofp %c0_i32_409 : i32 to f32
    %286 = vector.shape_cast %24 : vector<1x64xi1> to vector<1x64xi1>
    %287 = vector.broadcast %286 : vector<1x64xi1> to vector<4x64xi1>
    %288 = vector.broadcast %285 : f32 to vector<4x64xf32>
    %289 = arith.select %287, %284, %288 : vector<4x64xi1>, vector<4x64xf32>
    %c8_410 = arith.constant 8 : index
    %c384_411 = arith.constant 384 : index
    %290 = vector.load %arg7[%c8_410, %c384_411] : memref<36x512xf32, #tpu.memory_space<vmem>>, vector<4x64xf32>
    tpu.vector_store %arg7[%c8_410, %c384_411], %289 {strides = array<i32>} : memref<36x512xf32, #tpu.memory_space<vmem>>, vector<4x64xf32>,
    %c0_412 = arith.constant 0 : index
    %c1_413 = arith.constant 1 : index
    %c0_414 = arith.constant 0 : index
    %c0_415 = arith.constant 0 : index
    %c9_416 = arith.constant 9 : index
    %291 = vector.load %arg1[%c0_412, %c1_413, %c0_414, %c0_415, %c9_416] : memref<2x2x2x4x82xf32, #tpu.memory_space<vmem>>, vector<1x1x1x4x64xf32>
    %292 = vector.shape_cast %291 : vector<1x1x1x4x64xf32> to vector<4x64xf32>
    %c12_417 = arith.constant 12 : index
    %c384_418 = arith.constant 384 : index
    %293 = vector.load %arg7[%c12_417, %c384_418] : memref<36x512xf32, #tpu.memory_space<vmem>>, vector<4x64xf32>
    tpu.vector_store %arg7[%c12_417, %c384_418], %292 {strides = array<i32>} : memref<36x512xf32, #tpu.memory_space<vmem>>, vector<4x64xf32>,
    %c0_419 = arith.constant 0 : index
    %c1_420 = arith.constant 1 : index
    %c1_421 = arith.constant 1 : index
    %c0_422 = arith.constant 0 : index
    %c9_423 = arith.constant 9 : index
    %294 = vector.load %arg1[%c0_419, %c1_420, %c1_421, %c0_422, %c9_423] : memref<2x2x2x4x82xf32, #tpu.memory_space<vmem>>, vector<1x1x1x4x64xf32>
    %295 = vector.shape_cast %294 : vector<1x1x1x4x64xf32> to vector<4x64xf32>
    %c16_424 = arith.constant 16 : index
    %c384_425 = arith.constant 384 : index
    %296 = vector.load %arg7[%c16_424, %c384_425] : memref<36x512xf32, #tpu.memory_space<vmem>>, vector<4x64xf32>
    tpu.vector_store %arg7[%c16_424, %c384_425], %295 {strides = array<i32>} : memref<36x512xf32, #tpu.memory_space<vmem>>, vector<4x64xf32>,
    %c0_426 = arith.constant 0 : index
    %c1_427 = arith.constant 1 : index
    %c0_428 = arith.constant 0 : index
    %c0_429 = arith.constant 0 : index
    %c10_430 = arith.constant 10 : index
    %297 = vector.load %arg1[%c0_426, %c1_427, %c0_428, %c0_429, %c10_430] : memref<2x2x2x4x82xf32, #tpu.memory_space<vmem>>, vector<1x1x1x4x64xf32>
    %298 = vector.shape_cast %297 : vector<1x1x1x4x64xf32> to vector<4x64xf32>
    %c0_i32_431 = arith.constant 0 : i32
    %299 = arith.sitofp %c0_i32_431 : i32 to f32
    %300 = vector.shape_cast %24 : vector<1x64xi1> to vector<1x64xi1>
    %301 = vector.broadcast %300 : vector<1x64xi1> to vector<4x64xi1>
    %302 = vector.broadcast %299 : f32 to vector<4x64xf32>
    %303 = arith.select %301, %298, %302 : vector<4x64xi1>, vector<4x64xf32>
    %c20_432 = arith.constant 20 : index
    %c384_433 = arith.constant 384 : index
    %304 = vector.load %arg7[%c20_432, %c384_433] : memref<36x512xf32, #tpu.memory_space<vmem>>, vector<4x64xf32>
    tpu.vector_store %arg7[%c20_432, %c384_433], %303 {strides = array<i32>} : memref<36x512xf32, #tpu.memory_space<vmem>>, vector<4x64xf32>,
    %c0_434 = arith.constant 0 : index
    %c0_435 = arith.constant 0 : index
    %c0_436 = arith.constant 0 : index
    %c0_437 = arith.constant 0 : index
    %c17_438 = arith.constant 17 : index
    %305 = vector.load %arg1[%c0_434, %c0_435, %c0_436, %c0_437, %c17_438] : memref<2x2x2x4x82xf32, #tpu.memory_space<vmem>>, vector<1x1x1x4x64xf32>
    %306 = vector.shape_cast %305 : vector<1x1x1x4x64xf32> to vector<4x64xf32>
    %c24_439 = arith.constant 24 : index
    %c384_440 = arith.constant 384 : index
    %307 = vector.load %arg7[%c24_439, %c384_440] : memref<36x512xf32, #tpu.memory_space<vmem>>, vector<4x64xf32>
    tpu.vector_store %arg7[%c24_439, %c384_440], %306 {strides = array<i32>} : memref<36x512xf32, #tpu.memory_space<vmem>>, vector<4x64xf32>,
    %c0_441 = arith.constant 0 : index
    %c0_442 = arith.constant 0 : index
    %c1_443 = arith.constant 1 : index
    %c0_444 = arith.constant 0 : index
    %c17_445 = arith.constant 17 : index
    %308 = vector.load %arg1[%c0_441, %c0_442, %c1_443, %c0_444, %c17_445] : memref<2x2x2x4x82xf32, #tpu.memory_space<vmem>>, vector<1x1x1x4x64xf32>
    %309 = vector.shape_cast %308 : vector<1x1x1x4x64xf32> to vector<4x64xf32>
    %c28_446 = arith.constant 28 : index
    %c384_447 = arith.constant 384 : index
    %310 = vector.load %arg7[%c28_446, %c384_447] : memref<36x512xf32, #tpu.memory_space<vmem>>, vector<4x64xf32>
    tpu.vector_store %arg7[%c28_446, %c384_447], %309 {strides = array<i32>} : memref<36x512xf32, #tpu.memory_space<vmem>>, vector<4x64xf32>,
    %c0_448 = arith.constant 0 : index
    %c0_449 = arith.constant 0 : index
    %c0_450 = arith.constant 0 : index
    %c0_451 = arith.constant 0 : index
    %c18 = arith.constant 18 : index
    %311 = vector.load %arg1[%c0_448, %c0_449, %c0_450, %c0_451, %c18] : memref<2x2x2x4x82xf32, #tpu.memory_space<vmem>>, vector<1x1x1x4x64xf32>
    %312 = vector.shape_cast %311 : vector<1x1x1x4x64xf32> to vector<4x64xf32>
    %c0_i32_452 = arith.constant 0 : i32
    %313 = arith.sitofp %c0_i32_452 : i32 to f32
    %314 = vector.shape_cast %24 : vector<1x64xi1> to vector<1x64xi1>
    %315 = vector.broadcast %314 : vector<1x64xi1> to vector<4x64xi1>
    %316 = vector.broadcast %313 : f32 to vector<4x64xf32>
    %317 = arith.select %315, %312, %316 : vector<4x64xi1>, vector<4x64xf32>
    %c32_453 = arith.constant 32 : index
    %c384_454 = arith.constant 384 : index
    %318 = vector.load %arg7[%c32_453, %c384_454] : memref<36x512xf32, #tpu.memory_space<vmem>>, vector<4x64xf32>
    tpu.vector_store %arg7[%c32_453, %c384_454], %317 {strides = array<i32>} : memref<36x512xf32, #tpu.memory_space<vmem>>, vector<4x64xf32>,
    %c1_455 = arith.constant 1 : index
    %c0_456 = arith.constant 0 : index
    %c0_457 = arith.constant 0 : index
    %c0_458 = arith.constant 0 : index
    %c9_459 = arith.constant 9 : index
    %319 = vector.load %arg1[%c1_455, %c0_456, %c0_457, %c0_458, %c9_459] : memref<2x2x2x4x82xf32, #tpu.memory_space<vmem>>, vector<1x1x1x4x64xf32>
    %320 = vector.shape_cast %319 : vector<1x1x1x4x64xf32> to vector<4x64xf32>
    %c0_460 = arith.constant 0 : index
    %c448 = arith.constant 448 : index
    %321 = vector.load %arg7[%c0_460, %c448] : memref<36x512xf32, #tpu.memory_space<vmem>>, vector<4x64xf32>
    tpu.vector_store %arg7[%c0_460, %c448], %320 {strides = array<i32>} : memref<36x512xf32, #tpu.memory_space<vmem>>, vector<4x64xf32>,
    %c1_461 = arith.constant 1 : index
    %c0_462 = arith.constant 0 : index
    %c1_463 = arith.constant 1 : index
    %c0_464 = arith.constant 0 : index
    %c9_465 = arith.constant 9 : index
    %322 = vector.load %arg1[%c1_461, %c0_462, %c1_463, %c0_464, %c9_465] : memref<2x2x2x4x82xf32, #tpu.memory_space<vmem>>, vector<1x1x1x4x64xf32>
    %323 = vector.shape_cast %322 : vector<1x1x1x4x64xf32> to vector<4x64xf32>
    %c4_466 = arith.constant 4 : index
    %c448_467 = arith.constant 448 : index
    %324 = vector.load %arg7[%c4_466, %c448_467] : memref<36x512xf32, #tpu.memory_space<vmem>>, vector<4x64xf32>
    tpu.vector_store %arg7[%c4_466, %c448_467], %323 {strides = array<i32>} : memref<36x512xf32, #tpu.memory_space<vmem>>, vector<4x64xf32>,
    %c1_468 = arith.constant 1 : index
    %c0_469 = arith.constant 0 : index
    %c0_470 = arith.constant 0 : index
    %c0_471 = arith.constant 0 : index
    %c10_472 = arith.constant 10 : index
    %325 = vector.load %arg1[%c1_468, %c0_469, %c0_470, %c0_471, %c10_472] : memref<2x2x2x4x82xf32, #tpu.memory_space<vmem>>, vector<1x1x1x4x64xf32>
    %326 = vector.shape_cast %325 : vector<1x1x1x4x64xf32> to vector<4x64xf32>
    %c0_i32_473 = arith.constant 0 : i32
    %327 = arith.sitofp %c0_i32_473 : i32 to f32
    %328 = vector.shape_cast %24 : vector<1x64xi1> to vector<1x64xi1>
    %329 = vector.broadcast %328 : vector<1x64xi1> to vector<4x64xi1>
    %330 = vector.broadcast %327 : f32 to vector<4x64xf32>
    %331 = arith.select %329, %326, %330 : vector<4x64xi1>, vector<4x64xf32>
    %c8_474 = arith.constant 8 : index
    %c448_475 = arith.constant 448 : index
    %332 = vector.load %arg7[%c8_474, %c448_475] : memref<36x512xf32, #tpu.memory_space<vmem>>, vector<4x64xf32>
    tpu.vector_store %arg7[%c8_474, %c448_475], %331 {strides = array<i32>} : memref<36x512xf32, #tpu.memory_space<vmem>>, vector<4x64xf32>,
    %c1_476 = arith.constant 1 : index
    %c1_477 = arith.constant 1 : index
    %c0_478 = arith.constant 0 : index
    %c0_479 = arith.constant 0 : index
    %c9_480 = arith.constant 9 : index
    %333 = vector.load %arg1[%c1_476, %c1_477, %c0_478, %c0_479, %c9_480] : memref<2x2x2x4x82xf32, #tpu.memory_space<vmem>>, vector<1x1x1x4x64xf32>
    %334 = vector.shape_cast %333 : vector<1x1x1x4x64xf32> to vector<4x64xf32>
    %c12_481 = arith.constant 12 : index
    %c448_482 = arith.constant 448 : index
    %335 = vector.load %arg7[%c12_481, %c448_482] : memref<36x512xf32, #tpu.memory_space<vmem>>, vector<4x64xf32>
    tpu.vector_store %arg7[%c12_481, %c448_482], %334 {strides = array<i32>} : memref<36x512xf32, #tpu.memory_space<vmem>>, vector<4x64xf32>,
    %c1_483 = arith.constant 1 : index
    %c1_484 = arith.constant 1 : index
    %c1_485 = arith.constant 1 : index
    %c0_486 = arith.constant 0 : index
    %c9_487 = arith.constant 9 : index
    %336 = vector.load %arg1[%c1_483, %c1_484, %c1_485, %c0_486, %c9_487] : memref<2x2x2x4x82xf32, #tpu.memory_space<vmem>>, vector<1x1x1x4x64xf32>
    %337 = vector.shape_cast %336 : vector<1x1x1x4x64xf32> to vector<4x64xf32>
    %c16_488 = arith.constant 16 : index
    %c448_489 = arith.constant 448 : index
    %338 = vector.load %arg7[%c16_488, %c448_489] : memref<36x512xf32, #tpu.memory_space<vmem>>, vector<4x64xf32>
    tpu.vector_store %arg7[%c16_488, %c448_489], %337 {strides = array<i32>} : memref<36x512xf32, #tpu.memory_space<vmem>>, vector<4x64xf32>,
    %c1_490 = arith.constant 1 : index
    %c1_491 = arith.constant 1 : index
    %c0_492 = arith.constant 0 : index
    %c0_493 = arith.constant 0 : index
    %c10_494 = arith.constant 10 : index
    %339 = vector.load %arg1[%c1_490, %c1_491, %c0_492, %c0_493, %c10_494] : memref<2x2x2x4x82xf32, #tpu.memory_space<vmem>>, vector<1x1x1x4x64xf32>
    %340 = vector.shape_cast %339 : vector<1x1x1x4x64xf32> to vector<4x64xf32>
    %c0_i32_495 = arith.constant 0 : i32
    %341 = arith.sitofp %c0_i32_495 : i32 to f32
    %342 = vector.shape_cast %24 : vector<1x64xi1> to vector<1x64xi1>
    %343 = vector.broadcast %342 : vector<1x64xi1> to vector<4x64xi1>
    %344 = vector.broadcast %341 : f32 to vector<4x64xf32>
    %345 = arith.select %343, %340, %344 : vector<4x64xi1>, vector<4x64xf32>
    %c20_496 = arith.constant 20 : index
    %c448_497 = arith.constant 448 : index
    %346 = vector.load %arg7[%c20_496, %c448_497] : memref<36x512xf32, #tpu.memory_space<vmem>>, vector<4x64xf32>
    tpu.vector_store %arg7[%c20_496, %c448_497], %345 {strides = array<i32>} : memref<36x512xf32, #tpu.memory_space<vmem>>, vector<4x64xf32>,
    %c1_498 = arith.constant 1 : index
    %c0_499 = arith.constant 0 : index
    %c0_500 = arith.constant 0 : index
    %c0_501 = arith.constant 0 : index
    %c17_502 = arith.constant 17 : index
    %347 = vector.load %arg1[%c1_498, %c0_499, %c0_500, %c0_501, %c17_502] : memref<2x2x2x4x82xf32, #tpu.memory_space<vmem>>, vector<1x1x1x4x64xf32>
    %348 = vector.shape_cast %347 : vector<1x1x1x4x64xf32> to vector<4x64xf32>
    %c24_503 = arith.constant 24 : index
    %c448_504 = arith.constant 448 : index
    %349 = vector.load %arg7[%c24_503, %c448_504] : memref<36x512xf32, #tpu.memory_space<vmem>>, vector<4x64xf32>
    tpu.vector_store %arg7[%c24_503, %c448_504], %348 {strides = array<i32>} : memref<36x512xf32, #tpu.memory_space<vmem>>, vector<4x64xf32>,
    %c1_505 = arith.constant 1 : index
    %c0_506 = arith.constant 0 : index
    %c1_507 = arith.constant 1 : index
    %c0_508 = arith.constant 0 : index
    %c17_509 = arith.constant 17 : index
    %350 = vector.load %arg1[%c1_505, %c0_506, %c1_507, %c0_508, %c17_509] : memref<2x2x2x4x82xf32, #tpu.memory_space<vmem>>, vector<1x1x1x4x64xf32>
    %351 = vector.shape_cast %350 : vector<1x1x1x4x64xf32> to vector<4x64xf32>
    %c28_510 = arith.constant 28 : index
    %c448_511 = arith.constant 448 : index
    %352 = vector.load %arg7[%c28_510, %c448_511] : memref<36x512xf32, #tpu.memory_space<vmem>>, vector<4x64xf32>
    tpu.vector_store %arg7[%c28_510, %c448_511], %351 {strides = array<i32>} : memref<36x512xf32, #tpu.memory_space<vmem>>, vector<4x64xf32>,
    %c1_512 = arith.constant 1 : index
    %c0_513 = arith.constant 0 : index
    %c0_514 = arith.constant 0 : index
    %c0_515 = arith.constant 0 : index
    %c18_516 = arith.constant 18 : index
    %353 = vector.load %arg1[%c1_512, %c0_513, %c0_514, %c0_515, %c18_516] : memref<2x2x2x4x82xf32, #tpu.memory_space<vmem>>, vector<1x1x1x4x64xf32>
    %354 = vector.shape_cast %353 : vector<1x1x1x4x64xf32> to vector<4x64xf32>
    %c0_i32_517 = arith.constant 0 : i32
    %355 = arith.sitofp %c0_i32_517 : i32 to f32
    %356 = vector.shape_cast %24 : vector<1x64xi1> to vector<1x64xi1>
    %357 = vector.broadcast %356 : vector<1x64xi1> to vector<4x64xi1>
    %358 = vector.broadcast %355 : f32 to vector<4x64xf32>
    %359 = arith.select %357, %354, %358 : vector<4x64xi1>, vector<4x64xf32>
    %c32_518 = arith.constant 32 : index
    %c448_519 = arith.constant 448 : index
    %360 = vector.load %arg7[%c32_518, %c448_519] : memref<36x512xf32, #tpu.memory_space<vmem>>, vector<4x64xf32>
    tpu.vector_store %arg7[%c32_518, %c448_519], %359 {strides = array<i32>} : memref<36x512xf32, #tpu.memory_space<vmem>>, vector<4x64xf32>,
    %c0_520 = arith.constant 0 : index
    %c0_521 = arith.constant 0 : index
    %361 = vector.load %arg2[%c0_520, %c0_521] : memref<8x36xf32, #tpu.memory_space<vmem>>, vector<8x36xf32>
    %c0_522 = arith.constant 0 : index
    %c0_523 = arith.constant 0 : index
    %362 = vector.load %arg7[%c0_522, %c0_523] : memref<36x512xf32, #tpu.memory_space<vmem>>, vector<36x512xf32>
    %cst_524 = arith.constant dense<0.000000e+00> : vector<8x512xf32>
    %363 = tpu.matmul %361, %362, %cst_524 {dimension_numbers = #tpu.dot_dimension_numbers<[1], [0], [0], [1], [0, 0, 1, 1], [], []>} : vector<8x36xf32>, vector<36x512xf32>, vector<8x512xf32> -> vector<8x512xf32>
    %c0_525 = arith.constant 0 : index
    %c0_526 = arith.constant 0 : index
    %364 = vector.load %arg3[%c0_525, %c0_526] : memref<8x1xf32, #tpu.memory_space<vmem>>, vector<8x1xf32>
    %365 = vector.broadcast %364 : vector<8x1xf32> to vector<8x512xf32>
    %366 = arith.addf %363, %365 : vector<8x512xf32>
    %cst_527 = arith.constant 0.000000e+00 : f32
    %367 = vector.broadcast %cst_527 : f32 to vector<8x512xf32>
    %368 = arith.cmpf ogt, %366, %367 : vector<8x512xf32>
    %cst_528 = arith.constant 2.000000e-01 : f32
    %369 = vector.broadcast %cst_528 : f32 to vector<8x512xf32>
    %370 = arith.mulf %369, %366 : vector<8x512xf32>
    %371 = arith.select %368, %366, %370 : vector<8x512xi1>, vector<8x512xf32>
    %372 = vector.extract_strided_slice %371 {offsets = [0, 0], sizes = [8, 64], strides = [1, 1]} : vector<8x512xf32> to vector<8x64xf32>
    %c0_529 = arith.constant 0 : index
    %c0_530 = arith.constant 0 : index
    %c0_531 = arith.constant 0 : index
    %c0_532 = arith.constant 0 : index
    %c9_533 = arith.constant 9 : index
    %373 = vector.load %arg8[%c0_529, %c0_530, %c0_531, %c0_532, %c9_533] : memref<2x2x2x8x82xf32, #tpu.memory_space<vmem>>, vector<1x1x1x8x64xf32>
    %374 = vector.shape_cast %373 : vector<1x1x1x8x64xf32> to vector<8x64xf32>
    %375 = vector.shape_cast %372 : vector<8x64xf32> to vector<1x1x1x8x64xf32>
    tpu.vector_store %arg8[%c0_529, %c0_530, %c0_531, %c0_532, %c9_533], %375 {strides = array<i32>} : memref<2x2x2x8x82xf32, #tpu.memory_space<vmem>>, vector<1x1x1x8x64xf32>,
    %376 = vector.extract_strided_slice %371 {offsets = [0, 64], sizes = [8, 64], strides = [1, 1]} : vector<8x512xf32> to vector<8x64xf32>
    %c0_534 = arith.constant 0 : index
    %c0_535 = arith.constant 0 : index
    %c1_536 = arith.constant 1 : index
    %c0_537 = arith.constant 0 : index
    %c9_538 = arith.constant 9 : index
    %377 = vector.load %arg8[%c0_534, %c0_535, %c1_536, %c0_537, %c9_538] : memref<2x2x2x8x82xf32, #tpu.memory_space<vmem>>, vector<1x1x1x8x64xf32>
    %378 = vector.shape_cast %377 : vector<1x1x1x8x64xf32> to vector<8x64xf32>
    %379 = vector.shape_cast %376 : vector<8x64xf32> to vector<1x1x1x8x64xf32>
    tpu.vector_store %arg8[%c0_534, %c0_535, %c1_536, %c0_537, %c9_538], %379 {strides = array<i32>} : memref<2x2x2x8x82xf32, #tpu.memory_space<vmem>>, vector<1x1x1x8x64xf32>,
    %380 = vector.extract_strided_slice %371 {offsets = [0, 128], sizes = [8, 64], strides = [1, 1]} : vector<8x512xf32> to vector<8x64xf32>
    %c0_539 = arith.constant 0 : index
    %c1_540 = arith.constant 1 : index
    %c0_541 = arith.constant 0 : index
    %c0_542 = arith.constant 0 : index
    %c9_543 = arith.constant 9 : index
    %381 = vector.load %arg8[%c0_539, %c1_540, %c0_541, %c0_542, %c9_543] : memref<2x2x2x8x82xf32, #tpu.memory_space<vmem>>, vector<1x1x1x8x64xf32>
    %382 = vector.shape_cast %381 : vector<1x1x1x8x64xf32> to vector<8x64xf32>
    %383 = vector.shape_cast %380 : vector<8x64xf32> to vector<1x1x1x8x64xf32>
    tpu.vector_store %arg8[%c0_539, %c1_540, %c0_541, %c0_542, %c9_543], %383 {strides = array<i32>} : memref<2x2x2x8x82xf32, #tpu.memory_space<vmem>>, vector<1x1x1x8x64xf32>,
    %384 = vector.extract_strided_slice %371 {offsets = [0, 192], sizes = [8, 64], strides = [1, 1]} : vector<8x512xf32> to vector<8x64xf32>
    %c0_544 = arith.constant 0 : index
    %c1_545 = arith.constant 1 : index
    %c1_546 = arith.constant 1 : index
    %c0_547 = arith.constant 0 : index
    %c9_548 = arith.constant 9 : index
    %385 = vector.load %arg8[%c0_544, %c1_545, %c1_546, %c0_547, %c9_548] : memref<2x2x2x8x82xf32, #tpu.memory_space<vmem>>, vector<1x1x1x8x64xf32>
    %386 = vector.shape_cast %385 : vector<1x1x1x8x64xf32> to vector<8x64xf32>
    %387 = vector.shape_cast %384 : vector<8x64xf32> to vector<1x1x1x8x64xf32>
    tpu.vector_store %arg8[%c0_544, %c1_545, %c1_546, %c0_547, %c9_548], %387 {strides = array<i32>} : memref<2x2x2x8x82xf32, #tpu.memory_space<vmem>>, vector<1x1x1x8x64xf32>,
    %388 = vector.extract_strided_slice %371 {offsets = [0, 256], sizes = [8, 64], strides = [1, 1]} : vector<8x512xf32> to vector<8x64xf32>
    %c1_549 = arith.constant 1 : index
    %c0_550 = arith.constant 0 : index
    %c0_551 = arith.constant 0 : index
    %c0_552 = arith.constant 0 : index
    %c9_553 = arith.constant 9 : index
    %389 = vector.load %arg8[%c1_549, %c0_550, %c0_551, %c0_552, %c9_553] : memref<2x2x2x8x82xf32, #tpu.memory_space<vmem>>, vector<1x1x1x8x64xf32>
    %390 = vector.shape_cast %389 : vector<1x1x1x8x64xf32> to vector<8x64xf32>
    %391 = vector.shape_cast %388 : vector<8x64xf32> to vector<1x1x1x8x64xf32>
    tpu.vector_store %arg8[%c1_549, %c0_550, %c0_551, %c0_552, %c9_553], %391 {strides = array<i32>} : memref<2x2x2x8x82xf32, #tpu.memory_space<vmem>>, vector<1x1x1x8x64xf32>,
    %392 = vector.extract_strided_slice %371 {offsets = [0, 320], sizes = [8, 64], strides = [1, 1]} : vector<8x512xf32> to vector<8x64xf32>
    %c1_554 = arith.constant 1 : index
    %c0_555 = arith.constant 0 : index
    %c1_556 = arith.constant 1 : index
    %c0_557 = arith.constant 0 : index
    %c9_558 = arith.constant 9 : index
    %393 = vector.load %arg8[%c1_554, %c0_555, %c1_556, %c0_557, %c9_558] : memref<2x2x2x8x82xf32, #tpu.memory_space<vmem>>, vector<1x1x1x8x64xf32>
    %394 = vector.shape_cast %393 : vector<1x1x1x8x64xf32> to vector<8x64xf32>
    %395 = vector.shape_cast %392 : vector<8x64xf32> to vector<1x1x1x8x64xf32>
    tpu.vector_store %arg8[%c1_554, %c0_555, %c1_556, %c0_557, %c9_558], %395 {strides = array<i32>} : memref<2x2x2x8x82xf32, #tpu.memory_space<vmem>>, vector<1x1x1x8x64xf32>,
    %396 = vector.extract_strided_slice %371 {offsets = [0, 384], sizes = [8, 64], strides = [1, 1]} : vector<8x512xf32> to vector<8x64xf32>
    %c1_559 = arith.constant 1 : index
    %c1_560 = arith.constant 1 : index
    %c0_561 = arith.constant 0 : index
    %c0_562 = arith.constant 0 : index
    %c9_563 = arith.constant 9 : index
    %397 = vector.load %arg8[%c1_559, %c1_560, %c0_561, %c0_562, %c9_563] : memref<2x2x2x8x82xf32, #tpu.memory_space<vmem>>, vector<1x1x1x8x64xf32>
    %398 = vector.shape_cast %397 : vector<1x1x1x8x64xf32> to vector<8x64xf32>
    %399 = vector.shape_cast %396 : vector<8x64xf32> to vector<1x1x1x8x64xf32>
    tpu.vector_store %arg8[%c1_559, %c1_560, %c0_561, %c0_562, %c9_563], %399 {strides = array<i32>} : memref<2x2x2x8x82xf32, #tpu.memory_space<vmem>>, vector<1x1x1x8x64xf32>,
    %400 = vector.extract_strided_slice %371 {offsets = [0, 448], sizes = [8, 64], strides = [1, 1]} : vector<8x512xf32> to vector<8x64xf32>
    %c1_564 = arith.constant 1 : index
    %c1_565 = arith.constant 1 : index
    %c1_566 = arith.constant 1 : index
    %c0_567 = arith.constant 0 : index
    %c9_568 = arith.constant 9 : index
    %401 = vector.load %arg8[%c1_564, %c1_565, %c1_566, %c0_567, %c9_568] : memref<2x2x2x8x82xf32, #tpu.memory_space<vmem>>, vector<1x1x1x8x64xf32>
    %402 = vector.shape_cast %401 : vector<1x1x1x8x64xf32> to vector<8x64xf32>
    %403 = vector.shape_cast %400 : vector<8x64xf32> to vector<1x1x1x8x64xf32>
    tpu.vector_store %arg8[%c1_564, %c1_565, %c1_566, %c0_567, %c9_568], %403 {strides = array<i32>} : memref<2x2x2x8x82xf32, #tpu.memory_space<vmem>>, vector<1x1x1x8x64xf32>,
    %c1_569 = arith.constant 1 : index
    %c1_570 = arith.constant 1 : index
    %c0_571 = arith.constant 0 : index
    %c0_572 = arith.constant 0 : index
    %c0_573 = arith.constant 0 : index
    %404 = vector.load %arg8[%c1_569, %c1_570, %c0_571, %c0_572, %c0_573] : memref<2x2x2x8x82xf32, #tpu.memory_space<vmem>>, vector<1x1x1x8x64xf32>
    %405 = vector.shape_cast %404 : vector<1x1x1x8x64xf32> to vector<8x64xf32>
    %c0_i32_574 = arith.constant 0 : i32
    %406 = arith.sitofp %c0_i32_574 : i32 to f32
    %407 = vector.shape_cast %22 : vector<1x64xi1> to vector<1x64xi1>
    %408 = vector.broadcast %407 : vector<1x64xi1> to vector<8x64xi1>
    %409 = vector.broadcast %406 : f32 to vector<8x64xf32>
    %410 = arith.select %408, %405, %409 : vector<8x64xi1>, vector<8x64xf32>
    %c0_575 = arith.constant 0 : index
    %c0_576 = arith.constant 0 : index
    %411 = vector.load %arg9[%c0_575, %c0_576] : memref<128x128xf32, #tpu.memory_space<vmem>>, vector<8x64xf32>
    tpu.vector_store %arg9[%c0_575, %c0_576], %410 {strides = array<i32>} : memref<128x128xf32, #tpu.memory_space<vmem>>, vector<8x64xf32>,
    %c1_577 = arith.constant 1 : index
    %c0_578 = arith.constant 0 : index
    %c0_579 = arith.constant 0 : index
    %c0_580 = arith.constant 0 : index
    %c1_581 = arith.constant 1 : index
    %412 = vector.load %arg8[%c1_577, %c0_578, %c0_579, %c0_580, %c1_581] : memref<2x2x2x8x82xf32, #tpu.memory_space<vmem>>, vector<1x1x1x8x64xf32>
    %413 = vector.shape_cast %412 : vector<1x1x1x8x64xf32> to vector<8x64xf32>
    %c8_582 = arith.constant 8 : index
    %c0_583 = arith.constant 0 : index
    %414 = vector.load %arg9[%c8_582, %c0_583] : memref<128x128xf32, #tpu.memory_space<vmem>>, vector<8x64xf32>
    tpu.vector_store %arg9[%c8_582, %c0_583], %413 {strides = array<i32>} : memref<128x128xf32, #tpu.memory_space<vmem>>, vector<8x64xf32>,
    %c1_584 = arith.constant 1 : index
    %c1_585 = arith.constant 1 : index
    %c0_586 = arith.constant 0 : index
    %c0_587 = arith.constant 0 : index
    %c1_588 = arith.constant 1 : index
    %415 = vector.load %arg8[%c1_584, %c1_585, %c0_586, %c0_587, %c1_588] : memref<2x2x2x8x82xf32, #tpu.memory_space<vmem>>, vector<1x1x1x8x64xf32>
    %416 = vector.shape_cast %415 : vector<1x1x1x8x64xf32> to vector<8x64xf32>
    %c16_589 = arith.constant 16 : index
    %c0_590 = arith.constant 0 : index
    %417 = vector.load %arg9[%c16_589, %c0_590] : memref<128x128xf32, #tpu.memory_space<vmem>>, vector<8x64xf32>
    tpu.vector_store %arg9[%c16_589, %c0_590], %416 {strides = array<i32>} : memref<128x128xf32, #tpu.memory_space<vmem>>, vector<8x64xf32>,
    %c1_591 = arith.constant 1 : index
    %c0_592 = arith.constant 0 : index
    %c0_593 = arith.constant 0 : index
    %c0_594 = arith.constant 0 : index
    %c2_595 = arith.constant 2 : index
    %418 = vector.load %arg8[%c1_591, %c0_592, %c0_593, %c0_594, %c2_595] : memref<2x2x2x8x82xf32, #tpu.memory_space<vmem>>, vector<1x1x1x8x64xf32>
    %419 = vector.shape_cast %418 : vector<1x1x1x8x64xf32> to vector<8x64xf32>
    %c0_i32_596 = arith.constant 0 : i32
    %420 = arith.sitofp %c0_i32_596 : i32 to f32
    %421 = vector.shape_cast %24 : vector<1x64xi1> to vector<1x64xi1>
    %422 = vector.broadcast %421 : vector<1x64xi1> to vector<8x64xi1>
    %423 = vector.broadcast %420 : f32 to vector<8x64xf32>
    %424 = arith.select %422, %419, %423 : vector<8x64xi1>, vector<8x64xf32>
    %c24_597 = arith.constant 24 : index
    %c0_598 = arith.constant 0 : index
    %425 = vector.load %arg9[%c24_597, %c0_598] : memref<128x128xf32, #tpu.memory_space<vmem>>, vector<8x64xf32>
    tpu.vector_store %arg9[%c24_597, %c0_598], %424 {strides = array<i32>} : memref<128x128xf32, #tpu.memory_space<vmem>>, vector<8x64xf32>,
    %c0_599 = arith.constant 0 : index
    %c1_600 = arith.constant 1 : index
    %c0_601 = arith.constant 0 : index
    %c0_602 = arith.constant 0 : index
    %c8_603 = arith.constant 8 : index
    %426 = vector.load %arg8[%c0_599, %c1_600, %c0_601, %c0_602, %c8_603] : memref<2x2x2x8x82xf32, #tpu.memory_space<vmem>>, vector<1x1x1x8x64xf32>
    %427 = vector.shape_cast %426 : vector<1x1x1x8x64xf32> to vector<8x64xf32>
    %c0_i32_604 = arith.constant 0 : i32
    %428 = arith.sitofp %c0_i32_604 : i32 to f32
    %429 = vector.shape_cast %22 : vector<1x64xi1> to vector<1x64xi1>
    %430 = vector.broadcast %429 : vector<1x64xi1> to vector<8x64xi1>
    %431 = vector.broadcast %428 : f32 to vector<8x64xf32>
    %432 = arith.select %430, %427, %431 : vector<8x64xi1>, vector<8x64xf32>
    %c32_605 = arith.constant 32 : index
    %c0_606 = arith.constant 0 : index
    %433 = vector.load %arg9[%c32_605, %c0_606] : memref<128x128xf32, #tpu.memory_space<vmem>>, vector<8x64xf32>
    tpu.vector_store %arg9[%c32_605, %c0_606], %432 {strides = array<i32>} : memref<128x128xf32, #tpu.memory_space<vmem>>, vector<8x64xf32>,
    %c0_607 = arith.constant 0 : index
    %c0_608 = arith.constant 0 : index
    %c0_609 = arith.constant 0 : index
    %c0_610 = arith.constant 0 : index
    %c9_611 = arith.constant 9 : index
    %434 = vector.load %arg8[%c0_607, %c0_608, %c0_609, %c0_610, %c9_611] : memref<2x2x2x8x82xf32, #tpu.memory_space<vmem>>, vector<1x1x1x8x64xf32>
    %435 = vector.shape_cast %434 : vector<1x1x1x8x64xf32> to vector<8x64xf32>
    %c40 = arith.constant 40 : index
    %c0_612 = arith.constant 0 : index
    %436 = vector.load %arg9[%c40, %c0_612] : memref<128x128xf32, #tpu.memory_space<vmem>>, vector<8x64xf32>
    tpu.vector_store %arg9[%c40, %c0_612], %435 {strides = array<i32>} : memref<128x128xf32, #tpu.memory_space<vmem>>, vector<8x64xf32>,
    %c0_613 = arith.constant 0 : index
    %c1_614 = arith.constant 1 : index
    %c0_615 = arith.constant 0 : index
    %c0_616 = arith.constant 0 : index
    %c9_617 = arith.constant 9 : index
    %437 = vector.load %arg8[%c0_613, %c1_614, %c0_615, %c0_616, %c9_617] : memref<2x2x2x8x82xf32, #tpu.memory_space<vmem>>, vector<1x1x1x8x64xf32>
    %438 = vector.shape_cast %437 : vector<1x1x1x8x64xf32> to vector<8x64xf32>
    %c48 = arith.constant 48 : index
    %c0_618 = arith.constant 0 : index
    %439 = vector.load %arg9[%c48, %c0_618] : memref<128x128xf32, #tpu.memory_space<vmem>>, vector<8x64xf32>
    tpu.vector_store %arg9[%c48, %c0_618], %438 {strides = array<i32>} : memref<128x128xf32, #tpu.memory_space<vmem>>, vector<8x64xf32>,
    %c0_619 = arith.constant 0 : index
    %c0_620 = arith.constant 0 : index
    %c0_621 = arith.constant 0 : index
    %c0_622 = arith.constant 0 : index
    %c10_623 = arith.constant 10 : index
    %440 = vector.load %arg8[%c0_619, %c0_620, %c0_621, %c0_622, %c10_623] : memref<2x2x2x8x82xf32, #tpu.memory_space<vmem>>, vector<1x1x1x8x64xf32>
    %441 = vector.shape_cast %440 : vector<1x1x1x8x64xf32> to vector<8x64xf32>
    %c0_i32_624 = arith.constant 0 : i32
    %442 = arith.sitofp %c0_i32_624 : i32 to f32
    %443 = vector.shape_cast %24 : vector<1x64xi1> to vector<1x64xi1>
    %444 = vector.broadcast %443 : vector<1x64xi1> to vector<8x64xi1>
    %445 = vector.broadcast %442 : f32 to vector<8x64xf32>
    %446 = arith.select %444, %441, %445 : vector<8x64xi1>, vector<8x64xf32>
    %c56 = arith.constant 56 : index
    %c0_625 = arith.constant 0 : index
    %447 = vector.load %arg9[%c56, %c0_625] : memref<128x128xf32, #tpu.memory_space<vmem>>, vector<8x64xf32>
    tpu.vector_store %arg9[%c56, %c0_625], %446 {strides = array<i32>} : memref<128x128xf32, #tpu.memory_space<vmem>>, vector<8x64xf32>,
    %c1_626 = arith.constant 1 : index
    %c1_627 = arith.constant 1 : index
    %c0_628 = arith.constant 0 : index
    %c0_629 = arith.constant 0 : index
    %c8_630 = arith.constant 8 : index
    %448 = vector.load %arg8[%c1_626, %c1_627, %c0_628, %c0_629, %c8_630] : memref<2x2x2x8x82xf32, #tpu.memory_space<vmem>>, vector<1x1x1x8x64xf32>
    %449 = vector.shape_cast %448 : vector<1x1x1x8x64xf32> to vector<8x64xf32>
    %c0_i32_631 = arith.constant 0 : i32
    %450 = arith.sitofp %c0_i32_631 : i32 to f32
    %451 = vector.shape_cast %22 : vector<1x64xi1> to vector<1x64xi1>
    %452 = vector.broadcast %451 : vector<1x64xi1> to vector<8x64xi1>
    %453 = vector.broadcast %450 : f32 to vector<8x64xf32>
    %454 = arith.select %452, %449, %453 : vector<8x64xi1>, vector<8x64xf32>
    %c64_632 = arith.constant 64 : index
    %c0_633 = arith.constant 0 : index
    %455 = vector.load %arg9[%c64_632, %c0_633] : memref<128x128xf32, #tpu.memory_space<vmem>>, vector<8x64xf32>
    tpu.vector_store %arg9[%c64_632, %c0_633], %454 {strides = array<i32>} : memref<128x128xf32, #tpu.memory_space<vmem>>, vector<8x64xf32>,
    %c1_634 = arith.constant 1 : index
    %c0_635 = arith.constant 0 : index
    %c0_636 = arith.constant 0 : index
    %c0_637 = arith.constant 0 : index
    %c9_638 = arith.constant 9 : index
    %456 = vector.load %arg8[%c1_634, %c0_635, %c0_636, %c0_637, %c9_638] : memref<2x2x2x8x82xf32, #tpu.memory_space<vmem>>, vector<1x1x1x8x64xf32>
    %457 = vector.shape_cast %456 : vector<1x1x1x8x64xf32> to vector<8x64xf32>
    %c72 = arith.constant 72 : index
    %c0_639 = arith.constant 0 : index
    %458 = vector.load %arg9[%c72, %c0_639] : memref<128x128xf32, #tpu.memory_space<vmem>>, vector<8x64xf32>
    tpu.vector_store %arg9[%c72, %c0_639], %457 {strides = array<i32>} : memref<128x128xf32, #tpu.memory_space<vmem>>, vector<8x64xf32>,
    %c1_640 = arith.constant 1 : index
    %c1_641 = arith.constant 1 : index
    %c0_642 = arith.constant 0 : index
    %c0_643 = arith.constant 0 : index
    %c9_644 = arith.constant 9 : index
    %459 = vector.load %arg8[%c1_640, %c1_641, %c0_642, %c0_643, %c9_644] : memref<2x2x2x8x82xf32, #tpu.memory_space<vmem>>, vector<1x1x1x8x64xf32>
    %460 = vector.shape_cast %459 : vector<1x1x1x8x64xf32> to vector<8x64xf32>
    %c80 = arith.constant 80 : index
    %c0_645 = arith.constant 0 : index
    %461 = vector.load %arg9[%c80, %c0_645] : memref<128x128xf32, #tpu.memory_space<vmem>>, vector<8x64xf32>
    tpu.vector_store %arg9[%c80, %c0_645], %460 {strides = array<i32>} : memref<128x128xf32, #tpu.memory_space<vmem>>, vector<8x64xf32>,
    %c1_646 = arith.constant 1 : index
    %c0_647 = arith.constant 0 : index
    %c0_648 = arith.constant 0 : index
    %c0_649 = arith.constant 0 : index
    %c10_650 = arith.constant 10 : index
    %462 = vector.load %arg8[%c1_646, %c0_647, %c0_648, %c0_649, %c10_650] : memref<2x2x2x8x82xf32, #tpu.memory_space<vmem>>, vector<1x1x1x8x64xf32>
    %463 = vector.shape_cast %462 : vector<1x1x1x8x64xf32> to vector<8x64xf32>
    %c0_i32_651 = arith.constant 0 : i32
    %464 = arith.sitofp %c0_i32_651 : i32 to f32
    %465 = vector.shape_cast %24 : vector<1x64xi1> to vector<1x64xi1>
    %466 = vector.broadcast %465 : vector<1x64xi1> to vector<8x64xi1>
    %467 = vector.broadcast %464 : f32 to vector<8x64xf32>
    %468 = arith.select %466, %463, %467 : vector<8x64xi1>, vector<8x64xf32>
    %c88 = arith.constant 88 : index
    %c0_652 = arith.constant 0 : index
    %469 = vector.load %arg9[%c88, %c0_652] : memref<128x128xf32, #tpu.memory_space<vmem>>, vector<8x64xf32>
    tpu.vector_store %arg9[%c88, %c0_652], %468 {strides = array<i32>} : memref<128x128xf32, #tpu.memory_space<vmem>>, vector<8x64xf32>,
    %c0_653 = arith.constant 0 : index
    %c1_654 = arith.constant 1 : index
    %c0_655 = arith.constant 0 : index
    %c0_656 = arith.constant 0 : index
    %c16_657 = arith.constant 16 : index
    %470 = vector.load %arg8[%c0_653, %c1_654, %c0_655, %c0_656, %c16_657] : memref<2x2x2x8x82xf32, #tpu.memory_space<vmem>>, vector<1x1x1x8x64xf32>
    %471 = vector.shape_cast %470 : vector<1x1x1x8x64xf32> to vector<8x64xf32>
    %c0_i32_658 = arith.constant 0 : i32
    %472 = arith.sitofp %c0_i32_658 : i32 to f32
    %473 = vector.shape_cast %22 : vector<1x64xi1> to vector<1x64xi1>
    %474 = vector.broadcast %473 : vector<1x64xi1> to vector<8x64xi1>
    %475 = vector.broadcast %472 : f32 to vector<8x64xf32>
    %476 = arith.select %474, %471, %475 : vector<8x64xi1>, vector<8x64xf32>
    %c96 = arith.constant 96 : index
    %c0_659 = arith.constant 0 : index
    %477 = vector.load %arg9[%c96, %c0_659] : memref<128x128xf32, #tpu.memory_space<vmem>>, vector<8x64xf32>
    tpu.vector_store %arg9[%c96, %c0_659], %476 {strides = array<i32>} : memref<128x128xf32, #tpu.memory_space<vmem>>, vector<8x64xf32>,
    %c0_660 = arith.constant 0 : index
    %c0_661 = arith.constant 0 : index
    %c0_662 = arith.constant 0 : index
    %c0_663 = arith.constant 0 : index
    %c17_664 = arith.constant 17 : index
    %478 = vector.load %arg8[%c0_660, %c0_661, %c0_662, %c0_663, %c17_664] : memref<2x2x2x8x82xf32, #tpu.memory_space<vmem>>, vector<1x1x1x8x64xf32>
    %479 = vector.shape_cast %478 : vector<1x1x1x8x64xf32> to vector<8x64xf32>
    %c104 = arith.constant 104 : index
    %c0_665 = arith.constant 0 : index
    %480 = vector.load %arg9[%c104, %c0_665] : memref<128x128xf32, #tpu.memory_space<vmem>>, vector<8x64xf32>
    tpu.vector_store %arg9[%c104, %c0_665], %479 {strides = array<i32>} : memref<128x128xf32, #tpu.memory_space<vmem>>, vector<8x64xf32>,
    %c0_666 = arith.constant 0 : index
    %c1_667 = arith.constant 1 : index
    %c0_668 = arith.constant 0 : index
    %c0_669 = arith.constant 0 : index
    %c17_670 = arith.constant 17 : index
    %481 = vector.load %arg8[%c0_666, %c1_667, %c0_668, %c0_669, %c17_670] : memref<2x2x2x8x82xf32, #tpu.memory_space<vmem>>, vector<1x1x1x8x64xf32>
    %482 = vector.shape_cast %481 : vector<1x1x1x8x64xf32> to vector<8x64xf32>
    %c112 = arith.constant 112 : index
    %c0_671 = arith.constant 0 : index
    %483 = vector.load %arg9[%c112, %c0_671] : memref<128x128xf32, #tpu.memory_space<vmem>>, vector<8x64xf32>
    tpu.vector_store %arg9[%c112, %c0_671], %482 {strides = array<i32>} : memref<128x128xf32, #tpu.memory_space<vmem>>, vector<8x64xf32>,
    %c0_672 = arith.constant 0 : index
    %c0_673 = arith.constant 0 : index
    %c0_674 = arith.constant 0 : index
    %c0_675 = arith.constant 0 : index
    %c18_676 = arith.constant 18 : index
    %484 = vector.load %arg8[%c0_672, %c0_673, %c0_674, %c0_675, %c18_676] : memref<2x2x2x8x82xf32, #tpu.memory_space<vmem>>, vector<1x1x1x8x64xf32>
    %485 = vector.shape_cast %484 : vector<1x1x1x8x64xf32> to vector<8x64xf32>
    %c0_i32_677 = arith.constant 0 : i32
    %486 = arith.sitofp %c0_i32_677 : i32 to f32
    %487 = vector.shape_cast %24 : vector<1x64xi1> to vector<1x64xi1>
    %488 = vector.broadcast %487 : vector<1x64xi1> to vector<8x64xi1>
    %489 = vector.broadcast %486 : f32 to vector<8x64xf32>
    %490 = arith.select %488, %485, %489 : vector<8x64xi1>, vector<8x64xf32>
    %c120 = arith.constant 120 : index
    %c0_678 = arith.constant 0 : index
    %491 = vector.load %arg9[%c120, %c0_678] : memref<128x128xf32, #tpu.memory_space<vmem>>, vector<8x64xf32>
    tpu.vector_store %arg9[%c120, %c0_678], %490 {strides = array<i32>} : memref<128x128xf32, #tpu.memory_space<vmem>>, vector<8x64xf32>,
    %c1_679 = arith.constant 1 : index
    %c1_680 = arith.constant 1 : index
    %c1_681 = arith.constant 1 : index
    %c0_682 = arith.constant 0 : index
    %c0_683 = arith.constant 0 : index
    %492 = vector.load %arg8[%c1_679, %c1_680, %c1_681, %c0_682, %c0_683] : memref<2x2x2x8x82xf32, #tpu.memory_space<vmem>>, vector<1x1x1x8x64xf32>
    %493 = vector.shape_cast %492 : vector<1x1x1x8x64xf32> to vector<8x64xf32>
    %c0_i32_684 = arith.constant 0 : i32
    %494 = arith.sitofp %c0_i32_684 : i32 to f32
    %495 = vector.shape_cast %22 : vector<1x64xi1> to vector<1x64xi1>
    %496 = vector.broadcast %495 : vector<1x64xi1> to vector<8x64xi1>
    %497 = vector.broadcast %494 : f32 to vector<8x64xf32>
    %498 = arith.select %496, %493, %497 : vector<8x64xi1>, vector<8x64xf32>
    %c0_685 = arith.constant 0 : index
    %c64_686 = arith.constant 64 : index
    %499 = vector.load %arg9[%c0_685, %c64_686] : memref<128x128xf32, #tpu.memory_space<vmem>>, vector<8x64xf32>
    tpu.vector_store %arg9[%c0_685, %c64_686], %498 {strides = array<i32>} : memref<128x128xf32, #tpu.memory_space<vmem>>, vector<8x64xf32>,
    %c1_687 = arith.constant 1 : index
    %c0_688 = arith.constant 0 : index
    %c1_689 = arith.constant 1 : index
    %c0_690 = arith.constant 0 : index
    %c1_691 = arith.constant 1 : index
    %500 = vector.load %arg8[%c1_687, %c0_688, %c1_689, %c0_690, %c1_691] : memref<2x2x2x8x82xf32, #tpu.memory_space<vmem>>, vector<1x1x1x8x64xf32>
    %501 = vector.shape_cast %500 : vector<1x1x1x8x64xf32> to vector<8x64xf32>
    %c8_692 = arith.constant 8 : index
    %c64_693 = arith.constant 64 : index
    %502 = vector.load %arg9[%c8_692, %c64_693] : memref<128x128xf32, #tpu.memory_space<vmem>>, vector<8x64xf32>
    tpu.vector_store %arg9[%c8_692, %c64_693], %501 {strides = array<i32>} : memref<128x128xf32, #tpu.memory_space<vmem>>, vector<8x64xf32>,
    %c1_694 = arith.constant 1 : index
    %c1_695 = arith.constant 1 : index
    %c1_696 = arith.constant 1 : index
    %c0_697 = arith.constant 0 : index
    %c1_698 = arith.constant 1 : index
    %503 = vector.load %arg8[%c1_694, %c1_695, %c1_696, %c0_697, %c1_698] : memref<2x2x2x8x82xf32, #tpu.memory_space<vmem>>, vector<1x1x1x8x64xf32>
    %504 = vector.shape_cast %503 : vector<1x1x1x8x64xf32> to vector<8x64xf32>
    %c16_699 = arith.constant 16 : index
    %c64_700 = arith.constant 64 : index
    %505 = vector.load %arg9[%c16_699, %c64_700] : memref<128x128xf32, #tpu.memory_space<vmem>>, vector<8x64xf32>
    tpu.vector_store %arg9[%c16_699, %c64_700], %504 {strides = array<i32>} : memref<128x128xf32, #tpu.memory_space<vmem>>, vector<8x64xf32>,
    %c1_701 = arith.constant 1 : index
    %c0_702 = arith.constant 0 : index
    %c1_703 = arith.constant 1 : index
    %c0_704 = arith.constant 0 : index
    %c2_705 = arith.constant 2 : index
    %506 = vector.load %arg8[%c1_701, %c0_702, %c1_703, %c0_704, %c2_705] : memref<2x2x2x8x82xf32, #tpu.memory_space<vmem>>, vector<1x1x1x8x64xf32>
    %507 = vector.shape_cast %506 : vector<1x1x1x8x64xf32> to vector<8x64xf32>
    %c0_i32_706 = arith.constant 0 : i32
    %508 = arith.sitofp %c0_i32_706 : i32 to f32
    %509 = vector.shape_cast %24 : vector<1x64xi1> to vector<1x64xi1>
    %510 = vector.broadcast %509 : vector<1x64xi1> to vector<8x64xi1>
    %511 = vector.broadcast %508 : f32 to vector<8x64xf32>
    %512 = arith.select %510, %507, %511 : vector<8x64xi1>, vector<8x64xf32>
    %c24_707 = arith.constant 24 : index
    %c64_708 = arith.constant 64 : index
    %513 = vector.load %arg9[%c24_707, %c64_708] : memref<128x128xf32, #tpu.memory_space<vmem>>, vector<8x64xf32>
    tpu.vector_store %arg9[%c24_707, %c64_708], %512 {strides = array<i32>} : memref<128x128xf32, #tpu.memory_space<vmem>>, vector<8x64xf32>,
    %c0_709 = arith.constant 0 : index
    %c1_710 = arith.constant 1 : index
    %c1_711 = arith.constant 1 : index
    %c0_712 = arith.constant 0 : index
    %c8_713 = arith.constant 8 : index
    %514 = vector.load %arg8[%c0_709, %c1_710, %c1_711, %c0_712, %c8_713] : memref<2x2x2x8x82xf32, #tpu.memory_space<vmem>>, vector<1x1x1x8x64xf32>
    %515 = vector.shape_cast %514 : vector<1x1x1x8x64xf32> to vector<8x64xf32>
    %c0_i32_714 = arith.constant 0 : i32
    %516 = arith.sitofp %c0_i32_714 : i32 to f32
    %517 = vector.shape_cast %22 : vector<1x64xi1> to vector<1x64xi1>
    %518 = vector.broadcast %517 : vector<1x64xi1> to vector<8x64xi1>
    %519 = vector.broadcast %516 : f32 to vector<8x64xf32>
    %520 = arith.select %518, %515, %519 : vector<8x64xi1>, vector<8x64xf32>
    %c32_715 = arith.constant 32 : index
    %c64_716 = arith.constant 64 : index
    %521 = vector.load %arg9[%c32_715, %c64_716] : memref<128x128xf32, #tpu.memory_space<vmem>>, vector<8x64xf32>
    tpu.vector_store %arg9[%c32_715, %c64_716], %520 {strides = array<i32>} : memref<128x128xf32, #tpu.memory_space<vmem>>, vector<8x64xf32>,
    %c0_717 = arith.constant 0 : index
    %c0_718 = arith.constant 0 : index
    %c1_719 = arith.constant 1 : index
    %c0_720 = arith.constant 0 : index
    %c9_721 = arith.constant 9 : index
    %522 = vector.load %arg8[%c0_717, %c0_718, %c1_719, %c0_720, %c9_721] : memref<2x2x2x8x82xf32, #tpu.memory_space<vmem>>, vector<1x1x1x8x64xf32>
    %523 = vector.shape_cast %522 : vector<1x1x1x8x64xf32> to vector<8x64xf32>
    %c40_722 = arith.constant 40 : index
    %c64_723 = arith.constant 64 : index
    %524 = vector.load %arg9[%c40_722, %c64_723] : memref<128x128xf32, #tpu.memory_space<vmem>>, vector<8x64xf32>
    tpu.vector_store %arg9[%c40_722, %c64_723], %523 {strides = array<i32>} : memref<128x128xf32, #tpu.memory_space<vmem>>, vector<8x64xf32>,
    %c0_724 = arith.constant 0 : index
    %c1_725 = arith.constant 1 : index
    %c1_726 = arith.constant 1 : index
    %c0_727 = arith.constant 0 : index
    %c9_728 = arith.constant 9 : index
    %525 = vector.load %arg8[%c0_724, %c1_725, %c1_726, %c0_727, %c9_728] : memref<2x2x2x8x82xf32, #tpu.memory_space<vmem>>, vector<1x1x1x8x64xf32>
    %526 = vector.shape_cast %525 : vector<1x1x1x8x64xf32> to vector<8x64xf32>
    %c48_729 = arith.constant 48 : index
    %c64_730 = arith.constant 64 : index
    %527 = vector.load %arg9[%c48_729, %c64_730] : memref<128x128xf32, #tpu.memory_space<vmem>>, vector<8x64xf32>
    tpu.vector_store %arg9[%c48_729, %c64_730], %526 {strides = array<i32>} : memref<128x128xf32, #tpu.memory_space<vmem>>, vector<8x64xf32>,
    %c0_731 = arith.constant 0 : index
    %c0_732 = arith.constant 0 : index
    %c1_733 = arith.constant 1 : index
    %c0_734 = arith.constant 0 : index
    %c10_735 = arith.constant 10 : index
    %528 = vector.load %arg8[%c0_731, %c0_732, %c1_733, %c0_734, %c10_735] : memref<2x2x2x8x82xf32, #tpu.memory_space<vmem>>, vector<1x1x1x8x64xf32>
    %529 = vector.shape_cast %528 : vector<1x1x1x8x64xf32> to vector<8x64xf32>
    %c0_i32_736 = arith.constant 0 : i32
    %530 = arith.sitofp %c0_i32_736 : i32 to f32
    %531 = vector.shape_cast %24 : vector<1x64xi1> to vector<1x64xi1>
    %532 = vector.broadcast %531 : vector<1x64xi1> to vector<8x64xi1>
    %533 = vector.broadcast %530 : f32 to vector<8x64xf32>
    %534 = arith.select %532, %529, %533 : vector<8x64xi1>, vector<8x64xf32>
    %c56_737 = arith.constant 56 : index
    %c64_738 = arith.constant 64 : index
    %535 = vector.load %arg9[%c56_737, %c64_738] : memref<128x128xf32, #tpu.memory_space<vmem>>, vector<8x64xf32>
    tpu.vector_store %arg9[%c56_737, %c64_738], %534 {strides = array<i32>} : memref<128x128xf32, #tpu.memory_space<vmem>>, vector<8x64xf32>,
    %c1_739 = arith.constant 1 : index
    %c1_740 = arith.constant 1 : index
    %c1_741 = arith.constant 1 : index
    %c0_742 = arith.constant 0 : index
    %c8_743 = arith.constant 8 : index
    %536 = vector.load %arg8[%c1_739, %c1_740, %c1_741, %c0_742, %c8_743] : memref<2x2x2x8x82xf32, #tpu.memory_space<vmem>>, vector<1x1x1x8x64xf32>
    %537 = vector.shape_cast %536 : vector<1x1x1x8x64xf32> to vector<8x64xf32>
    %c0_i32_744 = arith.constant 0 : i32
    %538 = arith.sitofp %c0_i32_744 : i32 to f32
    %539 = vector.shape_cast %22 : vector<1x64xi1> to vector<1x64xi1>
    %540 = vector.broadcast %539 : vector<1x64xi1> to vector<8x64xi1>
    %541 = vector.broadcast %538 : f32 to vector<8x64xf32>
    %542 = arith.select %540, %537, %541 : vector<8x64xi1>, vector<8x64xf32>
    %c64_745 = arith.constant 64 : index
    %c64_746 = arith.constant 64 : index
    %543 = vector.load %arg9[%c64_745, %c64_746] : memref<128x128xf32, #tpu.memory_space<vmem>>, vector<8x64xf32>
    tpu.vector_store %arg9[%c64_745, %c64_746], %542 {strides = array<i32>} : memref<128x128xf32, #tpu.memory_space<vmem>>, vector<8x64xf32>,
    %c1_747 = arith.constant 1 : index
    %c0_748 = arith.constant 0 : index
    %c1_749 = arith.constant 1 : index
    %c0_750 = arith.constant 0 : index
    %c9_751 = arith.constant 9 : index
    %544 = vector.load %arg8[%c1_747, %c0_748, %c1_749, %c0_750, %c9_751] : memref<2x2x2x8x82xf32, #tpu.memory_space<vmem>>, vector<1x1x1x8x64xf32>
    %545 = vector.shape_cast %544 : vector<1x1x1x8x64xf32> to vector<8x64xf32>
    %c72_752 = arith.constant 72 : index
    %c64_753 = arith.constant 64 : index
    %546 = vector.load %arg9[%c72_752, %c64_753] : memref<128x128xf32, #tpu.memory_space<vmem>>, vector<8x64xf32>
    tpu.vector_store %arg9[%c72_752, %c64_753], %545 {strides = array<i32>} : memref<128x128xf32, #tpu.memory_space<vmem>>, vector<8x64xf32>,
    %c1_754 = arith.constant 1 : index
    %c1_755 = arith.constant 1 : index
    %c1_756 = arith.constant 1 : index
    %c0_757 = arith.constant 0 : index
    %c9_758 = arith.constant 9 : index
    %547 = vector.load %arg8[%c1_754, %c1_755, %c1_756, %c0_757, %c9_758] : memref<2x2x2x8x82xf32, #tpu.memory_space<vmem>>, vector<1x1x1x8x64xf32>
    %548 = vector.shape_cast %547 : vector<1x1x1x8x64xf32> to vector<8x64xf32>
    %c80_759 = arith.constant 80 : index
    %c64_760 = arith.constant 64 : index
    %549 = vector.load %arg9[%c80_759, %c64_760] : memref<128x128xf32, #tpu.memory_space<vmem>>, vector<8x64xf32>
    tpu.vector_store %arg9[%c80_759, %c64_760], %548 {strides = array<i32>} : memref<128x128xf32, #tpu.memory_space<vmem>>, vector<8x64xf32>,
    %c1_761 = arith.constant 1 : index
    %c0_762 = arith.constant 0 : index
    %c1_763 = arith.constant 1 : index
    %c0_764 = arith.constant 0 : index
    %c10_765 = arith.constant 10 : index
    %550 = vector.load %arg8[%c1_761, %c0_762, %c1_763, %c0_764, %c10_765] : memref<2x2x2x8x82xf32, #tpu.memory_space<vmem>>, vector<1x1x1x8x64xf32>
    %551 = vector.shape_cast %550 : vector<1x1x1x8x64xf32> to vector<8x64xf32>
    %c0_i32_766 = arith.constant 0 : i32
    %552 = arith.sitofp %c0_i32_766 : i32 to f32
    %553 = vector.shape_cast %24 : vector<1x64xi1> to vector<1x64xi1>
    %554 = vector.broadcast %553 : vector<1x64xi1> to vector<8x64xi1>
    %555 = vector.broadcast %552 : f32 to vector<8x64xf32>
    %556 = arith.select %554, %551, %555 : vector<8x64xi1>, vector<8x64xf32>
    %c88_767 = arith.constant 88 : index
    %c64_768 = arith.constant 64 : index
    %557 = vector.load %arg9[%c88_767, %c64_768] : memref<128x128xf32, #tpu.memory_space<vmem>>, vector<8x64xf32>
    tpu.vector_store %arg9[%c88_767, %c64_768], %556 {strides = array<i32>} : memref<128x128xf32, #tpu.memory_space<vmem>>, vector<8x64xf32>,
    %c0_769 = arith.constant 0 : index
    %c1_770 = arith.constant 1 : index
    %c1_771 = arith.constant 1 : index
    %c0_772 = arith.constant 0 : index
    %c16_773 = arith.constant 16 : index
    %558 = vector.load %arg8[%c0_769, %c1_770, %c1_771, %c0_772, %c16_773] : memref<2x2x2x8x82xf32, #tpu.memory_space<vmem>>, vector<1x1x1x8x64xf32>
    %559 = vector.shape_cast %558 : vector<1x1x1x8x64xf32> to vector<8x64xf32>
    %c0_i32_774 = arith.constant 0 : i32
    %560 = arith.sitofp %c0_i32_774 : i32 to f32
    %561 = vector.shape_cast %22 : vector<1x64xi1> to vector<1x64xi1>
    %562 = vector.broadcast %561 : vector<1x64xi1> to vector<8x64xi1>
    %563 = vector.broadcast %560 : f32 to vector<8x64xf32>
    %564 = arith.select %562, %559, %563 : vector<8x64xi1>, vector<8x64xf32>
    %c96_775 = arith.constant 96 : index
    %c64_776 = arith.constant 64 : index
    %565 = vector.load %arg9[%c96_775, %c64_776] : memref<128x128xf32, #tpu.memory_space<vmem>>, vector<8x64xf32>
    tpu.vector_store %arg9[%c96_775, %c64_776], %564 {strides = array<i32>} : memref<128x128xf32, #tpu.memory_space<vmem>>, vector<8x64xf32>,
    %c0_777 = arith.constant 0 : index
    %c0_778 = arith.constant 0 : index
    %c1_779 = arith.constant 1 : index
    %c0_780 = arith.constant 0 : index
    %c17_781 = arith.constant 17 : index
    %566 = vector.load %arg8[%c0_777, %c0_778, %c1_779, %c0_780, %c17_781] : memref<2x2x2x8x82xf32, #tpu.memory_space<vmem>>, vector<1x1x1x8x64xf32>
    %567 = vector.shape_cast %566 : vector<1x1x1x8x64xf32> to vector<8x64xf32>
    %c104_782 = arith.constant 104 : index
    %c64_783 = arith.constant 64 : index
    %568 = vector.load %arg9[%c104_782, %c64_783] : memref<128x128xf32, #tpu.memory_space<vmem>>, vector<8x64xf32>
    tpu.vector_store %arg9[%c104_782, %c64_783], %567 {strides = array<i32>} : memref<128x128xf32, #tpu.memory_space<vmem>>, vector<8x64xf32>,
    %c0_784 = arith.constant 0 : index
    %c1_785 = arith.constant 1 : index
    %c1_786 = arith.constant 1 : index
    %c0_787 = arith.constant 0 : index
    %c17_788 = arith.constant 17 : index
    %569 = vector.load %arg8[%c0_784, %c1_785, %c1_786, %c0_787, %c17_788] : memref<2x2x2x8x82xf32, #tpu.memory_space<vmem>>, vector<1x1x1x8x64xf32>
    %570 = vector.shape_cast %569 : vector<1x1x1x8x64xf32> to vector<8x64xf32>
    %c112_789 = arith.constant 112 : index
    %c64_790 = arith.constant 64 : index
    %571 = vector.load %arg9[%c112_789, %c64_790] : memref<128x128xf32, #tpu.memory_space<vmem>>, vector<8x64xf32>
    tpu.vector_store %arg9[%c112_789, %c64_790], %570 {strides = array<i32>} : memref<128x128xf32, #tpu.memory_space<vmem>>, vector<8x64xf32>,
    %c0_791 = arith.constant 0 : index
    %c0_792 = arith.constant 0 : index
    %c1_793 = arith.constant 1 : index
    %c0_794 = arith.constant 0 : index
    %c18_795 = arith.constant 18 : index
    %572 = vector.load %arg8[%c0_791, %c0_792, %c1_793, %c0_794, %c18_795] : memref<2x2x2x8x82xf32, #tpu.memory_space<vmem>>, vector<1x1x1x8x64xf32>
    %573 = vector.shape_cast %572 : vector<1x1x1x8x64xf32> to vector<8x64xf32>
    %c0_i32_796 = arith.constant 0 : i32
    %574 = arith.sitofp %c0_i32_796 : i32 to f32
    %575 = vector.shape_cast %24 : vector<1x64xi1> to vector<1x64xi1>
    %576 = vector.broadcast %575 : vector<1x64xi1> to vector<8x64xi1>
    %577 = vector.broadcast %574 : f32 to vector<8x64xf32>
    %578 = arith.select %576, %573, %577 : vector<8x64xi1>, vector<8x64xf32>
    %c120_797 = arith.constant 120 : index
    %c64_798 = arith.constant 64 : index
    %579 = vector.load %arg9[%c120_797, %c64_798] : memref<128x128xf32, #tpu.memory_space<vmem>>, vector<8x64xf32>
    tpu.vector_store %arg9[%c120_797, %c64_798], %578 {strides = array<i32>} : memref<128x128xf32, #tpu.memory_space<vmem>>, vector<8x64xf32>,
    %c0_799 = arith.constant 0 : index
    %c0_800 = arith.constant 0 : index
    %580 = vector.load %arg4[%c0_799, %c0_800] : memref<8x128xf32, #tpu.memory_space<vmem>>, vector<8x128xf32>
    %c0_801 = arith.constant 0 : index
    %c0_802 = arith.constant 0 : index
    %581 = vector.load %arg9[%c0_801, %c0_802] : memref<128x128xf32, #tpu.memory_space<vmem>>, vector<128x128xf32>
    %cst_803 = arith.constant dense<0.000000e+00> : vector<8x128xf32>
    %582 = tpu.matmul %580, %581, %cst_803 {dimension_numbers = #tpu.dot_dimension_numbers<[1], [0], [0], [1], [0, 0, 1, 1], [], []>} : vector<8x128xf32>, vector<128x128xf32>, vector<8x128xf32> -> vector<8x128xf32>
    %c0_804 = arith.constant 0 : index
    %c0_805 = arith.constant 0 : index
    %583 = vector.load %arg5[%c0_804, %c0_805] : memref<8x1xf32, #tpu.memory_space<vmem>>, vector<8x1xf32>
    %584 = vector.broadcast %583 : vector<8x1xf32> to vector<8x128xf32>
    %585 = arith.addf %582, %584 : vector<8x128xf32>
    %cst_806 = arith.constant 0.000000e+00 : f32
    %586 = vector.broadcast %cst_806 : f32 to vector<8x128xf32>
    %587 = arith.cmpf ogt, %585, %586 : vector<8x128xf32>
    %cst_807 = arith.constant 2.000000e-01 : f32
    %588 = vector.broadcast %cst_807 : f32 to vector<8x128xf32>
    %589 = arith.mulf %588, %585 : vector<8x128xf32>
    %590 = arith.select %587, %585, %589 : vector<8x128xi1>, vector<8x128xf32>
    %c0_808 = arith.constant 0 : index
    %c0_809 = arith.constant 0 : index
    %c0_810 = arith.constant 0 : index
    %591 = vector.load %arg6[%c0_808, %c0_809, %c0_810] : memref<1x8x128xf32, #tpu.memory_space<vmem>>, vector<1x8x128xf32>
    %592 = vector.shape_cast %591 : vector<1x8x128xf32> to vector<8x128xf32>
    %593 = vector.shape_cast %590 : vector<8x128xf32> to vector<1x8x128xf32>
    tpu.vector_store %arg6[%c0_808, %c0_809, %c0_810], %593 {strides = array<i32>} : memref<1x8x128xf32, #tpu.memory_space<vmem>>, vector<1x8x128xf32>,
    return
  }
  func.func @transform_0(%arg0: i32) -> (i32, i32, i32, i32, i32) {
    %c0_i32 = arith.constant 0 : i32
    %c0_i32_0 = arith.constant 0 : i32
    %c0_i32_1 = arith.constant 0 : i32
    %c0_i32_2 = arith.constant 0 : i32
    %c0_i32_3 = arith.constant 0 : i32
    return %arg0, %c0_i32, %c0_i32_0, %c0_i32_1, %c0_i32_2 : i32, i32, i32, i32, i32
  }
  func.func @transform_1(%arg0: i32) -> (i32, i32) {
    %c0_i32 = arith.constant 0 : i32
    %c0_i32_0 = arith.constant 0 : i32
    %c0_i32_1 = arith.constant 0 : i32
    return %c0_i32, %c0_i32_0 : i32, i32
  }
  func.func @transform_2(%arg0: i32) -> (i32, i32) {
    %c0_i32 = arith.constant 0 : i32
    %c0_i32_0 = arith.constant 0 : i32
    %c0_i32_1 = arith.constant 0 : i32
    return %c0_i32, %c0_i32_0 : i32, i32
  }
  func.func @transform_3(%arg0: i32) -> (i32, i32) {
    %c0_i32 = arith.constant 0 : i32
    %c0_i32_0 = arith.constant 0 : i32
    %c0_i32_1 = arith.constant 0 : i32
    return %c0_i32, %c0_i32_0 : i32, i32
  }
  func.func @transform_4(%arg0: i32) -> (i32, i32) {
    %c0_i32 = arith.constant 0 : i32
    %c0_i32_0 = arith.constant 0 : i32
    %c0_i32_1 = arith.constant 0 : i32
    return %c0_i32, %c0_i32_0 : i32, i32
  }
  func.func @transform_5(%arg0: i32) -> (i32, i32, i32) {
    %c0_i32 = arith.constant 0 : i32
    %c0_i32_0 = arith.constant 0 : i32
    %c0_i32_1 = arith.constant 0 : i32
    return %arg0, %c0_i32, %c0_i32_0 : i32, i32, i32
  }
}

</mosaic_0001>

<llo_original>
// kernel: tpu_custom_call.1
$region0: #{tpu_custom_call.1}
  #allocation0 [shape = 'u32[]', space=smem, size = 0x4, offset = 0x4, fixed_abs, tag = 'smem constant byte address 0x4 - core index']
  #allocation1 [shape = 'u32[144,128]{1,0:T(1,128)}', space=vmem, size = 0x12000, scoped, tag = 'internal scratch']
  #allocation2 [shape = 'f32[36,512]{1,0:T(8,128)}', space=vmem, size = 0x14000, scoped, tag = 'scratch operand']
  #allocation3 [shape = 'f32[2,2,2,8,82]{4,3,2,1,0:T(8,128)}', space=vmem, size = 0x8000, scoped, tag = 'scratch operand']
  #allocation4 [shape = 'f32[128,128]{1,0:T(8,128)}', space=vmem, size = 0x10000, scoped, tag = 'scratch operand']
  %s0 = inlined_call_operand.hbm [shape: f32[4,2,2,4,82], index: 0, kind: input, shape index: {}]
  %s1 = inlined_call_operand.vmem [shape: f32[8,36], index: 1, kind: input, shape index: {}]
  %s2 = inlined_call_operand.vmem [shape: f32[8,1], index: 2, kind: input, shape index: {}]
  %s3 = inlined_call_operand.vmem [shape: f32[8,128], index: 3, kind: input, shape index: {}]
  %s4 = inlined_call_operand.vmem [shape: f32[8,1], index: 4, kind: input, shape index: {}]
  %s5 = inlined_call_operand.hbm [shape: f32[2,8,128], index: 5, kind: output, shape index: {}]
  %s6 = sld [smem:[#allocation0]]
  $region57: #{tpu_custom_call.1} parent=0
    _
  %s8 = ssub.s32 1, %s6
  %s9 = scalar_select 0, %s8, %s6
  $region1: #{tpu_custom_call.1} parent=0
    #allocation5 [shape = 'u8[32768]{0}', space=vmem, size = 0x8000, scoped, tag = 'input window, operand 0']
    #allocation6 [shape = 's32[2]{0}', space=sflag, size = 0x8, scoped, tag = 'scoped memory for tpu_custom_call.1']
    #allocation7 [shape = 's32[2]{0}', space=sflag, size = 0x8, scoped, tag = 'scoped memory for tpu_custom_call.1']
    #allocation8 [shape = 'u8[8192]{0}', space=vmem, size = 0x2000, scoped, tag = 'output window, operand 0']
    %10 = vsyncpa [#allocation6], 0
    %s11 = scalar_lea.sflag [#allocation6], 1
    %12 = vsyncpa %s11, 0
    %13 = vsyncpa [#allocation7], 0
    %s14 = scalar_lea.sflag [#allocation7], 1
    %15 = vsyncpa %s14, 0
    loop: start=0, step=1, limit=4
    $region2: #{tpu_custom_call.1} parent=1 // loop_pre_header
      _
    $region3: #{tpu_custom_call.1} parent=1 // loop_header
      %s17 = sphi 0, %s21
      %p18 = scmp.ge.s32.totalorder %s17, 4
      %s27 = sphi 0, %s29
      %s30 = sphi 0, %s27
      %s31 = sphi 0, %s30
      %s47 = sphi 0, %s31
      %s51 = sphi 0, %s51
      %s53 = sphi 0, %s51
      %s54 = sphi 0, %s53
      %s68 = sphi 0, %s54
      %s72 = sphi 0, %s72
      %s74 = sphi 0, %s72
      %s75 = sphi 0, %s74
      %s89 = sphi 0, %s75
      %s93 = sphi 0, %s93
      %s95 = sphi 0, %s93
      %s96 = sphi 0, %s95
      %s110 = sphi 0, %s96
      %s114 = sphi 0, %s114
      %s116 = sphi 0, %s114
      %s117 = sphi 0, %s116
      %s131 = sphi 0, %s117
      %s137 = sphi 0, %s139
      %s140 = sphi 0, %s137
      %s141 = sphi 0, %s140
      %s157 = sphi 0, %s141
    $region4: #{tpu_custom_call.1} parent=1 // loop_header_branch
      %20 = sbr.rel (%p18) target = $region8
    $region5: #{tpu_custom_call.1} parent=1 // loop_body
      %s22 = ssub.s32 %s17, 1
      %s23 = ssub.s32 %s17, 2
      %s24 = sadd.s32 %s17, 1
      %s25 = ssub.s32 %s17, %s24
      %p26 = scmp.eq.s32.totalorder %s25, 0
      %s28 = sadd.s32 %s27, 1
      %s29 = scalar_select %p26, %s27, %s28
      %p32 = pneg %p26
      %p33 = scmp.eq.s32.totalorder %s17, 1
      %p34 = por %p32, %p33
      %p35 = scmp.ne.s32.totalorder %s27, %s30
      %p36 = scmp.eq.s32.totalorder %s17, 0
      %p37 = por %p35, %p36
      %p38 = scmp.ne.s32.totalorder %s27, %s30
      %p39 = scmp.eq.s32.totalorder %s22, 1
      %p40 = por %p38, %p39
      %p41 = scmp.ne.s32.totalorder %s30, %s31
      %p42 = scmp.eq.s32.totalorder %s22, 0
      %p43 = por %p41, %p42
      %p44 = scmp.ne.s32.totalorder %s30, %s31
      %p45 = scmp.eq.s32.totalorder %s23, 1
      %p46 = por %p44, %p45
      %p48 = scmp.ne.s32.totalorder %s31, %s47
      %p49 = scmp.eq.s32.totalorder %s23, 0
      %p50 = por %p48, %p49
      %s52 = sadd.s32 %s51, 1
      %p55 = scmp.eq.s32.totalorder %s17, 1
      %p56 = scmp.ne.s32.totalorder %s51, %s53
      %p57 = scmp.eq.s32.totalorder %s17, 0
      %p58 = por %p56, %p57
      %p59 = scmp.ne.s32.totalorder %s51, %s53
      %p60 = scmp.eq.s32.totalorder %s22, 1
      %p61 = por %p59, %p60
      %p62 = scmp.ne.s32.totalorder %s53, %s54
      %p63 = scmp.eq.s32.totalorder %s22, 0
      %p64 = por %p62, %p63
      %p65 = scmp.ne.s32.totalorder %s53, %s54
      %p66 = scmp.eq.s32.totalorder %s23, 1
      %p67 = por %p65, %p66
      %p69 = scmp.ne.s32.totalorder %s54, %s68
      %p70 = scmp.eq.s32.totalorder %s23, 0
      %p71 = por %p69, %p70
      %s73 = sadd.s32 %s72, 1
      %p76 = scmp.eq.s32.totalorder %s17, 1
      %p77 = scmp.ne.s32.totalorder %s72, %s74
      %p78 = scmp.eq.s32.totalorder %s17, 0
      %p79 = por %p77, %p78
      %p80 = scmp.ne.s32.totalorder %s72, %s74
      %p81 = scmp.eq.s32.totalorder %s22, 1
      %p82 = por %p80, %p81
      %p83 = scmp.ne.s32.totalorder %s74, %s75
      %p84 = scmp.eq.s32.totalorder %s22, 0
      %p85 = por %p83, %p84
      %p86 = scmp.ne.s32.totalorder %s74, %s75
      %p87 = scmp.eq.s32.totalorder %s23, 1
      %p88 = por %p86, %p87
      %p90 = scmp.ne.s32.totalorder %s75, %s89
      %p91 = scmp.eq.s32.totalorder %s23, 0
      %p92 = por %p90, %p91
      %s94 = sadd.s32 %s93, 1
      %p97 = scmp.eq.s32.totalorder %s17, 1
      %p98 = scmp.ne.s32.totalorder %s93, %s95
      %p99 = scmp.eq.s32.totalorder %s17, 0
      %p100 = por %p98, %p99
      %p101 = scmp.ne.s32.totalorder %s93, %s95
      %p102 = scmp.eq.s32.totalorder %s22, 1
      %p103 = por %p101, %p102
      %p104 = scmp.ne.s32.totalorder %s95, %s96
      %p105 = scmp.eq.s32.totalorder %s22, 0
      %p106 = por %p104, %p105
      %p107 = scmp.ne.s32.totalorder %s95, %s96
      %p108 = scmp.eq.s32.totalorder %s23, 1
      %p109 = por %p107, %p108
      %p111 = scmp.ne.s32.totalorder %s96, %s110
      %p112 = scmp.eq.s32.totalorder %s23, 0
      %p113 = por %p111, %p112
      %s115 = sadd.s32 %s114, 1
      %p118 = scmp.eq.s32.totalorder %s17, 1
      %p119 = scmp.ne.s32.totalorder %s114, %s116
      %p120 = scmp.eq.s32.totalorder %s17, 0
      %p121 = por %p119, %p120
      %p122 = scmp.ne.s32.totalorder %s114, %s116
      %p123 = scmp.eq.s32.totalorder %s22, 1
      %p124 = por %p122, %p123
      %p125 = scmp.ne.s32.totalorder %s116, %s117
      %p126 = scmp.eq.s32.totalorder %s22, 0
      %p127 = por %p125, %p126
      %p128 = scmp.ne.s32.totalorder %s116, %s117
      %p129 = scmp.eq.s32.totalorder %s23, 1
      %p130 = por %p128, %p129
      %p132 = scmp.ne.s32.totalorder %s117, %s131
      %p133 = scmp.eq.s32.totalorder %s23, 0
      %p134 = por %p132, %p133
      %s135 = ssub.s32 %s17, %s24
      %p136 = scmp.eq.s32.totalorder %s135, 0
      %s138 = sadd.s32 %s137, 1
      %s139 = scalar_select %p136, %s137, %s138
      %p142 = pneg %p136
      %p143 = scmp.eq.s32.totalorder %s17, 1
      %p144 = por %p142, %p143
      %p145 = scmp.ne.s32.totalorder %s137, %s140
      %p146 = scmp.eq.s32.totalorder %s17, 0
      %p147 = por %p145, %p146
      %p148 = scmp.ne.s32.totalorder %s137, %s140
      %p149 = scmp.eq.s32.totalorder %s22, 1
      %p150 = por %p148, %p149
      %p151 = scmp.ne.s32.totalorder %s140, %s141
      %p152 = scmp.eq.s32.totalorder %s22, 0
      %p153 = por %p151, %p152
      %p154 = scmp.ne.s32.totalorder %s140, %s141
      %p155 = scmp.eq.s32.totalorder %s23, 1
      %p156 = por %p154, %p155
      %p158 = scmp.ne.s32.totalorder %s141, %s157
      %p159 = scmp.eq.s32.totalorder %s23, 0
      %p160 = por %p158, %p159
      %p161 = scmp.le.s32.totalorder 1, %s17
      %p162 = scmp.lt.s32.totalorder %s17, 3
      %p163 = pnand %p161, %p162
      %p164 = pneg %p163
      // Predicated region
      $region9: #{tpu_custom_call.1} parent=5 // pred_check
        _
      $region10: #{tpu_custom_call.1} parent=5 // pred_check_branch
        %166 = sbr.rel (%p163) target = $region12
      $region11: #{tpu_custom_call.1} parent=5 // pred_region
        %s167 = ssub.s32 %s17, 1
        // Predicated region
        $region13: #{tpu_custom_call.1} parent=11 // pred_check
          %p168 = pneg %p64
        $region14: #{tpu_custom_call.1} parent=11 // pred_check_branch
          %170 = sbr.rel (%p168) target = $region16
        $region15: #{tpu_custom_call.1} parent=11 // pred_region
          _
        $region16: #{tpu_custom_call.1} parent=11 // pred_fallthru
          _
        // Predicated region
        $region17: #{tpu_custom_call.1} parent=11 // pred_check
          %p171 = pneg %p85
        $region18: #{tpu_custom_call.1} parent=11 // pred_check_branch
          %173 = sbr.rel (%p171) target = $region20
        $region19: #{tpu_custom_call.1} parent=11 // pred_region
          _
        $region20: #{tpu_custom_call.1} parent=11 // pred_fallthru
          _
        // Predicated region
        $region21: #{tpu_custom_call.1} parent=11 // pred_check
          %p174 = pneg %p106
        $region22: #{tpu_custom_call.1} parent=11 // pred_check_branch
          %176 = sbr.rel (%p174) target = $region24
        $region23: #{tpu_custom_call.1} parent=11 // pred_region
          _
        $region24: #{tpu_custom_call.1} parent=11 // pred_fallthru
          _
        // Predicated region
        $region25: #{tpu_custom_call.1} parent=11 // pred_check
          %p177 = pneg %p127
        $region26: #{tpu_custom_call.1} parent=11 // pred_check_branch
          %179 = sbr.rel (%p177) target = $region28
        $region27: #{tpu_custom_call.1} parent=11 // pred_region
          _
        $region28: #{tpu_custom_call.1} parent=11 // pred_fallthru
          _
      $region12: #{tpu_custom_call.1} parent=5 // pred_fallthru
        _
      %p180 = scmp.lt.s32.totalorder %s17, 2
      // Predicated region
      $region29: #{tpu_custom_call.1} parent=5 // pred_check
        %p181 = pneg %p180
      $region30: #{tpu_custom_call.1} parent=5 // pred_check_branch
        %183 = sbr.rel (%p181) target = $region32
      $region31: #{tpu_custom_call.1} parent=5 // pred_region
        // Predicated region
        $region33: #{tpu_custom_call.1} parent=31 // pred_check
          %p184 = pneg %p37
        $region34: #{tpu_custom_call.1} parent=31 // pred_check_branch
          %186 = sbr.rel (%p184) target = $region36
        $region35: #{tpu_custom_call.1} parent=31 // pred_region
          %s187 = sand.u32 %s27, 1
          %s188 = scalar_lea.sflag [#allocation6], %s187
          %s189 = sand.u32 %s27, 1
          %s190 = smul.addr %s189, 32
          %s191 = scalar_lea.vmem [#allocation5], %s190
          %s192 = smul.u32 2, %s17
          %s194 = ssub.s32 512, 512
          %195 = vsyncadd %s188, %s194
          %s196 = smul.addr %s192, 4
          %s197 = smul.addr %s196, 64
          %s198 = scalar_lea.hbm %s0, %s197
          %s199 = sshll.u32 %s191, 4
          %s200 = int_to_ptr.vmem [resolvable:$true] %s199
          %205 = dma.hbm_to_vmem [thread:$0]  %s198, 512, %s200, %s188, 64, 64, 4
        $region36: #{tpu_custom_call.1} parent=31 // pred_fallthru
          _
      $region32: #{tpu_custom_call.1} parent=5 // pred_fallthru
        _
      %p206 = scmp.le.s32.totalorder 1, %s17
      %p207 = scmp.lt.s32.totalorder %s17, 3
      %p208 = pnand %p206, %p207
      %p209 = pneg %p208
      // Predicated region
      $region37: #{tpu_custom_call.1} parent=5 // pred_check
        _
      $region38: #{tpu_custom_call.1} parent=5 // pred_check_branch
        %211 = sbr.rel (%p208) target = $region40
      $region39: #{tpu_custom_call.1} parent=5 // pred_region
        %s212 = ssub.s32 %s17, 1
        %s213 = sand.u32 %s30, 1
        %s214 = scalar_lea.sflag [#allocation6], %s213
        %s215 = sand.u32 %s30, 1
        %s216 = smul.addr %s215, 32
        %s217 = scalar_lea.vmem [#allocation5], %s216
        // Predicated region
        $region41: #{tpu_custom_call.1} parent=39 // pred_check
          %p218 = pneg %p43
        $region42: #{tpu_custom_call.1} parent=39 // pred_check_branch
          %220 = sbr.rel (%p218) target = $region44
        $region43: #{tpu_custom_call.1} parent=39 // pred_region
          %221 = dma.done %s214, 512
        $region44: #{tpu_custom_call.1} parent=39 // pred_fallthru
          _
        %s222 = sand.u32 %s30, 1
        %s223 = scalar_lea.sflag [#allocation6], %s222
        %s224 = sand.u32 %s30, 1
        %s225 = smul.addr %s224, 32
        %s226 = scalar_lea.vmem [#allocation5], %s225
        %p227 = pneg %p43
        %p228 = pneg %p40
        %p229 = pneg %p64
        %p230 = pneg %p61
        %p231 = pneg %p85
        %p232 = pneg %p82
        %p233 = pneg %p106
        %p234 = pneg %p103
        %p235 = pneg %p127
        %p236 = pneg %p124
        %p237 = pneg %p153
        %p238 = pneg %p150
        %s239 = sand.u32 %s140, 1
        %s240 = scalar_lea.sflag [#allocation7], %s239
        %s241 = sand.u32 %s140, 1
        %s242 = smul.addr %s241, 8
        %s243 = scalar_lea.vmem [#allocation8], %s242
        %s244 = smul.u32 2, %s22
        %vm245 = vcmask 72704
        %246 = vst.msk [vmem:[#allocation3] sm:$0xff] %vm245, 0.0
        %247 = vst.msk [vmem:[#allocation3 + $0x8] sm:$0xff] %vm245, 0.0
        %248 = vst.msk [vmem:[#allocation3 + $0x10] sm:$0xff] %vm245, 0.0
        %249 = vst.msk [vmem:[#allocation3 + $0x18] sm:$0xff] %vm245, 0.0
        %250 = vst.msk [vmem:[#allocation3 + $0x20] sm:$0xff] %vm245, 0.0
        %251 = vst.msk [vmem:[#allocation3 + $0x28] sm:$0xff] %vm245, 0.0
        %252 = vst.msk [vmem:[#allocation3 + $0x30] sm:$0xff] %vm245, 0.0
        %253 = vst.msk [vmem:[#allocation3 + $0x38] sm:$0xff] %vm245, 0.0
        %vm254 = vcmask 671304
        %255 = vst.msk [vmem:[#allocation3] sm:$0xff] %vm254, 0.0
        %256 = vst.msk [vmem:[#allocation3 + $0x8] sm:$0xff] %vm254, 0.0
        %257 = vst.msk [vmem:[#allocation3 + $0x10] sm:$0xff] %vm254, 0.0
        %258 = vst.msk [vmem:[#allocation3 + $0x18] sm:$0xff] %vm254, 0.0
        %259 = vst.msk [vmem:[#allocation3 + $0x20] sm:$0xff] %vm254, 0.0
        %260 = vst.msk [vmem:[#allocation3 + $0x28] sm:$0xff] %vm254, 0.0
        %261 = vst.msk [vmem:[#allocation3 + $0x30] sm:$0xff] %vm254, 0.0
        %262 = vst.msk [vmem:[#allocation3 + $0x38] sm:$0xff] %vm254, 0.0
        %v263 = vlaneseq
        %v264 = vand.u32 %v263, 127
        %vm265 = vcmp.lt.s32.totalorder %v264, 0
        %v266 = vsub.s32 0, %v264
        %v267 = vsel %vm265, %v266, %v264
        %v268 = vshrl.u32 %v267, 3
        %v269 = vand.u32 %v267, 7
        %v270 = vsub.s32 0, %v269
        %v271 = vsel %vm265, %v270, %v269
        %vm272 = vcmp.ne.s32.totalorder %v271, 0
        %vm273 = vcmp.lt.s32.totalorder %v271, 0
        %vm274 = vmand %vm273, %vm272
        %v275 = vadd.s32 %v271, 8
        %v276 = vsel %vm274, %v275, %v271
        %vm277 = vcmp.ne.s32.totalorder %v276, 0
        %vm278 = vcmp.ne.s32.totalorder %v276, 7
        %s279 = scalar_lea.vmem %s217, 12 [#allocation5]
        %v280 = vld [vmem:[%s279] sm:$0xf]
        %v281 = vsel %vm277, 1, 0
        %vm282 = vcmp.eq.s32.totalorder %v281, 1
        %v283 = vsel %vm282, %v280, 0.0
        %vm284 = vcmask 519168
        %285 = vst.msk [vmem:[#allocation2] sm:$0xf] %vm284, %v283
        %s286 = scalar_lea.vmem %s217, 8 [#allocation5]
        %v287 = vld [vmem:[%s286] sm:$0xf]
        %v289 = vrot.slane %v287, 4
        %290 = vrot.lane.b32.xlu0 %v289, 127
        %v291 = vpop.permute.xlu0 %290
        %vm293 = vcmask 523268
        %294 = vst.msk [vmem:[#allocation2] sm:$0xf0] %vm293, %v291
        %v295 = vld [vmem:[%s279] sm:$0xf]
        %297 = vrot.lane.b32.xlu0 %v295, 127
        %v298 = vpop.permute.xlu0 %297
        %300 = vst.msk [vmem:[#allocation2 + $0x20] sm:$0xf] %vm284, %v298
        %s301 = scalar_lea.vmem %s217, 4 [#allocation5]
        %v302 = vld [vmem:[%s301] sm:$0xf]
        %304 = vrot.lane.b32.xlu0 %v302, 120
        %v305 = vpop.permute.xlu0 %304
        %v307 = vsel %vm282, %v305, 0.0
        %v309 = vrot.slane %v307, 4
        %311 = vst.msk [vmem:[#allocation2 + $0x20] sm:$0xf0] %vm293, %v309
        %v312 = vld [vmem:[%s217] sm:$0xf]
        %314 = vrot.lane.b32.xlu0 %v312, 119
        %v315 = vpop.permute.xlu0 %314
        %317 = vst.msk [vmem:[#allocation2 + $0x40] sm:$0xf] %vm284, %v315
        %v318 = vld [vmem:[%s301] sm:$0xf]
        %v320 = vrot.slane %v318, 4
        %321 = vrot.lane.b32.xlu0 %v320, 119
        %v322 = vpop.permute.xlu0 %321
        %324 = vst.msk [vmem:[#allocation2 + $0x40] sm:$0xf0] %vm293, %v322
        %v325 = vld [vmem:[%s279] sm:$0xf]
        %327 = vrot.lane.b32.xlu0 %v325, 120
        %v328 = vpop.permute.xlu0 %327
        %v330 = vsel %vm282, %v328, 0.0
        %331 = vst.msk [vmem:[#allocation2 + $0x60] sm:$0xf] %vm284, %v330
        %v332 = vld [vmem:[%s286] sm:$0xf]
        %v334 = vrot.slane %v332, 4
        %335 = vrot.lane.b32.xlu0 %v334, 119
        %v336 = vpop.permute.xlu0 %335
        %338 = vst.msk [vmem:[#allocation2 + $0x60] sm:$0xf0] %vm293, %v336
        %v339 = vld [vmem:[%s279] sm:$0xf]
        %341 = vrot.lane.b32.xlu0 %v339, 119
        %v342 = vpop.permute.xlu0 %341
        %344 = vst.msk [vmem:[#allocation2 + $0x80] sm:$0xf] %vm284, %v342
        %s345 = scalar_lea.vmem %s217, 28 [#allocation5]
        %v346 = vld [vmem:[%s345] sm:$0xf]
        %v347 = vsel %vm282, %v346, 0.0
        %349 = vrot.lane.b32.xlu0 %v347, 64
        %v350 = vpop.permute.xlu0 %349
        %vm352 = vcmask 1043968
        %353 = vst.msk [vmem:[#allocation2] sm:$0xf] %vm352, %v350
        %s354 = scalar_lea.vmem %s217, 24 [#allocation5]
        %v355 = vld [vmem:[%s354] sm:$0xf]
        %v357 = vrot.slane %v355, 4
        %358 = vrot.lane.b32.xlu0 %v357, 63
        %v359 = vpop.permute.xlu0 %358
        %vm361 = vcmask 1048068
        %362 = vst.msk [vmem:[#allocation2] sm:$0xf0] %vm361, %v359
        %v363 = vld [vmem:[%s345] sm:$0xf]
        %365 = vrot.lane.b32.xlu0 %v363, 63
        %v366 = vpop.permute.xlu0 %365
        %368 = vst.msk [vmem:[#allocation2 + $0x20] sm:$0xf] %vm352, %v366
        %s369 = scalar_lea.vmem %s217, 20 [#allocation5]
        %v370 = vld [vmem:[%s369] sm:$0xf]
        %372 = vrot.lane.b32.xlu0 %v370, 120
        %v373 = vpop.permute.xlu0 %372
        %v375 = vsel %vm282, %v373, 0.0
        %v377 = vrot.slane %v375, 4
        %378 = vrot.lane.b32.xlu0 %v377, 64
        %v379 = vpop.permute.xlu0 %378
        %381 = vst.msk [vmem:[#allocation2 + $0x20] sm:$0xf0] %vm361, %v379
        %s382 = scalar_lea.vmem %s217, 16 [#allocation5]
        %v383 = vld [vmem:[%s382] sm:$0xf]
        %385 = vrot.lane.b32.xlu0 %v383, 55
        %v386 = vpop.permute.xlu0 %385
        %388 = vst.msk [vmem:[#allocation2 + $0x40] sm:$0xf] %vm352, %v386
        %v389 = vld [vmem:[%s369] sm:$0xf]
        %v391 = vrot.slane %v389, 4
        %392 = vrot.lane.b32.xlu0 %v391, 55
        %v393 = vpop.permute.xlu0 %392
        %395 = vst.msk [vmem:[#allocation2 + $0x40] sm:$0xf0] %vm361, %v393
        %v396 = vld [vmem:[%s345] sm:$0xf]
        %398 = vrot.lane.b32.xlu0 %v396, 120
        %v399 = vpop.permute.xlu0 %398
        %v401 = vsel %vm282, %v399, 0.0
        %403 = vrot.lane.b32.xlu0 %v401, 64
        %v404 = vpop.permute.xlu0 %403
        %406 = vst.msk [vmem:[#allocation2 + $0x60] sm:$0xf] %vm352, %v404
        %v407 = vld [vmem:[%s354] sm:$0xf]
        %v409 = vrot.slane %v407, 4
        %410 = vrot.lane.b32.xlu0 %v409, 55
        %v411 = vpop.permute.xlu0 %410
        %413 = vst.msk [vmem:[#allocation2 + $0x60] sm:$0xf0] %vm361, %v411
        %v414 = vld [vmem:[%s345] sm:$0xf]
        %416 = vrot.lane.b32.xlu0 %v414, 55
        %v417 = vpop.permute.xlu0 %416
        %419 = vst.msk [vmem:[#allocation2 + $0x80] sm:$0xf] %vm352, %v417
        %v420 = vld [vmem:[%s286] sm:$0xf]
        %422 = vrot.lane.b32.xlu0 %v420, 127
        %v423 = vpop.permute.xlu0 %422
        %425 = vst.msk [vmem:[#allocation2 + $0x8] sm:$0xf] %vm284, %v423
        %v426 = vld [vmem:[%s279] sm:$0xf]
        %v428 = vrot.slane %v426, 4
        %429 = vrot.lane.b32.xlu0 %v428, 127
        %v430 = vpop.permute.xlu0 %429
        %432 = vst.msk [vmem:[#allocation2 + $0x8] sm:$0xf0] %vm293, %v430
        %v433 = vld [vmem:[%s286] sm:$0xf]
        %v434 = vsel %vm278, 1, 0
        %vm435 = vcmp.eq.s32.totalorder %v434, 1
        %437 = vrot.lane.b32.xlu0 %v433, 126
        %v438 = vpop.permute.xlu0 %437
        %v440 = vsel %vm435, %v438, 0.0
        %441 = vst.msk [vmem:[#allocation2 + $0x28] sm:$0xf] %vm284, %v440
        %v442 = vld [vmem:[%s217] sm:$0xf]
        %v444 = vrot.slane %v442, 4
        %445 = vrot.lane.b32.xlu0 %v444, 119
        %v446 = vpop.permute.xlu0 %445
        %448 = vst.msk [vmem:[#allocation2 + $0x28] sm:$0xf0] %vm293, %v446
        %v449 = vld [vmem:[%s301] sm:$0xf]
        %451 = vrot.lane.b32.xlu0 %v449, 119
        %v452 = vpop.permute.xlu0 %451
        %454 = vst.msk [vmem:[#allocation2 + $0x48] sm:$0xf] %vm284, %v452
        %v455 = vld [vmem:[%s217] sm:$0xf]
        %457 = vrot.lane.b32.xlu0 %v455, 118
        %v458 = vpop.permute.xlu0 %457
        %v460 = vsel %vm435, %v458, 0.0
        %v462 = vrot.slane %v460, 4
        %464 = vst.msk [vmem:[#allocation2 + $0x48] sm:$0xf0] %vm293, %v462
        %v465 = vld [vmem:[%s286] sm:$0xf]
        %467 = vrot.lane.b32.xlu0 %v465, 119
        %v468 = vpop.permute.xlu0 %467
        %470 = vst.msk [vmem:[#allocation2 + $0x68] sm:$0xf] %vm284, %v468
        %v471 = vld [vmem:[%s279] sm:$0xf]
        %v473 = vrot.slane %v471, 4
        %474 = vrot.lane.b32.xlu0 %v473, 119
        %v475 = vpop.permute.xlu0 %474
        %477 = vst.msk [vmem:[#allocation2 + $0x68] sm:$0xf0] %vm293, %v475
        %v478 = vld [vmem:[%s286] sm:$0xf]
        %480 = vrot.lane.b32.xlu0 %v478, 118
        %v481 = vpop.permute.xlu0 %480
        %v483 = vsel %vm435, %v481, 0.0
        %484 = vst.msk [vmem:[#allocation2 + $0x88] sm:$0xf] %vm284, %v483
        %v485 = vld [vmem:[%s354] sm:$0xf]
        %487 = vrot.lane.b32.xlu0 %v485, 63
        %v488 = vpop.permute.xlu0 %487
        %490 = vst.msk [vmem:[#allocation2 + $0x8] sm:$0xf] %vm352, %v488
        %v491 = vld [vmem:[%s345] sm:$0xf]
        %v493 = vrot.slane %v491, 4
        %494 = vrot.lane.b32.xlu0 %v493, 63
        %v495 = vpop.permute.xlu0 %494
        %497 = vst.msk [vmem:[#allocation2 + $0x8] sm:$0xf0] %vm361, %v495
        %v498 = vld [vmem:[%s354] sm:$0xf]
        %500 = vrot.lane.b32.xlu0 %v498, 126
        %v501 = vpop.permute.xlu0 %500
        %v503 = vsel %vm435, %v501, 0.0
        %505 = vrot.lane.b32.xlu0 %v503, 64
        %v506 = vpop.permute.xlu0 %505
        %508 = vst.msk [vmem:[#allocation2 + $0x28] sm:$0xf] %vm352, %v506
        %v509 = vld [vmem:[%s382] sm:$0xf]
        %v511 = vrot.slane %v509, 4
        %512 = vrot.lane.b32.xlu0 %v511, 55
        %v513 = vpop.permute.xlu0 %512
        %515 = vst.msk [vmem:[#allocation2 + $0x28] sm:$0xf0] %vm361, %v513
        %v516 = vld [vmem:[%s369] sm:$0xf]
        %518 = vrot.lane.b32.xlu0 %v516, 55
        %v519 = vpop.permute.xlu0 %518
        %521 = vst.msk [vmem:[#allocation2 + $0x48] sm:$0xf] %vm352, %v519
        %v522 = vld [vmem:[%s382] sm:$0xf]
        %524 = vrot.lane.b32.xlu0 %v522, 118
        %v525 = vpop.permute.xlu0 %524
        %v527 = vsel %vm435, %v525, 0.0
        %v529 = vrot.slane %v527, 4
        %530 = vrot.lane.b32.xlu0 %v529, 64
        %v531 = vpop.permute.xlu0 %530
        %533 = vst.msk [vmem:[#allocation2 + $0x48] sm:$0xf0] %vm361, %v531
        %v534 = vld [vmem:[%s354] sm:$0xf]
        %536 = vrot.lane.b32.xlu0 %v534, 55
        %v537 = vpop.permute.xlu0 %536
        %539 = vst.msk [vmem:[#allocation2 + $0x68] sm:$0xf] %vm352, %v537
        %v540 = vld [vmem:[%s345] sm:$0xf]
        %v542 = vrot.slane %v540, 4
        %543 = vrot.lane.b32.xlu0 %v542, 55
        %v544 = vpop.permute.xlu0 %543
        %546 = vst.msk [vmem:[#allocation2 + $0x68] sm:$0xf0] %vm361, %v544
        %v547 = vld [vmem:[%s354] sm:$0xf]
        %549 = vrot.lane.b32.xlu0 %v547, 118
        %v550 = vpop.permute.xlu0 %549
        %v552 = vsel %vm435, %v550, 0.0
        %554 = vrot.lane.b32.xlu0 %v552, 64
        %v555 = vpop.permute.xlu0 %554
        %557 = vst.msk [vmem:[#allocation2 + $0x88] sm:$0xf] %vm352, %v555
        %v558 = vld [vmem:[%s301] sm:$0xf]
        %560 = vrot.lane.b32.xlu0 %v558, 120
        %v561 = vpop.permute.xlu0 %560
        %v563 = vsel %vm282, %v561, 0.0
        %564 = vst.msk [vmem:[#allocation2 + $0x10] sm:$0xf] %vm284, %v563
        %v565 = vld [vmem:[%s217] sm:$0xf]
        %v567 = vrot.slane %v565, 4
        %568 = vrot.lane.b32.xlu0 %v567, 119
        %v569 = vpop.permute.xlu0 %568
        %571 = vst.msk [vmem:[#allocation2 + $0x10] sm:$0xf0] %vm293, %v569
        %v572 = vld [vmem:[%s301] sm:$0xf]
        %574 = vrot.lane.b32.xlu0 %v572, 119
        %v575 = vpop.permute.xlu0 %574
        %577 = vst.msk [vmem:[#allocation2 + $0x30] sm:$0xf] %vm284, %v575
        %v578 = vld [vmem:[%s279] sm:$0xf]
        %580 = vrot.lane.b32.xlu0 %v578, 120
        %v581 = vpop.permute.xlu0 %580
        %v583 = vsel %vm282, %v581, 0.0
        %v585 = vrot.slane %v583, 4
        %587 = vst.msk [vmem:[#allocation2 + $0x30] sm:$0xf0] %vm293, %v585
        %v588 = vld [vmem:[%s286] sm:$0xf]
        %590 = vrot.lane.b32.xlu0 %v588, 119
        %v591 = vpop.permute.xlu0 %590
        %593 = vst.msk [vmem:[#allocation2 + $0x50] sm:$0xf] %vm284, %v591
        %v594 = vld [vmem:[%s279] sm:$0xf]
        %v596 = vrot.slane %v594, 4
        %597 = vrot.lane.b32.xlu0 %v596, 119
        %v598 = vpop.permute.xlu0 %597
        %600 = vst.msk [vmem:[#allocation2 + $0x50] sm:$0xf0] %vm293, %v598
        %v601 = vld [vmem:[%s301] sm:$0xf]
        %603 = vrot.lane.b32.xlu0 %v601, 112
        %v604 = vpop.permute.xlu0 %603
        %v606 = vsel %vm282, %v604, 0.0
        %607 = vst.msk [vmem:[#allocation2 + $0x70] sm:$0xf] %vm284, %v606
        %v608 = vld [vmem:[%s217] sm:$0xf]
        %v610 = vrot.slane %v608, 4
        %611 = vrot.lane.b32.xlu0 %v610, 111
        %v612 = vpop.permute.xlu0 %611
        %614 = vst.msk [vmem:[#allocation2 + $0x70] sm:$0xf0] %vm293, %v612
        %v615 = vld [vmem:[%s301] sm:$0xf]
        %617 = vrot.lane.b32.xlu0 %v615, 111
        %v618 = vpop.permute.xlu0 %617
        %620 = vst.msk [vmem:[#allocation2 + $0x90] sm:$0xf] %vm284, %v618
        %v621 = vld [vmem:[%s369] sm:$0xf]
        %623 = vrot.lane.b32.xlu0 %v621, 120
        %v624 = vpop.permute.xlu0 %623
        %v626 = vsel %vm282, %v624, 0.0
        %628 = vrot.lane.b32.xlu0 %v626, 64
        %v629 = vpop.permute.xlu0 %628
        %631 = vst.msk [vmem:[#allocation2 + $0x10] sm:$0xf] %vm352, %v629
        %v632 = vld [vmem:[%s382] sm:$0xf]
        %v634 = vrot.slane %v632, 4
        %635 = vrot.lane.b32.xlu0 %v634, 55
        %v636 = vpop.permute.xlu0 %635
        %638 = vst.msk [vmem:[#allocation2 + $0x10] sm:$0xf0] %vm361, %v636
        %v639 = vld [vmem:[%s369] sm:$0xf]
        %641 = vrot.lane.b32.xlu0 %v639, 55
        %v642 = vpop.permute.xlu0 %641
        %644 = vst.msk [vmem:[#allocation2 + $0x30] sm:$0xf] %vm352, %v642
        %v645 = vld [vmem:[%s345] sm:$0xf]
        %647 = vrot.lane.b32.xlu0 %v645, 120
        %v648 = vpop.permute.xlu0 %647
        %v650 = vsel %vm282, %v648, 0.0
        %v652 = vrot.slane %v650, 4
        %653 = vrot.lane.b32.xlu0 %v652, 64
        %v654 = vpop.permute.xlu0 %653
        %656 = vst.msk [vmem:[#allocation2 + $0x30] sm:$0xf0] %vm361, %v654
        %v657 = vld [vmem:[%s354] sm:$0xf]
        %659 = vrot.lane.b32.xlu0 %v657, 55
        %v660 = vpop.permute.xlu0 %659
        %662 = vst.msk [vmem:[#allocation2 + $0x50] sm:$0xf] %vm352, %v660
        %v663 = vld [vmem:[%s345] sm:$0xf]
        %v665 = vrot.slane %v663, 4
        %666 = vrot.lane.b32.xlu0 %v665, 55
        %v667 = vpop.permute.xlu0 %666
        %669 = vst.msk [vmem:[#allocation2 + $0x50] sm:$0xf0] %vm361, %v667
        %v670 = vld [vmem:[%s369] sm:$0xf]
        %672 = vrot.lane.b32.xlu0 %v670, 112
        %v673 = vpop.permute.xlu0 %672
        %v675 = vsel %vm282, %v673, 0.0
        %677 = vrot.lane.b32.xlu0 %v675, 64
        %v678 = vpop.permute.xlu0 %677
        %680 = vst.msk [vmem:[#allocation2 + $0x70] sm:$0xf] %vm352, %v678
        %v681 = vld [vmem:[%s382] sm:$0xf]
        %v683 = vrot.slane %v681, 4
        %684 = vrot.lane.b32.xlu0 %v683, 47
        %v685 = vpop.permute.xlu0 %684
        %687 = vst.msk [vmem:[#allocation2 + $0x70] sm:$0xf0] %vm361, %v685
        %v688 = vld [vmem:[%s369] sm:$0xf]
        %690 = vrot.lane.b32.xlu0 %v688, 47
        %v691 = vpop.permute.xlu0 %690
        %693 = vst.msk [vmem:[#allocation2 + $0x90] sm:$0xf] %vm352, %v691
        %v694 = vld [vmem:[%s217] sm:$0xf]
        %696 = vrot.lane.b32.xlu0 %v694, 119
        %v697 = vpop.permute.xlu0 %696
        %699 = vst.msk [vmem:[#allocation2 + $0x18] sm:$0xf] %vm284, %v697
        %v700 = vld [vmem:[%s301] sm:$0xf]
        %v702 = vrot.slane %v700, 4
        %703 = vrot.lane.b32.xlu0 %v702, 119
        %v704 = vpop.permute.xlu0 %703
        %706 = vst.msk [vmem:[#allocation2 + $0x18] sm:$0xf0] %vm293, %v704
        %v707 = vld [vmem:[%s217] sm:$0xf]
        %709 = vrot.lane.b32.xlu0 %v707, 118
        %v710 = vpop.permute.xlu0 %709
        %v712 = vsel %vm435, %v710, 0.0
        %713 = vst.msk [vmem:[#allocation2 + $0x38] sm:$0xf] %vm284, %v712
        %v714 = vld [vmem:[%s286] sm:$0xf]
        %v716 = vrot.slane %v714, 4
        %717 = vrot.lane.b32.xlu0 %v716, 119
        %v718 = vpop.permute.xlu0 %717
        %720 = vst.msk [vmem:[#allocation2 + $0x38] sm:$0xf0] %vm293, %v718
        %v721 = vld [vmem:[%s279] sm:$0xf]
        %723 = vrot.lane.b32.xlu0 %v721, 119
        %v724 = vpop.permute.xlu0 %723
        %726 = vst.msk [vmem:[#allocation2 + $0x58] sm:$0xf] %vm284, %v724
        %v727 = vld [vmem:[%s286] sm:$0xf]
        %729 = vrot.lane.b32.xlu0 %v727, 118
        %v730 = vpop.permute.xlu0 %729
        %v732 = vsel %vm435, %v730, 0.0
        %v734 = vrot.slane %v732, 4
        %736 = vst.msk [vmem:[#allocation2 + $0x58] sm:$0xf0] %vm293, %v734
        %v737 = vld [vmem:[%s217] sm:$0xf]
        %739 = vrot.lane.b32.xlu0 %v737, 111
        %v740 = vpop.permute.xlu0 %739
        %742 = vst.msk [vmem:[#allocation2 + $0x78] sm:$0xf] %vm284, %v740
        %v743 = vld [vmem:[%s301] sm:$0xf]
        %v745 = vrot.slane %v743, 4
        %746 = vrot.lane.b32.xlu0 %v745, 111
        %v747 = vpop.permute.xlu0 %746
        %749 = vst.msk [vmem:[#allocation2 + $0x78] sm:$0xf0] %vm293, %v747
        %v750 = vld [vmem:[%s217] sm:$0xf]
        %752 = vrot.lane.b32.xlu0 %v750, 110
        %v753 = vpop.permute.xlu0 %752
        %v755 = vsel %vm435, %v753, 0.0
        %756 = vst.msk [vmem:[#allocation2 + $0x98] sm:$0xf] %vm284, %v755
        %v757 = vld [vmem:[%s382] sm:$0xf]
        %759 = vrot.lane.b32.xlu0 %v757, 55
        %v760 = vpop.permute.xlu0 %759
        %762 = vst.msk [vmem:[#allocation2 + $0x18] sm:$0xf] %vm352, %v760
        %v763 = vld [vmem:[%s369] sm:$0xf]
        %v765 = vrot.slane %v763, 4
        %766 = vrot.lane.b32.xlu0 %v765, 55
        %v767 = vpop.permute.xlu0 %766
        %769 = vst.msk [vmem:[#allocation2 + $0x18] sm:$0xf0] %vm361, %v767
        %v770 = vld [vmem:[%s382] sm:$0xf]
        %772 = vrot.lane.b32.xlu0 %v770, 118
        %v773 = vpop.permute.xlu0 %772
        %v775 = vsel %vm435, %v773, 0.0
        %777 = vrot.lane.b32.xlu0 %v775, 64
        %v778 = vpop.permute.xlu0 %777
        %780 = vst.msk [vmem:[#allocation2 + $0x38] sm:$0xf] %vm352, %v778
        %v781 = vld [vmem:[%s354] sm:$0xf]
        %v783 = vrot.slane %v781, 4
        %784 = vrot.lane.b32.xlu0 %v783, 55
        %v785 = vpop.permute.xlu0 %784
        %787 = vst.msk [vmem:[#allocation2 + $0x38] sm:$0xf0] %vm361, %v785
        %v788 = vld [vmem:[%s345] sm:$0xf]
        %790 = vrot.lane.b32.xlu0 %v788, 55
        %v791 = vpop.permute.xlu0 %790
        %793 = vst.msk [vmem:[#allocation2 + $0x58] sm:$0xf] %vm352, %v791
        %v794 = vld [vmem:[%s354] sm:$0xf]
        %796 = vrot.lane.b32.xlu0 %v794, 118
        %v797 = vpop.permute.xlu0 %796
        %v799 = vsel %vm435, %v797, 0.0
        %v801 = vrot.slane %v799, 4
        %802 = vrot.lane.b32.xlu0 %v801, 64
        %v803 = vpop.permute.xlu0 %802
        %805 = vst.msk [vmem:[#allocation2 + $0x58] sm:$0xf0] %vm361, %v803
        %v806 = vld [vmem:[%s382] sm:$0xf]
        %808 = vrot.lane.b32.xlu0 %v806, 47
        %v809 = vpop.permute.xlu0 %808
        %811 = vst.msk [vmem:[#allocation2 + $0x78] sm:$0xf] %vm352, %v809
        %v812 = vld [vmem:[%s369] sm:$0xf]
        %v814 = vrot.slane %v812, 4
        %815 = vrot.lane.b32.xlu0 %v814, 47
        %v816 = vpop.permute.xlu0 %815
        %818 = vst.msk [vmem:[#allocation2 + $0x78] sm:$0xf0] %vm361, %v816
        %v819 = vld [vmem:[%s382] sm:$0xf]
        %821 = vrot.lane.b32.xlu0 %v819, 110
        %v822 = vpop.permute.xlu0 %821
        %v824 = vsel %vm435, %v822, 0.0
        %826 = vrot.lane.b32.xlu0 %v824, 64
        %v827 = vpop.permute.xlu0 %826
        %829 = vst.msk [vmem:[#allocation2 + $0x98] sm:$0xf] %vm352, %v827
        %v830 = vld [vmem:[%s1] sm:$0xff]
        %v831 = vld [vmem:[#allocation2] sm:$0xff]
        %v832 = vld [vmem:[#allocation2 + $0x8] sm:$0xff]
        %v833 = vld [vmem:[#allocation2 + $0x10] sm:$0xff]
        %v834 = vld [vmem:[#allocation2 + $0x18] sm:$0xff]
        %v835 = vld [vmem:[#allocation2 + $0x20] sm:$0xff]
        %v836 = vld [vmem:[#allocation2 + $0x28] sm:$0xff]
        %v837 = vld [vmem:[#allocation2 + $0x30] sm:$0xff]
        %v838 = vld [vmem:[#allocation2 + $0x38] sm:$0xff]
        %v839 = vld [vmem:[#allocation2 + $0x40] sm:$0xff]
        %v840 = vld [vmem:[#allocation2 + $0x48] sm:$0xff]
        %v841 = vld [vmem:[#allocation2 + $0x50] sm:$0xff]
        %v842 = vld [vmem:[#allocation2 + $0x58] sm:$0xff]
        %v843 = vld [vmem:[#allocation2 + $0x60] sm:$0xff]
        %v844 = vld [vmem:[#allocation2 + $0x68] sm:$0xff]
        %v845 = vld [vmem:[#allocation2 + $0x70] sm:$0xff]
        %v846 = vld [vmem:[#allocation2 + $0x78] sm:$0xff]
        %v847 = vld [vmem:[#allocation2 + $0x80] sm:$0xf]
        %v848 = vld [vmem:[#allocation2 + $0x88] sm:$0xf]
        %v849 = vld [vmem:[#allocation2 + $0x90] sm:$0xf]
        %v850 = vld [vmem:[#allocation2 + $0x98] sm:$0xf]
        %v851 = vld [vmem:[%s2] sm:$0xff]
        %853 = vset.pattern.permute.xlu0 0
        %854 = vperm.xlu0 %853, %v851
        %v855 = vpop.permute.xlu0 %854
        %vm857 = vcmask 293888
        %v859 = vsel %vm857, %v830, 0
        %vm861 = vcmask 1043456
        %v863 = vsel %vm861, %v847, 0
        %v866 = vsel %vm861, %v848, 0
        %v869 = vsel %vm861, %v849, 0
        %v872 = vsel %vm861, %v850, 0
        %874 = vmatprep.subr.mxu0 %v832
        %875 = vmatpush1.msra.mxu0 %v831
        %876 = vmatprep.subr.mxu0 %v836
        %877 = vmatpush1.msra.mxu0 %v835
        %878 = vmatprep.subr.mxu0 %v840
        %879 = vmatpush1.msra.mxu0 %v839
        %880 = vmatprep.subr.mxu0 %v844
        %881 = vmatpush1.msra.mxu0 %v843
        %882 = vmatprep.subr.mxu0 %v866
        %883 = vmatpush1.msra.mxu0 %v863
        %884 = vmatprep.subr.mxu0 0.0
        %885 = vmatpush1.msra.mxu0 0.0
        %886 = vmatprep.subr.mxu0 0.0
        %887 = vmatpush1.msra.mxu0 0.0
        %888 = vmatprep.subr.mxu0 0.0
        %889 = vmatpush1.msra.mxu0 0.0
        %890 = vmatprep.subr.mxu0 0.0
        %891 = vmatpush1.msra.mxu0 0.0
        %892 = vmatprep.subr.mxu0 0.0
        %893 = vmatpush1.msra.mxu0 0.0
        %894 = vmatprep.subr.mxu0 0.0
        %895 = vmatpush1.msra.mxu0 0.0
        %896 = vmatprep.subr.mxu0 0.0
        %897 = vmatpush1.msra.mxu0 0.0
        %898 = vmatprep.subr.mxu0 0.0
        %899 = vmatpush1.msra.mxu0 0.0
        %900 = vmatprep.subr.mxu0 0.0
        %901 = vmatpush1.msra.mxu0 0.0
        %902 = vmatprep.subr.mxu0 0.0
        %903 = vmatpush1.msra.mxu0 0.0
        %904 = vmatprep.subr.mxu0 0.0
        %905 = vmatpush1.msra.mxu0 0.0
        %906 = vmatprep.subr.mxu0 0.0
        %907 = vmatpush1.msra.mxu0 0.0
        %908 = vmatprep.subr.mxu0 0.0
        %909 = vmatpush1.msra.mxu0 0.0
        %910 = vmatprep.subr.mxu0 0.0
        %911 = vmatpush1.msra.mxu0 0.0
        %912 = vmatprep.subr.mxu0 0.0
        %913 = vmatpush1.msra.mxu0 0.0
        %914 = vmatprep.subr.mxu0 0.0
        %915 = vmatpush1.msra.mxu0 0.0
        %916 = vmatprep.subr.mxu0 0.0
        %917 = vmatpush1.msra.mxu0 0.0
        %918 = vmatprep.subr.mxu0 0.0
        %919 = vmatpush1.msra.mxu0 0.0
        %920 = vmatprep.subr.mxu0 0.0
        %921 = vmatpush1.msra.mxu0 0.0
        %922 = vmatprep.subr.mxu0 0.0
        %923 = vmatpush1.msra.mxu0 0.0
        %924 = vmatprep.subr.mxu0 0.0
        %925 = vmatpush1.msra.mxu0 0.0
        %926 = vmatprep.subr.mxu0 0.0
        %927 = vmatpush1.msra.mxu0 0.0
        %928 = vmatprep.subr.mxu0 0.0
        %929 = vmatpush1.msra.mxu0 0.0
        %930 = vmatprep.subr.mxu0 0.0
        %931 = vmatpush1.msra.mxu0 0.0
        %932 = vmatprep.subr.mxu0 0.0
        %933 = vmatpush1.msra.mxu0 0.0
        %934 = vmatprep.subr.mxu0 0.0
        %935 = vmatpush1.msra.mxu0 0.0
        %936 = vmatprep.subr.mxu0 0.0
        %937 = vmatpush1.msra.mxu0 0.0
        %938 = vmatprep.mubr.f32.mxu0 0.0
        %939 = vmatmul.mubr.f32.gmra.mrb[0].mxu0 %v859
        %v940 = vpop.f32.mrb[0].mxu0
        %v941 = vadd.f32 %v855, %v940
        %v942 = vpop.f32.mrb[0].mxu0
        %v943 = vadd.f32 %v855, %v942
        %944 = vdwg.mxu0
        %945 = vmatprep.subr.mxu0 %v834
        %946 = vmatpush1.msra.mxu0 %v833
        %947 = vmatprep.subr.mxu0 %v838
        %948 = vmatpush1.msra.mxu0 %v837
        %949 = vmatprep.subr.mxu0 %v842
        %950 = vmatpush1.msra.mxu0 %v841
        %951 = vmatprep.subr.mxu0 %v846
        %952 = vmatpush1.msra.mxu0 %v845
        %953 = vmatprep.subr.mxu0 %v872
        %954 = vmatpush1.msra.mxu0 %v869
        %955 = vmatprep.subr.mxu0 0.0
        %956 = vmatpush1.msra.mxu0 0.0
        %957 = vmatprep.subr.mxu0 0.0
        %958 = vmatpush1.msra.mxu0 0.0
        %959 = vmatprep.subr.mxu0 0.0
        %960 = vmatpush1.msra.mxu0 0.0
        %961 = vmatprep.subr.mxu0 0.0
        %962 = vmatpush1.msra.mxu0 0.0
        %963 = vmatprep.subr.mxu0 0.0
        %964 = vmatpush1.msra.mxu0 0.0
        %965 = vmatprep.subr.mxu0 0.0
        %966 = vmatpush1.msra.mxu0 0.0
        %967 = vmatprep.subr.mxu0 0.0
        %968 = vmatpush1.msra.mxu0 0.0
        %969 = vmatprep.subr.mxu0 0.0
        %970 = vmatpush1.msra.mxu0 0.0
        %971 = vmatprep.subr.mxu0 0.0
        %972 = vmatpush1.msra.mxu0 0.0
        %973 = vmatprep.subr.mxu0 0.0
        %974 = vmatpush1.msra.mxu0 0.0
        %975 = vmatprep.subr.mxu0 0.0
        %976 = vmatpush1.msra.mxu0 0.0
        %977 = vmatprep.subr.mxu0 0.0
        %978 = vmatpush1.msra.mxu0 0.0
        %979 = vmatprep.subr.mxu0 0.0
        %980 = vmatpush1.msra.mxu0 0.0
        %981 = vmatprep.subr.mxu0 0.0
        %982 = vmatpush1.msra.mxu0 0.0
        %983 = vmatprep.subr.mxu0 0.0
        %984 = vmatpush1.msra.mxu0 0.0
        %985 = vmatprep.subr.mxu0 0.0
        %986 = vmatpush1.msra.mxu0 0.0
        %987 = vmatprep.subr.mxu0 0.0
        %988 = vmatpush1.msra.mxu0 0.0
        %989 = vmatprep.subr.mxu0 0.0
        %990 = vmatpush1.msra.mxu0 0.0
        %991 = vmatprep.subr.mxu0 0.0
        %992 = vmatpush1.msra.mxu0 0.0
        %993 = vmatprep.subr.mxu0 0.0
        %994 = vmatpush1.msra.mxu0 0.0
        %995 = vmatprep.subr.mxu0 0.0
        %996 = vmatpush1.msra.mxu0 0.0
        %997 = vmatprep.subr.mxu0 0.0
        %998 = vmatpush1.msra.mxu0 0.0
        %999 = vmatprep.subr.mxu0 0.0
        %1000 = vmatpush1.msra.mxu0 0.0
        %1001 = vmatprep.subr.mxu0 0.0
        %1002 = vmatpush1.msra.mxu0 0.0
        %1003 = vmatprep.subr.mxu0 0.0
        %1004 = vmatpush1.msra.mxu0 0.0
        %1005 = vmatprep.subr.mxu0 0.0
        %1006 = vmatpush1.msra.mxu0 0.0
        %1007 = vmatprep.subr.mxu0 0.0
        %1008 = vmatpush1.msra.mxu0 0.0
        %1009 = vmatprep.mubr.f32.mxu0 0.0
        %1010 = vmatmul.mubr.f32.gmra.mrb[0].mxu0 %v859
        %v1011 = vpop.f32.mrb[0].mxu0
        %v1012 = vadd.f32 %v855, %v1011
        %v1013 = vpop.f32.mrb[0].mxu0
        %v1014 = vadd.f32 %v855, %v1013
        %1015 = vdwg.mxu0
        %vm1016 = vcmp.gt.f32.partialorder %v941, 0.0
        %vm1017 = vcmp.gt.f32.partialorder %v943, 0.0
        %vm1018 = vcmp.gt.f32.partialorder %v1012, 0.0
        %vm1019 = vcmp.gt.f32.partialorder %v1014, 0.0
        %v1020 = vmul.f32 %v941, 0.2
        %v1021 = vmul.f32 %v943, 0.2
        %v1022 = vmul.f32 %v1012, 0.2
        %v1023 = vmul.f32 %v1014, 0.2
        %v1024 = vsel %vm1016, %v941, %v1020
        %v1025 = vsel %vm1017, %v943, %v1021
        %v1026 = vsel %vm1018, %v1012, %v1022
        %v1027 = vsel %vm1019, %v1014, %v1023
        %1029 = vrot.lane.b32.xlu0 %v1024, 9
        %v1030 = vpop.permute.xlu0 %1029
        %vm1032 = vcmask 597064
        %1033 = vst.msk [vmem:[#allocation3] sm:$0xff] %vm1032, %v1030
        %1034 = vrot.lane.b32.xlu0 %v1024, 73
        %v1035 = vpop.permute.xlu0 %1034
        %s1037 = scalar_lea.vmem [#allocation3], 8
        %1038 = vst.msk [vmem:[%s1037] sm:$0xff] %vm1032, %v1035
        %1040 = vrot.lane.b32.xlu0 %v1025, 9
        %v1041 = vpop.permute.xlu0 %1040
        %s1043 = scalar_lea.vmem [#allocation3], 16
        %1044 = vst.msk [vmem:[%s1043] sm:$0xff] %vm1032, %v1041
        %1045 = vrot.lane.b32.xlu0 %v1025, 73
        %v1046 = vpop.permute.xlu0 %1045
        %s1048 = scalar_lea.vmem [#allocation3], 24
        %1049 = vst.msk [vmem:[%s1048] sm:$0xff] %vm1032, %v1046
        %1051 = vrot.lane.b32.xlu0 %v1026, 9
        %v1052 = vpop.permute.xlu0 %1051
        %s1054 = scalar_lea.vmem [#allocation3], 32
        %1055 = vst.msk [vmem:[%s1054] sm:$0xff] %vm1032, %v1052
        %1056 = vrot.lane.b32.xlu0 %v1026, 73
        %v1057 = vpop.permute.xlu0 %1056
        %s1059 = scalar_lea.vmem [#allocation3], 40
        %1060 = vst.msk [vmem:[%s1059] sm:$0xff] %vm1032, %v1057
        %1062 = vrot.lane.b32.xlu0 %v1027, 9
        %v1063 = vpop.permute.xlu0 %1062
        %s1065 = scalar_lea.vmem [#allocation3], 48
        %1066 = vst.msk [vmem:[%s1065] sm:$0xff] %vm1032, %v1063
        %1067 = vrot.lane.b32.xlu0 %v1027, 73
        %v1068 = vpop.permute.xlu0 %1067
        %s1070 = scalar_lea.vmem [#allocation3], 56
        %1071 = vst.msk [vmem:[%s1070] sm:$0xff] %vm1032, %v1068
        %v1072 = vld [vmem:[%s1065] sm:$0xff]
        %v1073 = vsel %vm282, %v1072, 0.0
        %vm1074 = vcmask 523264
        %1075 = vst.msk [vmem:[#allocation4] sm:$0xff] %vm1074, %v1073
        %v1076 = vld [vmem:[%s1054] sm:$0xff]
        %1078 = vrot.lane.b32.xlu0 %v1076, 127
        %v1079 = vpop.permute.xlu0 %1078
        %1081 = vst.msk [vmem:[#allocation4 + $0x8] sm:$0xff] %vm1074, %v1079
        %v1082 = vld [vmem:[%s1065] sm:$0xff]
        %1084 = vrot.lane.b32.xlu0 %v1082, 127
        %v1085 = vpop.permute.xlu0 %1084
        %1087 = vst.msk [vmem:[#allocation4 + $0x10] sm:$0xff] %vm1074, %v1085
        %v1088 = vld [vmem:[%s1054] sm:$0xff]
        %1090 = vrot.lane.b32.xlu0 %v1088, 126
        %v1091 = vpop.permute.xlu0 %1090
        %v1093 = vsel %vm435, %v1091, 0.0
        %1094 = vst.msk [vmem:[#allocation4 + $0x18] sm:$0xff] %vm1074, %v1093
        %v1095 = vld [vmem:[%s1043] sm:$0xff]
        %1097 = vrot.lane.b32.xlu0 %v1095, 120
        %v1098 = vpop.permute.xlu0 %1097
        %v1100 = vsel %vm282, %v1098, 0.0
        %1101 = vst.msk [vmem:[#allocation4 + $0x20] sm:$0xff] %vm1074, %v1100
        %v1102 = vld [vmem:[#allocation3] sm:$0xff]
        %1104 = vrot.lane.b32.xlu0 %v1102, 119
        %v1105 = vpop.permute.xlu0 %1104
        %1107 = vst.msk [vmem:[#allocation4 + $0x28] sm:$0xff] %vm1074, %v1105
        %v1108 = vld [vmem:[%s1043] sm:$0xff]
        %1110 = vrot.lane.b32.xlu0 %v1108, 119
        %v1111 = vpop.permute.xlu0 %1110
        %1113 = vst.msk [vmem:[#allocation4 + $0x30] sm:$0xff] %vm1074, %v1111
        %v1114 = vld [vmem:[#allocation3] sm:$0xff]
        %1116 = vrot.lane.b32.xlu0 %v1114, 118
        %v1117 = vpop.permute.xlu0 %1116
        %v1119 = vsel %vm435, %v1117, 0.0
        %1120 = vst.msk [vmem:[#allocation4 + $0x38] sm:$0xff] %vm1074, %v1119
        %v1121 = vld [vmem:[%s1065] sm:$0xff]
        %1123 = vrot.lane.b32.xlu0 %v1121, 120
        %v1124 = vpop.permute.xlu0 %1123
        %v1126 = vsel %vm282, %v1124, 0.0
        %1127 = vst.msk [vmem:[#allocation4 + $0x40] sm:$0xff] %vm1074, %v1126
        %v1128 = vld [vmem:[%s1054] sm:$0xff]
        %1130 = vrot.lane.b32.xlu0 %v1128, 119
        %v1131 = vpop.permute.xlu0 %1130
        %1133 = vst.msk [vmem:[#allocation4 + $0x48] sm:$0xff] %vm1074, %v1131
        %v1134 = vld [vmem:[%s1065] sm:$0xff]
        %1136 = vrot.lane.b32.xlu0 %v1134, 119
        %v1137 = vpop.permute.xlu0 %1136
        %1139 = vst.msk [vmem:[#allocation4 + $0x50] sm:$0xff] %vm1074, %v1137
        %v1140 = vld [vmem:[%s1054] sm:$0xff]
        %1142 = vrot.lane.b32.xlu0 %v1140, 118
        %v1143 = vpop.permute.xlu0 %1142
        %v1145 = vsel %vm435, %v1143, 0.0
        %1146 = vst.msk [vmem:[#allocation4 + $0x58] sm:$0xff] %vm1074, %v1145
        %v1147 = vld [vmem:[%s1043] sm:$0xff]
        %1149 = vrot.lane.b32.xlu0 %v1147, 112
        %v1150 = vpop.permute.xlu0 %1149
        %v1152 = vsel %vm282, %v1150, 0.0
        %1153 = vst.msk [vmem:[#allocation4 + $0x60] sm:$0xff] %vm1074, %v1152
        %v1154 = vld [vmem:[#allocation3] sm:$0xff]
        %1156 = vrot.lane.b32.xlu0 %v1154, 111
        %v1157 = vpop.permute.xlu0 %1156
        %1159 = vst.msk [vmem:[#allocation4 + $0x68] sm:$0xff] %vm1074, %v1157
        %v1160 = vld [vmem:[%s1043] sm:$0xff]
        %1162 = vrot.lane.b32.xlu0 %v1160, 111
        %v1163 = vpop.permute.xlu0 %1162
        %1165 = vst.msk [vmem:[#allocation4 + $0x70] sm:$0xff] %vm1074, %v1163
        %v1166 = vld [vmem:[#allocation3] sm:$0xff]
        %1168 = vrot.lane.b32.xlu0 %v1166, 110
        %v1169 = vpop.permute.xlu0 %1168
        %v1171 = vsel %vm435, %v1169, 0.0
        %1172 = vst.msk [vmem:[#allocation4 + $0x78] sm:$0xff] %vm1074, %v1171
        %v1173 = vld [vmem:[%s1070] sm:$0xff]
        %v1174 = vsel %vm282, %v1173, 0.0
        %1176 = vrot.lane.b32.xlu0 %v1174, 64
        %v1177 = vpop.permute.xlu0 %1176
        %vm1179 = vcmask 1048064
        %1180 = vst.msk [vmem:[#allocation4] sm:$0xff] %vm1179, %v1177
        %v1181 = vld [vmem:[%s1059] sm:$0xff]
        %1183 = vrot.lane.b32.xlu0 %v1181, 63
        %v1184 = vpop.permute.xlu0 %1183
        %1186 = vst.msk [vmem:[#allocation4 + $0x8] sm:$0xff] %vm1179, %v1184
        %v1187 = vld [vmem:[%s1070] sm:$0xff]
        %1189 = vrot.lane.b32.xlu0 %v1187, 63
        %v1190 = vpop.permute.xlu0 %1189
        %1192 = vst.msk [vmem:[#allocation4 + $0x10] sm:$0xff] %vm1179, %v1190
        %v1193 = vld [vmem:[%s1059] sm:$0xff]
        %1195 = vrot.lane.b32.xlu0 %v1193, 126
        %v1196 = vpop.permute.xlu0 %1195
        %v1198 = vsel %vm435, %v1196, 0.0
        %1200 = vrot.lane.b32.xlu0 %v1198, 64
        %v1201 = vpop.permute.xlu0 %1200
        %1203 = vst.msk [vmem:[#allocation4 + $0x18] sm:$0xff] %vm1179, %v1201
        %v1204 = vld [vmem:[%s1048] sm:$0xff]
        %1206 = vrot.lane.b32.xlu0 %v1204, 120
        %v1207 = vpop.permute.xlu0 %1206
        %v1209 = vsel %vm282, %v1207, 0.0
        %1211 = vrot.lane.b32.xlu0 %v1209, 64
        %v1212 = vpop.permute.xlu0 %1211
        %1214 = vst.msk [vmem:[#allocation4 + $0x20] sm:$0xff] %vm1179, %v1212
        %v1215 = vld [vmem:[%s1037] sm:$0xff]
        %1217 = vrot.lane.b32.xlu0 %v1215, 55
        %v1218 = vpop.permute.xlu0 %1217
        %1220 = vst.msk [vmem:[#allocation4 + $0x28] sm:$0xff] %vm1179, %v1218
        %v1221 = vld [vmem:[%s1048] sm:$0xff]
        %1223 = vrot.lane.b32.xlu0 %v1221, 55
        %v1224 = vpop.permute.xlu0 %1223
        %1226 = vst.msk [vmem:[#allocation4 + $0x30] sm:$0xff] %vm1179, %v1224
        %v1227 = vld [vmem:[%s1037] sm:$0xff]
        %1229 = vrot.lane.b32.xlu0 %v1227, 118
        %v1230 = vpop.permute.xlu0 %1229
        %v1232 = vsel %vm435, %v1230, 0.0
        %1234 = vrot.lane.b32.xlu0 %v1232, 64
        %v1235 = vpop.permute.xlu0 %1234
        %1237 = vst.msk [vmem:[#allocation4 + $0x38] sm:$0xff] %vm1179, %v1235
        %v1238 = vld [vmem:[%s1070] sm:$0xff]
        %1240 = vrot.lane.b32.xlu0 %v1238, 120
        %v1241 = vpop.permute.xlu0 %1240
        %v1243 = vsel %vm282, %v1241, 0.0
        %1245 = vrot.lane.b32.xlu0 %v1243, 64
        %v1246 = vpop.permute.xlu0 %1245
        %1248 = vst.msk [vmem:[#allocation4 + $0x40] sm:$0xff] %vm1179, %v1246
        %v1249 = vld [vmem:[%s1059] sm:$0xff]
        %1251 = vrot.lane.b32.xlu0 %v1249, 55
        %v1252 = vpop.permute.xlu0 %1251
        %1254 = vst.msk [vmem:[#allocation4 + $0x48] sm:$0xff] %vm1179, %v1252
        %v1255 = vld [vmem:[%s1070] sm:$0xff]
        %1257 = vrot.lane.b32.xlu0 %v1255, 55
        %v1258 = vpop.permute.xlu0 %1257
        %1260 = vst.msk [vmem:[#allocation4 + $0x50] sm:$0xff] %vm1179, %v1258
        %v1261 = vld [vmem:[%s1059] sm:$0xff]
        %1263 = vrot.lane.b32.xlu0 %v1261, 118
        %v1264 = vpop.permute.xlu0 %1263
        %v1266 = vsel %vm435, %v1264, 0.0
        %1268 = vrot.lane.b32.xlu0 %v1266, 64
        %v1269 = vpop.permute.xlu0 %1268
        %1271 = vst.msk [vmem:[#allocation4 + $0x58] sm:$0xff] %vm1179, %v1269
        %v1272 = vld [vmem:[%s1048] sm:$0xff]
        %1274 = vrot.lane.b32.xlu0 %v1272, 112
        %v1275 = vpop.permute.xlu0 %1274
        %v1277 = vsel %vm282, %v1275, 0.0
        %1279 = vrot.lane.b32.xlu0 %v1277, 64
        %v1280 = vpop.permute.xlu0 %1279
        %1282 = vst.msk [vmem:[#allocation4 + $0x60] sm:$0xff] %vm1179, %v1280
        %v1283 = vld [vmem:[%s1037] sm:$0xff]
        %1285 = vrot.lane.b32.xlu0 %v1283, 47
        %v1286 = vpop.permute.xlu0 %1285
        %1288 = vst.msk [vmem:[#allocation4 + $0x68] sm:$0xff] %vm1179, %v1286
        %v1289 = vld [vmem:[%s1048] sm:$0xff]
        %1291 = vrot.lane.b32.xlu0 %v1289, 47
        %v1292 = vpop.permute.xlu0 %1291
        %1294 = vst.msk [vmem:[#allocation4 + $0x70] sm:$0xff] %vm1179, %v1292
        %v1295 = vld [vmem:[%s1037] sm:$0xff]
        %1297 = vrot.lane.b32.xlu0 %v1295, 110
        %v1298 = vpop.permute.xlu0 %1297
        %v1300 = vsel %vm435, %v1298, 0.0
        %1302 = vrot.lane.b32.xlu0 %v1300, 64
        %v1303 = vpop.permute.xlu0 %1302
        %1305 = vst.msk [vmem:[#allocation4 + $0x78] sm:$0xff] %vm1179, %v1303
        %v1306 = vld [vmem:[%s3] sm:$0xff]
        %v1307 = vld [vmem:[#allocation4] sm:$0xff]
        %v1308 = vld [vmem:[#allocation4 + $0x8] sm:$0xff]
        %v1309 = vld [vmem:[#allocation4 + $0x10] sm:$0xff]
        %v1310 = vld [vmem:[#allocation4 + $0x18] sm:$0xff]
        %v1311 = vld [vmem:[#allocation4 + $0x20] sm:$0xff]
        %v1312 = vld [vmem:[#allocation4 + $0x28] sm:$0xff]
        %v1313 = vld [vmem:[#allocation4 + $0x30] sm:$0xff]
        %v1314 = vld [vmem:[#allocation4 + $0x38] sm:$0xff]
        %v1315 = vld [vmem:[#allocation4 + $0x40] sm:$0xff]
        %v1316 = vld [vmem:[#allocation4 + $0x48] sm:$0xff]
        %v1317 = vld [vmem:[#allocation4 + $0x50] sm:$0xff]
        %v1318 = vld [vmem:[#allocation4 + $0x58] sm:$0xff]
        %v1319 = vld [vmem:[#allocation4 + $0x60] sm:$0xff]
        %v1320 = vld [vmem:[#allocation4 + $0x68] sm:$0xff]
        %v1321 = vld [vmem:[#allocation4 + $0x70] sm:$0xff]
        %v1322 = vld [vmem:[#allocation4 + $0x78] sm:$0xff]
        %v1323 = vld [vmem:[%s4] sm:$0xff]
        %1325 = vset.pattern.permute.xlu0 0
        %1326 = vperm.xlu0 %1325, %v1323
        %v1327 = vpop.permute.xlu0 %1326
        %1329 = vmatprep.subr.mxu0 0.0
        %1330 = vmatpush1.msra.mxu0 %v1307
        %1331 = vmatprep.subr.mxu0 0.0
        %1332 = vmatpush1.msra.mxu0 %v1308
        %1333 = vmatprep.subr.mxu0 0.0
        %1334 = vmatpush1.msra.mxu0 %v1309
        %1335 = vmatprep.subr.mxu0 0.0
        %1336 = vmatpush1.msra.mxu0 %v1310
        %1337 = vmatprep.subr.mxu0 0.0
        %1338 = vmatpush1.msra.mxu0 %v1311
        %1339 = vmatprep.subr.mxu0 0.0
        %1340 = vmatpush1.msra.mxu0 %v1312
        %1341 = vmatprep.subr.mxu0 0.0
        %1342 = vmatpush1.msra.mxu0 %v1313
        %1343 = vmatprep.subr.mxu0 0.0
        %1344 = vmatpush1.msra.mxu0 %v1314
        %1345 = vmatprep.subr.mxu0 0.0
        %1346 = vmatpush1.msra.mxu0 %v1315
        %1347 = vmatprep.subr.mxu0 0.0
        %1348 = vmatpush1.msra.mxu0 %v1316
        %1349 = vmatprep.subr.mxu0 0.0
        %1350 = vmatpush1.msra.mxu0 %v1317
        %1351 = vmatprep.subr.mxu0 0.0
        %1352 = vmatpush1.msra.mxu0 %v1318
        %1353 = vmatprep.subr.mxu0 0.0
        %1354 = vmatpush1.msra.mxu0 %v1319
        %1355 = vmatprep.subr.mxu0 0.0
        %1356 = vmatpush1.msra.mxu0 %v1320
        %1357 = vmatprep.subr.mxu0 0.0
        %1358 = vmatpush1.msra.mxu0 %v1321
        %1359 = vmatprep.subr.mxu0 0.0
        %1360 = vmatpush1.msra.mxu0 %v1322
        %1361 = vmatprep.subr.mxu0 0.0
        %1362 = vmatpush1.msra.mxu0 0.0
        %1363 = vmatprep.subr.mxu0 0.0
        %1364 = vmatpush1.msra.mxu0 0.0
        %1365 = vmatprep.subr.mxu0 0.0
        %1366 = vmatpush1.msra.mxu0 0.0
        %1367 = vmatprep.subr.mxu0 0.0
        %1368 = vmatpush1.msra.mxu0 0.0
        %1369 = vmatprep.subr.mxu0 0.0
        %1370 = vmatpush1.msra.mxu0 0.0
        %1371 = vmatprep.subr.mxu0 0.0
        %1372 = vmatpush1.msra.mxu0 0.0
        %1373 = vmatprep.subr.mxu0 0.0
        %1374 = vmatpush1.msra.mxu0 0.0
        %1375 = vmatprep.subr.mxu0 0.0
        %1376 = vmatpush1.msra.mxu0 0.0
        %1377 = vmatprep.subr.mxu0 0.0
        %1378 = vmatpush1.msra.mxu0 0.0
        %1379 = vmatprep.subr.mxu0 0.0
        %1380 = vmatpush1.msra.mxu0 0.0
        %1381 = vmatprep.subr.mxu0 0.0
        %1382 = vmatpush1.msra.mxu0 0.0
        %1383 = vmatprep.subr.mxu0 0.0
        %1384 = vmatpush1.msra.mxu0 0.0
        %1385 = vmatprep.subr.mxu0 0.0
        %1386 = vmatpush1.msra.mxu0 0.0
        %1387 = vmatprep.subr.mxu0 0.0
        %1388 = vmatpush1.msra.mxu0 0.0
        %1389 = vmatprep.subr.mxu0 0.0
        %1390 = vmatpush1.msra.mxu0 0.0
        %1391 = vmatprep.subr.mxu0 0.0
        %1392 = vmatpush1.msra.mxu0 0.0
        %1393 = vmatprep.mubr.f32.mxu0 0.0
        %1394 = vmatmul.mubr.f32.gmra.mrb[0].mxu0 %v1306
        %v1395 = vpop.f32.mrb[0].mxu0
        %v1396 = vadd.f32 %v1327, %v1395
        %v1397 = vpop.f32.mrb[0].mxu0
        %1398 = vdwg.mxu0
        %vm1399 = vcmp.gt.f32.partialorder %v1396, 0.0
        %v1400 = vmul.f32 %v1396, 0.2
        %v1401 = vsel %vm1399, %v1396, %v1400
        %1402 = vst [vmem:[%s243] sm:$0xff] %v1401
        %s1403 = sand.u32 %s140, 1
        %s1404 = scalar_lea.sflag [#allocation7], %s1403
        %s1405 = sand.u32 %s140, 1
        %s1406 = smul.addr %s1405, 8
        %s1407 = scalar_lea.vmem [#allocation8], %s1406
        // Predicated region
        $region45: #{tpu_custom_call.1} parent=39 // pred_check
          %p1408 = pneg %p150
        $region46: #{tpu_custom_call.1} parent=39 // pred_check_branch
          %1410 = sbr.rel (%p1408) target = $region48
        $region47: #{tpu_custom_call.1} parent=39 // pred_region
          %s1412 = ssub.s32 128, 128
          %1413 = vsyncadd %s1404, %s1412
          %s1414 = smul.addr %s22, 128
          %s1415 = scalar_lea.hbm %s5, %s1414
          %s1417 = sshll.u32 %s1407, 4
          %s1418 = int_to_ptr.vmem [resolvable:$true] %s1417
          %1420 = dma.vmem_to_hbm [thread:$0]  %s1418, 128, %s1415, %s1404
        $region48: #{tpu_custom_call.1} parent=39 // pred_fallthru
          _
      $region40: #{tpu_custom_call.1} parent=5 // pred_fallthru
        _
      %p1421 = scmp.le.s32.totalorder 2, %s17
      // Predicated region
      $region49: #{tpu_custom_call.1} parent=5 // pred_check
        %p1422 = pneg %p1421
      $region50: #{tpu_custom_call.1} parent=5 // pred_check_branch
        %1424 = sbr.rel (%p1422) target = $region52
      $region51: #{tpu_custom_call.1} parent=5 // pred_region
        %s1425 = ssub.s32 %s17, 2
        // Predicated region
        $region53: #{tpu_custom_call.1} parent=51 // pred_check
          %p1426 = pneg %p156
        $region54: #{tpu_custom_call.1} parent=51 // pred_check_branch
          %1428 = sbr.rel (%p1426) target = $region56
        $region55: #{tpu_custom_call.1} parent=51 // pred_region
          %s1429 = sand.u32 %s141, 1
          %s1430 = scalar_lea.sflag [#allocation7], %s1429
          %s1431 = sand.u32 %s141, 1
          %s1432 = smul.addr %s1431, 8
          %s1433 = scalar_lea.vmem [#allocation8], %s1432
          %1434 = dma.done %s1430, 128
        $region56: #{tpu_custom_call.1} parent=51 // pred_fallthru
          _
      $region52: #{tpu_custom_call.1} parent=5 // pred_fallthru
        _
    $region6: #{tpu_custom_call.1} parent=1 // loop_footer
      %s21 = sadd.s32 1, %s17
    $region7: #{tpu_custom_call.1} parent=1 // loop_footer_branch
      %16 = sbr.rel target = $region3
    $region8: #{tpu_custom_call.1} parent=1 // loop_exit
      _
    %1435 = vsyncpa [#allocation6], 1
    %s1436 = scalar_lea.sflag [#allocation6], 1
    %1437 = vsyncpa %s1436, 1
    %1438 = vsyncpa [#allocation7], 1
    %s1439 = scalar_lea.sflag [#allocation7], 1
    %1440 = vsyncpa %s1439, 1

</llo_original>
